<compile_context>
chip_gen: v5e
topology: v5e:2x2
jax: 0.10.0
libtpu: 0.0.40
codegen_flags: <defaults>
</compile_context>

<pallas_src>
import functools
import math

import jax
import jax.numpy as jnp
from jax.experimental import pallas as pl
from jax.experimental.pallas import tpu as pltpu


def _lstm_cell(gates, c_prev, hp):
    """Elementwise LSTM update. gates: (B, 4*HP), lane-padded gate order (i, f, o, g)."""
    sg = jax.nn.sigmoid(gates[:, :3 * hp])          # single EUP slab for i, f, o
    i_g = sg[:, 0 * hp:1 * hp]                      # lane-tile aligned selects
    f_g = sg[:, 1 * hp:2 * hp]
    o_g = sg[:, 2 * hp:3 * hp]
    g_g = jnp.tanh(gates[:, 3 * hp:4 * hp])
    c_new = f_g * c_prev + i_g * g_g
    h_new = o_g * jnp.tanh(c_new)
    return h_new, c_new


def _encoder_kernel(num_layers, x_ref, *refs):
    """Fused multi-layer LSTM forward (gridless; whole problem resident in VMEM).

    x_ref : (T*B, D_in) time-major 2-D input.
    refs  : [W0_in (D_in, 4*HP), W0_rec (HP, 4*HP), b0 (1, 4*HP)]
            + per layer l >= 1: [Wl_stacked (2*HP, 4*HP), bl (1, 4*HP)]
            + h_out (L, B, H), c_out (L, B, H).
    Gate layout along the 4*HP axis: (i, f, o, g), each zero-padded from H to HP lanes.
    """
    n_w = 3 + 2 * (num_layers - 1)
    h_out_ref = refs[n_w]
    c_out_ref = refs[n_w + 1]
    _, B, H = h_out_ref.shape
    HP = refs[1].shape[0]                 # padded per-gate lane width (multiple of 128)
    T = x_ref.shape[0] // B

    # --- Time-invariant loads (once). ---
    w0_in = refs[0][...]
    w0_rec = refs[1][...]
    b0 = refs[2][...]
    upper = []                            # (stacked weight, pre-broadcast bias), layers >= 1
    for l in range(1, num_layers):
        w_l = refs[3 + 2 * (l - 1)][...]
        b_l = refs[4 + 2 * (l - 1)][...]
        upper.append((w_l, jnp.broadcast_to(b_l, (B, 4 * HP))))   # hoisted broadcast

    # --- Hoisted layer-0 input projection: one matmul, off the serial recurrence path. ---
    x2d = x_ref[...].astype(jnp.float32)                                   # (T*B, D_in)
    xw0 = jnp.dot(x2d, w0_in, preferred_element_type=jnp.float32) + b0     # (T*B, 4*HP)

    h = [jnp.zeros((B, HP), jnp.float32) for _ in range(num_layers)]
    c = [jnp.zeros((B, HP), jnp.float32) for _ in range(num_layers)]

    # Statically unrolled recurrence (T is a small compile-time constant); h/c carries stay
    # in vregs, layer l feeds layer l+1 directly, no HBM round trips between steps/layers.
    for t in range(T):
        g0 = xw0[t * B:(t + 1) * B, :] + jnp.dot(
            h[0], w0_rec, preferred_element_type=jnp.float32)
        h[0], c[0] = _lstm_cell(g0, c[0], HP)
        for l in range(1, num_layers):
            w_l, b_l = upper[l - 1]
            g_l = jnp.dot(jnp.concatenate([h[l - 1], h[l]], axis=-1), w_l,
                          preferred_element_type=jnp.float32) + b_l
            h[l], c[l] = _lstm_cell(g_l, c[l], HP)

    # Per-layer direct stores; compact padded HP lanes back to H only here (epilogue).
    for l in range(num_layers):
        h_out_ref[l, :, :] = h[l][:, :H].astype(h_out_ref.dtype)
        c_out_ref[l, :, :] = c[l][:, :H].astype(c_out_ref.dtype)


@functools.partial(jax.jit, static_argnums=(2, 3))
def _encoder_forward(x, fused_flat, hidden_size, num_layers):
    """x: (B, T, D_in) batch_first. Returns (hidden, cell), each (L, B, H) like torch."""
    B, T, D = x.shape
    # Time-major, 2-D layout so the hoisted projection is a single contiguous matmul and the
    # kernel never strided-gathers x per step.
    x2d = jnp.transpose(x, (1, 0, 2)).reshape(T * B, D).astype(jnp.float32)

    vmem = pl.BlockSpec(memory_space=pltpu.MemorySpace.VMEM)
    kernel = functools.partial(_encoder_kernel, num_layers)

    hidden, cell = pl.pallas_call(
        kernel,
        out_shape=(
            jax.ShapeDtypeStruct((num_layers, B, hidden_size), jnp.float32),
            jax.ShapeDtypeStruct((num_layers, B, hidden_size), jnp.float32),
        ),
        in_specs=[vmem] * (1 + len(fused_flat)),
        out_specs=(vmem, vmem),
        compiler_params=pltpu.CompilerParams(vmem_limit_bytes=64 * 1024 * 1024),
    )(x2d, *fused_flat)
    return hidden, cell


class EncoderPallas:
    """Pallas equivalent of the PyTorch Encoder (stacked LSTM, returns (hidden, cell))."""

    # Kernel gate order (i, f, o, g) expressed as torch gate indices (torch order: i, f, g, o).
    _GATE_PERM = (0, 1, 3, 2)

    def __init__(self, input_size=10, hidden_size=5, num_layers=2, key=None):
        self.input_size = input_size
        self.hidden_size = hidden_size
        self.num_layers = num_layers
        # Per-gate lane padding: each gate occupies whole 128-lane tiles.
        self.hp = max(128, math.ceil(hidden_size / 128) * 128)
        if key is None:
            key = jax.random.PRNGKey(0)
        bound = 1.0 / (hidden_size ** 0.5)

        self.params = []      # raw torch-layout params (for the reference check)
        raw = []
        for layer in range(num_layers):
            d_in = input_size if layer == 0 else hidden_size
            key, k1, k2, k3, k4 = jax.random.split(key, 5)
            w_ih = jax.random.uniform(k1, (4 * hidden_size, d_in),
                                      jnp.float32, -bound, bound)
            w_hh = jax.random.uniform(k2, (4 * hidden_size, hidden_size),
                                      jnp.float32, -bound, bound)
            b_ih = jax.random.uniform(k3, (4 * hidden_size,),
                                      jnp.float32, -bound, bound)
            b_hh = jax.random.uniform(k4, (4 * hidden_size,),
                                      jnp.float32, -bound, bound)
            self.params.append((w_ih, w_hh, b_ih, b_hh))
            raw.append((w_ih, w_hh, b_ih, b_hh))

        self.fused = tuple(self._build_fused(raw))   # kernel-layout params, built ONCE

    # ---- one-time weight re-layout: transpose, reorder gates to (i,f,o,g), lane-pad ----
    def _pad_cols(self, w_t, rows_out):
        """w_t: (rows_in, 4H) -> (rows_out, 4*HP), each gate zero-padded to HP lanes."""
        H, HP = self.hidden_size, self.hp
        rows_in = w_t.shape[0]
        out = jnp.zeros((rows_out, 4 * HP), jnp.float32)
        for k, g in enumerate(self._GATE_PERM):
            out = out.at[:rows_in, k * HP:k * HP + H].set(w_t[:, g * H:(g + 1) * H])
        return out

    def _pad_bias(self, b):
        H, HP = self.hidden_size, self.hp
        out = jnp.zeros((1, 4 * HP), jnp.float32)
        for k, g in enumerate(self._GATE_PERM):
            out = out.at[0, k * HP:k * HP + H].set(b[g * H:(g + 1) * H])
        return out

    def _build_fused(self, raw):
        HP = self.hp
        flat = []
        # Layer 0: separate input / recurrent weights (input projection is hoisted).
        w_ih, w_hh, b_ih, b_hh = raw[0]
        flat.append(self._pad_cols(w_ih.T, w_ih.shape[1]))   # (D_in, 4*HP)
        flat.append(self._pad_cols(w_hh.T, HP))              # (HP, 4*HP), rows >= H zero
        flat.append(self._pad_bias(b_ih + b_hh))             # (1, 4*HP)
        # Layers >= 1: stacked [W_ih; W_hh] so each step is one matmul on [h_below, h_prev].
        for layer in range(1, self.num_layers):
            w_ih, w_hh, b_ih, b_hh = raw[layer]
            stacked = jnp.zeros((2 * HP, 4 * HP), jnp.float32)
            stacked = stacked.at[:HP, :].set(self._pad_cols(w_ih.T, HP))
            stacked = stacked.at[HP:, :].set(self._pad_cols(w_hh.T, HP))
            flat.append(stacked)
            flat.append(self._pad_bias(b_ih + b_hh))
        return flat

    def __call__(self, x):
        # x: (B, T, input_size) — batch_first, like the PyTorch module.
        return _encoder_forward(x, self.fused, self.hidden_size, self.num_layers)


def _reference_lstm(x, params, hidden_size, num_layers):
    """Pure-JAX reference matching torch.nn.LSTM forward semantics."""
    B, T = x.shape[0], x.shape[1]
    layer_in = x.astype(jnp.float32)
    hs, cs = [], []
    for layer in range(num_layers):
        w_ih, w_hh, b_ih, b_hh = params[layer]
        h = jnp.zeros((B, hidden_size), jnp.float32)
        c = jnp.zeros((B, hidden_size), jnp.float32)
        outs = []
        for t in range(T):
            gates = layer_in[:, t, :] @ w_ih.T + h @ w_hh.T + b_ih + b_hh
            i_g = jax.nn.sigmoid(gates[:, 0:hidden_size])
            f_g = jax.nn.sigmoid(gates[:, hidden_size:2 * hidden_size])
            g_g = jnp.tanh(gates[:, 2 * hidden_size:3 * hidden_size])
            o_g = jax.nn.sigmoid(gates[:, 3 * hidden_size:4 * hidden_size])
            c = f_g * c + i_g * g_g
            h = o_g * jnp.tanh(c)
            outs.append(h)
        layer_in = jnp.stack(outs, axis=1)
        hs.append(h)
        cs.append(c)
    return jnp.stack(hs, 0), jnp.stack(cs, 0)


if __name__ == "__main__":
    key = jax.random.PRNGKey(0)
    k_x, k_p = jax.random.split(key)

    batch, seq, input_size, hidden_size, num_layers = 2, 8, 10, 5, 2
    x = jax.random.normal(k_x, (batch, seq, input_size), jnp.float32)

    enc = EncoderPallas(input_size=input_size, hidden_size=hidden_size,
                        num_layers=num_layers, key=k_p)

    hidden, cell = enc(x)
    hidden, cell = jax.block_until_ready((hidden, cell))

    # Sanity check against pure-JAX reference LSTM (torch semantics).
    h_ref, c_ref = _reference_lstm(x, enc.params, hidden_size, num_layers)
    assert hidden.shape == (num_layers, batch, hidden_size)
    assert cell.shape == (num_layers, batch, hidden_size)
    assert jnp.allclose(hidden, h_ref, atol=1e-5, rtol=1e-5)
    assert jnp.allclose(cell, c_ref, atol=1e-5, rtol=1e-5)

    print("KERNEL_OK")
</pallas_src>

<mosaic_0001>
module attributes {stable_mosaic.version = 11 : i64} {
  func.func @_encoder_kernel(%arg0: memref<16x10xf32, #tpu.memory_space<vmem>>, %arg1: memref<10x512xf32, #tpu.memory_space<vmem>>, %arg2: memref<128x512xf32, #tpu.memory_space<vmem>>, %arg3: memref<1x512xf32, #tpu.memory_space<vmem>>, %arg4: memref<256x512xf32, #tpu.memory_space<vmem>>, %arg5: memref<1x512xf32, #tpu.memory_space<vmem>>, %arg6: memref<2x2x5xf32, #tpu.memory_space<vmem>>, %arg7: memref<2x2x5xf32, #tpu.memory_space<vmem>>) attributes {dimension_semantics = [], scalar_prefetch = 0 : i64, scratch_operands = 0 : i64, tpu.core_type = #tpu.core_type<tc>} {
    %c0 = arith.constant 0 : index
    %c0_0 = arith.constant 0 : index
    %0 = vector.load %arg1[%c0, %c0_0] : memref<10x512xf32, #tpu.memory_space<vmem>>, vector<10x512xf32>
    %c0_1 = arith.constant 0 : index
    %c0_2 = arith.constant 0 : index
    %1 = vector.load %arg2[%c0_1, %c0_2] : memref<128x512xf32, #tpu.memory_space<vmem>>, vector<128x512xf32>
    %c0_3 = arith.constant 0 : index
    %c0_4 = arith.constant 0 : index
    %2 = vector.load %arg3[%c0_3, %c0_4] : memref<1x512xf32, #tpu.memory_space<vmem>>, vector<1x512xf32>
    %c0_5 = arith.constant 0 : index
    %c0_6 = arith.constant 0 : index
    %3 = vector.load %arg4[%c0_5, %c0_6] : memref<256x512xf32, #tpu.memory_space<vmem>>, vector<256x512xf32>
    %c0_7 = arith.constant 0 : index
    %c0_8 = arith.constant 0 : index
    %4 = vector.load %arg5[%c0_7, %c0_8] : memref<1x512xf32, #tpu.memory_space<vmem>>, vector<1x512xf32>
    %5 = vector.shape_cast %4 : vector<1x512xf32> to vector<1x512xf32>
    %6 = vector.broadcast %5 : vector<1x512xf32> to vector<2x512xf32>
    %c0_9 = arith.constant 0 : index
    %c0_10 = arith.constant 0 : index
    %7 = vector.load %arg0[%c0_9, %c0_10] : memref<16x10xf32, #tpu.memory_space<vmem>>, vector<16x10xf32>
    %cst = arith.constant dense<0.000000e+00> : vector<16x512xf32>
    %8 = tpu.matmul %7, %0, %cst {dimension_numbers = #tpu.dot_dimension_numbers<[1], [0], [0], [1], [0, 0, 1, 1], [], []>} : vector<16x10xf32>, vector<10x512xf32>, vector<16x512xf32> -> vector<16x512xf32>
    %9 = vector.broadcast %2 : vector<1x512xf32> to vector<16x512xf32>
    %10 = arith.addf %8, %9 : vector<16x512xf32>
    %cst_11 = arith.constant 0.000000e+00 : f32
    %11 = vector.broadcast %cst_11 : f32 to vector<2x128xf32>
    %cst_12 = arith.constant 0.000000e+00 : f32
    %12 = vector.broadcast %cst_12 : f32 to vector<2x128xf32>
    %cst_13 = arith.constant 0.000000e+00 : f32
    %13 = vector.broadcast %cst_13 : f32 to vector<2x128xf32>
    %cst_14 = arith.constant 0.000000e+00 : f32
    %14 = vector.broadcast %cst_14 : f32 to vector<2x128xf32>
    %15 = vector.extract_strided_slice %10 {offsets = [0, 0], sizes = [2, 512], strides = [1, 1]} : vector<16x512xf32> to vector<2x512xf32>
    %cst_15 = arith.constant dense<0.000000e+00> : vector<2x512xf32>
    %16 = tpu.matmul %11, %1, %cst_15 {dimension_numbers = #tpu.dot_dimension_numbers<[1], [0], [0], [1], [0, 0, 1, 1], [], []>} : vector<2x128xf32>, vector<128x512xf32>, vector<2x512xf32> -> vector<2x512xf32>
    %17 = arith.addf %15, %16 : vector<2x512xf32>
    %18 = vector.extract_strided_slice %17 {offsets = [0, 0], sizes = [2, 384], strides = [1, 1]} : vector<2x512xf32> to vector<2x384xf32>
    %19 = arith.negf %18 : vector<2x384xf32>
    %20 = math.exp %19 : vector<2x384xf32>
    %cst_16 = arith.constant 1.000000e+00 : f32
    %21 = vector.broadcast %cst_16 : f32 to vector<2x384xf32>
    %22 = arith.addf %21, %20 : vector<2x384xf32>
    %23 = arith.divf %21, %22 : vector<2x384xf32>
    %24 = vector.extract_strided_slice %23 {offsets = [0, 0], sizes = [2, 128], strides = [1, 1]} : vector<2x384xf32> to vector<2x128xf32>
    %25 = vector.extract_strided_slice %23 {offsets = [0, 128], sizes = [2, 128], strides = [1, 1]} : vector<2x384xf32> to vector<2x128xf32>
    %26 = vector.extract_strided_slice %23 {offsets = [0, 256], sizes = [2, 128], strides = [1, 1]} : vector<2x384xf32> to vector<2x128xf32>
    %27 = vector.extract_strided_slice %17 {offsets = [0, 384], sizes = [2, 128], strides = [1, 1]} : vector<2x512xf32> to vector<2x128xf32>
    %28 = math.tanh %27 : vector<2x128xf32>
    %29 = arith.mulf %25, %13 : vector<2x128xf32>
    %30 = arith.mulf %24, %28 : vector<2x128xf32>
    %31 = arith.addf %29, %30 : vector<2x128xf32>
    %32 = math.tanh %31 : vector<2x128xf32>
    %33 = arith.mulf %26, %32 : vector<2x128xf32>
    %34 = tpu.concatenate %33, %12 in 1 : vector<2x128xf32>, vector<2x128xf32> -> vector<2x256xf32>
    %cst_17 = arith.constant dense<0.000000e+00> : vector<2x512xf32>
    %35 = tpu.matmul %34, %3, %cst_17 {dimension_numbers = #tpu.dot_dimension_numbers<[1], [0], [0], [1], [0, 0, 1, 1], [], []>} : vector<2x256xf32>, vector<256x512xf32>, vector<2x512xf32> -> vector<2x512xf32>
    %36 = arith.addf %35, %6 : vector<2x512xf32>
    %37 = vector.extract_strided_slice %36 {offsets = [0, 0], sizes = [2, 384], strides = [1, 1]} : vector<2x512xf32> to vector<2x384xf32>
    %38 = arith.negf %37 : vector<2x384xf32>
    %39 = math.exp %38 : vector<2x384xf32>
    %cst_18 = arith.constant 1.000000e+00 : f32
    %40 = vector.broadcast %cst_18 : f32 to vector<2x384xf32>
    %41 = arith.addf %40, %39 : vector<2x384xf32>
    %42 = arith.divf %40, %41 : vector<2x384xf32>
    %43 = vector.extract_strided_slice %42 {offsets = [0, 0], sizes = [2, 128], strides = [1, 1]} : vector<2x384xf32> to vector<2x128xf32>
    %44 = vector.extract_strided_slice %42 {offsets = [0, 128], sizes = [2, 128], strides = [1, 1]} : vector<2x384xf32> to vector<2x128xf32>
    %45 = vector.extract_strided_slice %42 {offsets = [0, 256], sizes = [2, 128], strides = [1, 1]} : vector<2x384xf32> to vector<2x128xf32>
    %46 = vector.extract_strided_slice %36 {offsets = [0, 384], sizes = [2, 128], strides = [1, 1]} : vector<2x512xf32> to vector<2x128xf32>
    %47 = math.tanh %46 : vector<2x128xf32>
    %48 = arith.mulf %44, %14 : vector<2x128xf32>
    %49 = arith.mulf %43, %47 : vector<2x128xf32>
    %50 = arith.addf %48, %49 : vector<2x128xf32>
    %51 = math.tanh %50 : vector<2x128xf32>
    %52 = arith.mulf %45, %51 : vector<2x128xf32>
    %53 = vector.extract_strided_slice %10 {offsets = [2, 0], sizes = [2, 512], strides = [1, 1]} : vector<16x512xf32> to vector<2x512xf32>
    %cst_19 = arith.constant dense<0.000000e+00> : vector<2x512xf32>
    %54 = tpu.matmul %33, %1, %cst_19 {dimension_numbers = #tpu.dot_dimension_numbers<[1], [0], [0], [1], [0, 0, 1, 1], [], []>} : vector<2x128xf32>, vector<128x512xf32>, vector<2x512xf32> -> vector<2x512xf32>
    %55 = arith.addf %53, %54 : vector<2x512xf32>
    %56 = vector.extract_strided_slice %55 {offsets = [0, 0], sizes = [2, 384], strides = [1, 1]} : vector<2x512xf32> to vector<2x384xf32>
    %57 = arith.negf %56 : vector<2x384xf32>
    %58 = math.exp %57 : vector<2x384xf32>
    %cst_20 = arith.constant 1.000000e+00 : f32
    %59 = vector.broadcast %cst_20 : f32 to vector<2x384xf32>
    %60 = arith.addf %59, %58 : vector<2x384xf32>
    %61 = arith.divf %59, %60 : vector<2x384xf32>
    %62 = vector.extract_strided_slice %61 {offsets = [0, 0], sizes = [2, 128], strides = [1, 1]} : vector<2x384xf32> to vector<2x128xf32>
    %63 = vector.extract_strided_slice %61 {offsets = [0, 128], sizes = [2, 128], strides = [1, 1]} : vector<2x384xf32> to vector<2x128xf32>
    %64 = vector.extract_strided_slice %61 {offsets = [0, 256], sizes = [2, 128], strides = [1, 1]} : vector<2x384xf32> to vector<2x128xf32>
    %65 = vector.extract_strided_slice %55 {offsets = [0, 384], sizes = [2, 128], strides = [1, 1]} : vector<2x512xf32> to vector<2x128xf32>
    %66 = math.tanh %65 : vector<2x128xf32>
    %67 = arith.mulf %63, %31 : vector<2x128xf32>
    %68 = arith.mulf %62, %66 : vector<2x128xf32>
    %69 = arith.addf %67, %68 : vector<2x128xf32>
    %70 = math.tanh %69 : vector<2x128xf32>
    %71 = arith.mulf %64, %70 : vector<2x128xf32>
    %72 = tpu.concatenate %71, %52 in 1 : vector<2x128xf32>, vector<2x128xf32> -> vector<2x256xf32>
    %cst_21 = arith.constant dense<0.000000e+00> : vector<2x512xf32>
    %73 = tpu.matmul %72, %3, %cst_21 {dimension_numbers = #tpu.dot_dimension_numbers<[1], [0], [0], [1], [0, 0, 1, 1], [], []>} : vector<2x256xf32>, vector<256x512xf32>, vector<2x512xf32> -> vector<2x512xf32>
    %74 = arith.addf %73, %6 : vector<2x512xf32>
    %75 = vector.extract_strided_slice %74 {offsets = [0, 0], sizes = [2, 384], strides = [1, 1]} : vector<2x512xf32> to vector<2x384xf32>
    %76 = arith.negf %75 : vector<2x384xf32>
    %77 = math.exp %76 : vector<2x384xf32>
    %cst_22 = arith.constant 1.000000e+00 : f32
    %78 = vector.broadcast %cst_22 : f32 to vector<2x384xf32>
    %79 = arith.addf %78, %77 : vector<2x384xf32>
    %80 = arith.divf %78, %79 : vector<2x384xf32>
    %81 = vector.extract_strided_slice %80 {offsets = [0, 0], sizes = [2, 128], strides = [1, 1]} : vector<2x384xf32> to vector<2x128xf32>
    %82 = vector.extract_strided_slice %80 {offsets = [0, 128], sizes = [2, 128], strides = [1, 1]} : vector<2x384xf32> to vector<2x128xf32>
    %83 = vector.extract_strided_slice %80 {offsets = [0, 256], sizes = [2, 128], strides = [1, 1]} : vector<2x384xf32> to vector<2x128xf32>
    %84 = vector.extract_strided_slice %74 {offsets = [0, 384], sizes = [2, 128], strides = [1, 1]} : vector<2x512xf32> to vector<2x128xf32>
    %85 = math.tanh %84 : vector<2x128xf32>
    %86 = arith.mulf %82, %50 : vector<2x128xf32>
    %87 = arith.mulf %81, %85 : vector<2x128xf32>
    %88 = arith.addf %86, %87 : vector<2x128xf32>
    %89 = math.tanh %88 : vector<2x128xf32>
    %90 = arith.mulf %83, %89 : vector<2x128xf32>
    %91 = vector.extract_strided_slice %10 {offsets = [4, 0], sizes = [2, 512], strides = [1, 1]} : vector<16x512xf32> to vector<2x512xf32>
    %cst_23 = arith.constant dense<0.000000e+00> : vector<2x512xf32>
    %92 = tpu.matmul %71, %1, %cst_23 {dimension_numbers = #tpu.dot_dimension_numbers<[1], [0], [0], [1], [0, 0, 1, 1], [], []>} : vector<2x128xf32>, vector<128x512xf32>, vector<2x512xf32> -> vector<2x512xf32>
    %93 = arith.addf %91, %92 : vector<2x512xf32>
    %94 = vector.extract_strided_slice %93 {offsets = [0, 0], sizes = [2, 384], strides = [1, 1]} : vector<2x512xf32> to vector<2x384xf32>
    %95 = arith.negf %94 : vector<2x384xf32>
    %96 = math.exp %95 : vector<2x384xf32>
    %cst_24 = arith.constant 1.000000e+00 : f32
    %97 = vector.broadcast %cst_24 : f32 to vector<2x384xf32>
    %98 = arith.addf %97, %96 : vector<2x384xf32>
    %99 = arith.divf %97, %98 : vector<2x384xf32>
    %100 = vector.extract_strided_slice %99 {offsets = [0, 0], sizes = [2, 128], strides = [1, 1]} : vector<2x384xf32> to vector<2x128xf32>
    %101 = vector.extract_strided_slice %99 {offsets = [0, 128], sizes = [2, 128], strides = [1, 1]} : vector<2x384xf32> to vector<2x128xf32>
    %102 = vector.extract_strided_slice %99 {offsets = [0, 256], sizes = [2, 128], strides = [1, 1]} : vector<2x384xf32> to vector<2x128xf32>
    %103 = vector.extract_strided_slice %93 {offsets = [0, 384], sizes = [2, 128], strides = [1, 1]} : vector<2x512xf32> to vector<2x128xf32>
    %104 = math.tanh %103 : vector<2x128xf32>
    %105 = arith.mulf %101, %69 : vector<2x128xf32>
    %106 = arith.mulf %100, %104 : vector<2x128xf32>
    %107 = arith.addf %105, %106 : vector<2x128xf32>
    %108 = math.tanh %107 : vector<2x128xf32>
    %109 = arith.mulf %102, %108 : vector<2x128xf32>
    %110 = tpu.concatenate %109, %90 in 1 : vector<2x128xf32>, vector<2x128xf32> -> vector<2x256xf32>
    %cst_25 = arith.constant dense<0.000000e+00> : vector<2x512xf32>
    %111 = tpu.matmul %110, %3, %cst_25 {dimension_numbers = #tpu.dot_dimension_numbers<[1], [0], [0], [1], [0, 0, 1, 1], [], []>} : vector<2x256xf32>, vector<256x512xf32>, vector<2x512xf32> -> vector<2x512xf32>
    %112 = arith.addf %111, %6 : vector<2x512xf32>
    %113 = vector.extract_strided_slice %112 {offsets = [0, 0], sizes = [2, 384], strides = [1, 1]} : vector<2x512xf32> to vector<2x384xf32>
    %114 = arith.negf %113 : vector<2x384xf32>
    %115 = math.exp %114 : vector<2x384xf32>
    %cst_26 = arith.constant 1.000000e+00 : f32
    %116 = vector.broadcast %cst_26 : f32 to vector<2x384xf32>
    %117 = arith.addf %116, %115 : vector<2x384xf32>
    %118 = arith.divf %116, %117 : vector<2x384xf32>
    %119 = vector.extract_strided_slice %118 {offsets = [0, 0], sizes = [2, 128], strides = [1, 1]} : vector<2x384xf32> to vector<2x128xf32>
    %120 = vector.extract_strided_slice %118 {offsets = [0, 128], sizes = [2, 128], strides = [1, 1]} : vector<2x384xf32> to vector<2x128xf32>
    %121 = vector.extract_strided_slice %118 {offsets = [0, 256], sizes = [2, 128], strides = [1, 1]} : vector<2x384xf32> to vector<2x128xf32>
    %122 = vector.extract_strided_slice %112 {offsets = [0, 384], sizes = [2, 128], strides = [1, 1]} : vector<2x512xf32> to vector<2x128xf32>
    %123 = math.tanh %122 : vector<2x128xf32>
    %124 = arith.mulf %120, %88 : vector<2x128xf32>
    %125 = arith.mulf %119, %123 : vector<2x128xf32>
    %126 = arith.addf %124, %125 : vector<2x128xf32>
    %127 = math.tanh %126 : vector<2x128xf32>
    %128 = arith.mulf %121, %127 : vector<2x128xf32>
    %129 = vector.extract_strided_slice %10 {offsets = [6, 0], sizes = [2, 512], strides = [1, 1]} : vector<16x512xf32> to vector<2x512xf32>
    %cst_27 = arith.constant dense<0.000000e+00> : vector<2x512xf32>
    %130 = tpu.matmul %109, %1, %cst_27 {dimension_numbers = #tpu.dot_dimension_numbers<[1], [0], [0], [1], [0, 0, 1, 1], [], []>} : vector<2x128xf32>, vector<128x512xf32>, vector<2x512xf32> -> vector<2x512xf32>
    %131 = arith.addf %129, %130 : vector<2x512xf32>
    %132 = vector.extract_strided_slice %131 {offsets = [0, 0], sizes = [2, 384], strides = [1, 1]} : vector<2x512xf32> to vector<2x384xf32>
    %133 = arith.negf %132 : vector<2x384xf32>
    %134 = math.exp %133 : vector<2x384xf32>
    %cst_28 = arith.constant 1.000000e+00 : f32
    %135 = vector.broadcast %cst_28 : f32 to vector<2x384xf32>
    %136 = arith.addf %135, %134 : vector<2x384xf32>
    %137 = arith.divf %135, %136 : vector<2x384xf32>
    %138 = vector.extract_strided_slice %137 {offsets = [0, 0], sizes = [2, 128], strides = [1, 1]} : vector<2x384xf32> to vector<2x128xf32>
    %139 = vector.extract_strided_slice %137 {offsets = [0, 128], sizes = [2, 128], strides = [1, 1]} : vector<2x384xf32> to vector<2x128xf32>
    %140 = vector.extract_strided_slice %137 {offsets = [0, 256], sizes = [2, 128], strides = [1, 1]} : vector<2x384xf32> to vector<2x128xf32>
    %141 = vector.extract_strided_slice %131 {offsets = [0, 384], sizes = [2, 128], strides = [1, 1]} : vector<2x512xf32> to vector<2x128xf32>
    %142 = math.tanh %141 : vector<2x128xf32>
    %143 = arith.mulf %139, %107 : vector<2x128xf32>
    %144 = arith.mulf %138, %142 : vector<2x128xf32>
    %145 = arith.addf %143, %144 : vector<2x128xf32>
    %146 = math.tanh %145 : vector<2x128xf32>
    %147 = arith.mulf %140, %146 : vector<2x128xf32>
    %148 = tpu.concatenate %147, %128 in 1 : vector<2x128xf32>, vector<2x128xf32> -> vector<2x256xf32>
    %cst_29 = arith.constant dense<0.000000e+00> : vector<2x512xf32>
    %149 = tpu.matmul %148, %3, %cst_29 {dimension_numbers = #tpu.dot_dimension_numbers<[1], [0], [0], [1], [0, 0, 1, 1], [], []>} : vector<2x256xf32>, vector<256x512xf32>, vector<2x512xf32> -> vector<2x512xf32>
    %150 = arith.addf %149, %6 : vector<2x512xf32>
    %151 = vector.extract_strided_slice %150 {offsets = [0, 0], sizes = [2, 384], strides = [1, 1]} : vector<2x512xf32> to vector<2x384xf32>
    %152 = arith.negf %151 : vector<2x384xf32>
    %153 = math.exp %152 : vector<2x384xf32>
    %cst_30 = arith.constant 1.000000e+00 : f32
    %154 = vector.broadcast %cst_30 : f32 to vector<2x384xf32>
    %155 = arith.addf %154, %153 : vector<2x384xf32>
    %156 = arith.divf %154, %155 : vector<2x384xf32>
    %157 = vector.extract_strided_slice %156 {offsets = [0, 0], sizes = [2, 128], strides = [1, 1]} : vector<2x384xf32> to vector<2x128xf32>
    %158 = vector.extract_strided_slice %156 {offsets = [0, 128], sizes = [2, 128], strides = [1, 1]} : vector<2x384xf32> to vector<2x128xf32>
    %159 = vector.extract_strided_slice %156 {offsets = [0, 256], sizes = [2, 128], strides = [1, 1]} : vector<2x384xf32> to vector<2x128xf32>
    %160 = vector.extract_strided_slice %150 {offsets = [0, 384], sizes = [2, 128], strides = [1, 1]} : vector<2x512xf32> to vector<2x128xf32>
    %161 = math.tanh %160 : vector<2x128xf32>
    %162 = arith.mulf %158, %126 : vector<2x128xf32>
    %163 = arith.mulf %157, %161 : vector<2x128xf32>
    %164 = arith.addf %162, %163 : vector<2x128xf32>
    %165 = math.tanh %164 : vector<2x128xf32>
    %166 = arith.mulf %159, %165 : vector<2x128xf32>
    %167 = vector.extract_strided_slice %10 {offsets = [8, 0], sizes = [2, 512], strides = [1, 1]} : vector<16x512xf32> to vector<2x512xf32>
    %cst_31 = arith.constant dense<0.000000e+00> : vector<2x512xf32>
    %168 = tpu.matmul %147, %1, %cst_31 {dimension_numbers = #tpu.dot_dimension_numbers<[1], [0], [0], [1], [0, 0, 1, 1], [], []>} : vector<2x128xf32>, vector<128x512xf32>, vector<2x512xf32> -> vector<2x512xf32>
    %169 = arith.addf %167, %168 : vector<2x512xf32>
    %170 = vector.extract_strided_slice %169 {offsets = [0, 0], sizes = [2, 384], strides = [1, 1]} : vector<2x512xf32> to vector<2x384xf32>
    %171 = arith.negf %170 : vector<2x384xf32>
    %172 = math.exp %171 : vector<2x384xf32>
    %cst_32 = arith.constant 1.000000e+00 : f32
    %173 = vector.broadcast %cst_32 : f32 to vector<2x384xf32>
    %174 = arith.addf %173, %172 : vector<2x384xf32>
    %175 = arith.divf %173, %174 : vector<2x384xf32>
    %176 = vector.extract_strided_slice %175 {offsets = [0, 0], sizes = [2, 128], strides = [1, 1]} : vector<2x384xf32> to vector<2x128xf32>
    %177 = vector.extract_strided_slice %175 {offsets = [0, 128], sizes = [2, 128], strides = [1, 1]} : vector<2x384xf32> to vector<2x128xf32>
    %178 = vector.extract_strided_slice %175 {offsets = [0, 256], sizes = [2, 128], strides = [1, 1]} : vector<2x384xf32> to vector<2x128xf32>
    %179 = vector.extract_strided_slice %169 {offsets = [0, 384], sizes = [2, 128], strides = [1, 1]} : vector<2x512xf32> to vector<2x128xf32>
    %180 = math.tanh %179 : vector<2x128xf32>
    %181 = arith.mulf %177, %145 : vector<2x128xf32>
    %182 = arith.mulf %176, %180 : vector<2x128xf32>
    %183 = arith.addf %181, %182 : vector<2x128xf32>
    %184 = math.tanh %183 : vector<2x128xf32>
    %185 = arith.mulf %178, %184 : vector<2x128xf32>
    %186 = tpu.concatenate %185, %166 in 1 : vector<2x128xf32>, vector<2x128xf32> -> vector<2x256xf32>
    %cst_33 = arith.constant dense<0.000000e+00> : vector<2x512xf32>
    %187 = tpu.matmul %186, %3, %cst_33 {dimension_numbers = #tpu.dot_dimension_numbers<[1], [0], [0], [1], [0, 0, 1, 1], [], []>} : vector<2x256xf32>, vector<256x512xf32>, vector<2x512xf32> -> vector<2x512xf32>
    %188 = arith.addf %187, %6 : vector<2x512xf32>
    %189 = vector.extract_strided_slice %188 {offsets = [0, 0], sizes = [2, 384], strides = [1, 1]} : vector<2x512xf32> to vector<2x384xf32>
    %190 = arith.negf %189 : vector<2x384xf32>
    %191 = math.exp %190 : vector<2x384xf32>
    %cst_34 = arith.constant 1.000000e+00 : f32
    %192 = vector.broadcast %cst_34 : f32 to vector<2x384xf32>
    %193 = arith.addf %192, %191 : vector<2x384xf32>
    %194 = arith.divf %192, %193 : vector<2x384xf32>
    %195 = vector.extract_strided_slice %194 {offsets = [0, 0], sizes = [2, 128], strides = [1, 1]} : vector<2x384xf32> to vector<2x128xf32>
    %196 = vector.extract_strided_slice %194 {offsets = [0, 128], sizes = [2, 128], strides = [1, 1]} : vector<2x384xf32> to vector<2x128xf32>
    %197 = vector.extract_strided_slice %194 {offsets = [0, 256], sizes = [2, 128], strides = [1, 1]} : vector<2x384xf32> to vector<2x128xf32>
    %198 = vector.extract_strided_slice %188 {offsets = [0, 384], sizes = [2, 128], strides = [1, 1]} : vector<2x512xf32> to vector<2x128xf32>
    %199 = math.tanh %198 : vector<2x128xf32>
    %200 = arith.mulf %196, %164 : vector<2x128xf32>
    %201 = arith.mulf %195, %199 : vector<2x128xf32>
    %202 = arith.addf %200, %201 : vector<2x128xf32>
    %203 = math.tanh %202 : vector<2x128xf32>
    %204 = arith.mulf %197, %203 : vector<2x128xf32>
    %205 = vector.extract_strided_slice %10 {offsets = [10, 0], sizes = [2, 512], strides = [1, 1]} : vector<16x512xf32> to vector<2x512xf32>
    %cst_35 = arith.constant dense<0.000000e+00> : vector<2x512xf32>
    %206 = tpu.matmul %185, %1, %cst_35 {dimension_numbers = #tpu.dot_dimension_numbers<[1], [0], [0], [1], [0, 0, 1, 1], [], []>} : vector<2x128xf32>, vector<128x512xf32>, vector<2x512xf32> -> vector<2x512xf32>
    %207 = arith.addf %205, %206 : vector<2x512xf32>
    %208 = vector.extract_strided_slice %207 {offsets = [0, 0], sizes = [2, 384], strides = [1, 1]} : vector<2x512xf32> to vector<2x384xf32>
    %209 = arith.negf %208 : vector<2x384xf32>
    %210 = math.exp %209 : vector<2x384xf32>
    %cst_36 = arith.constant 1.000000e+00 : f32
    %211 = vector.broadcast %cst_36 : f32 to vector<2x384xf32>
    %212 = arith.addf %211, %210 : vector<2x384xf32>
    %213 = arith.divf %211, %212 : vector<2x384xf32>
    %214 = vector.extract_strided_slice %213 {offsets = [0, 0], sizes = [2, 128], strides = [1, 1]} : vector<2x384xf32> to vector<2x128xf32>
    %215 = vector.extract_strided_slice %213 {offsets = [0, 128], sizes = [2, 128], strides = [1, 1]} : vector<2x384xf32> to vector<2x128xf32>
    %216 = vector.extract_strided_slice %213 {offsets = [0, 256], sizes = [2, 128], strides = [1, 1]} : vector<2x384xf32> to vector<2x128xf32>
    %217 = vector.extract_strided_slice %207 {offsets = [0, 384], sizes = [2, 128], strides = [1, 1]} : vector<2x512xf32> to vector<2x128xf32>
    %218 = math.tanh %217 : vector<2x128xf32>
    %219 = arith.mulf %215, %183 : vector<2x128xf32>
    %220 = arith.mulf %214, %218 : vector<2x128xf32>
    %221 = arith.addf %219, %220 : vector<2x128xf32>
    %222 = math.tanh %221 : vector<2x128xf32>
    %223 = arith.mulf %216, %222 : vector<2x128xf32>
    %224 = tpu.concatenate %223, %204 in 1 : vector<2x128xf32>, vector<2x128xf32> -> vector<2x256xf32>
    %cst_37 = arith.constant dense<0.000000e+00> : vector<2x512xf32>
    %225 = tpu.matmul %224, %3, %cst_37 {dimension_numbers = #tpu.dot_dimension_numbers<[1], [0], [0], [1], [0, 0, 1, 1], [], []>} : vector<2x256xf32>, vector<256x512xf32>, vector<2x512xf32> -> vector<2x512xf32>
    %226 = arith.addf %225, %6 : vector<2x512xf32>
    %227 = vector.extract_strided_slice %226 {offsets = [0, 0], sizes = [2, 384], strides = [1, 1]} : vector<2x512xf32> to vector<2x384xf32>
    %228 = arith.negf %227 : vector<2x384xf32>
    %229 = math.exp %228 : vector<2x384xf32>
    %cst_38 = arith.constant 1.000000e+00 : f32
    %230 = vector.broadcast %cst_38 : f32 to vector<2x384xf32>
    %231 = arith.addf %230, %229 : vector<2x384xf32>
    %232 = arith.divf %230, %231 : vector<2x384xf32>
    %233 = vector.extract_strided_slice %232 {offsets = [0, 0], sizes = [2, 128], strides = [1, 1]} : vector<2x384xf32> to vector<2x128xf32>
    %234 = vector.extract_strided_slice %232 {offsets = [0, 128], sizes = [2, 128], strides = [1, 1]} : vector<2x384xf32> to vector<2x128xf32>
    %235 = vector.extract_strided_slice %232 {offsets = [0, 256], sizes = [2, 128], strides = [1, 1]} : vector<2x384xf32> to vector<2x128xf32>
    %236 = vector.extract_strided_slice %226 {offsets = [0, 384], sizes = [2, 128], strides = [1, 1]} : vector<2x512xf32> to vector<2x128xf32>
    %237 = math.tanh %236 : vector<2x128xf32>
    %238 = arith.mulf %234, %202 : vector<2x128xf32>
    %239 = arith.mulf %233, %237 : vector<2x128xf32>
    %240 = arith.addf %238, %239 : vector<2x128xf32>
    %241 = math.tanh %240 : vector<2x128xf32>
    %242 = arith.mulf %235, %241 : vector<2x128xf32>
    %243 = vector.extract_strided_slice %10 {offsets = [12, 0], sizes = [2, 512], strides = [1, 1]} : vector<16x512xf32> to vector<2x512xf32>
    %cst_39 = arith.constant dense<0.000000e+00> : vector<2x512xf32>
    %244 = tpu.matmul %223, %1, %cst_39 {dimension_numbers = #tpu.dot_dimension_numbers<[1], [0], [0], [1], [0, 0, 1, 1], [], []>} : vector<2x128xf32>, vector<128x512xf32>, vector<2x512xf32> -> vector<2x512xf32>
    %245 = arith.addf %243, %244 : vector<2x512xf32>
    %246 = vector.extract_strided_slice %245 {offsets = [0, 0], sizes = [2, 384], strides = [1, 1]} : vector<2x512xf32> to vector<2x384xf32>
    %247 = arith.negf %246 : vector<2x384xf32>
    %248 = math.exp %247 : vector<2x384xf32>
    %cst_40 = arith.constant 1.000000e+00 : f32
    %249 = vector.broadcast %cst_40 : f32 to vector<2x384xf32>
    %250 = arith.addf %249, %248 : vector<2x384xf32>
    %251 = arith.divf %249, %250 : vector<2x384xf32>
    %252 = vector.extract_strided_slice %251 {offsets = [0, 0], sizes = [2, 128], strides = [1, 1]} : vector<2x384xf32> to vector<2x128xf32>
    %253 = vector.extract_strided_slice %251 {offsets = [0, 128], sizes = [2, 128], strides = [1, 1]} : vector<2x384xf32> to vector<2x128xf32>
    %254 = vector.extract_strided_slice %251 {offsets = [0, 256], sizes = [2, 128], strides = [1, 1]} : vector<2x384xf32> to vector<2x128xf32>
    %255 = vector.extract_strided_slice %245 {offsets = [0, 384], sizes = [2, 128], strides = [1, 1]} : vector<2x512xf32> to vector<2x128xf32>
    %256 = math.tanh %255 : vector<2x128xf32>
    %257 = arith.mulf %253, %221 : vector<2x128xf32>
    %258 = arith.mulf %252, %256 : vector<2x128xf32>
    %259 = arith.addf %257, %258 : vector<2x128xf32>
    %260 = math.tanh %259 : vector<2x128xf32>
    %261 = arith.mulf %254, %260 : vector<2x128xf32>
    %262 = tpu.concatenate %261, %242 in 1 : vector<2x128xf32>, vector<2x128xf32> -> vector<2x256xf32>
    %cst_41 = arith.constant dense<0.000000e+00> : vector<2x512xf32>
    %263 = tpu.matmul %262, %3, %cst_41 {dimension_numbers = #tpu.dot_dimension_numbers<[1], [0], [0], [1], [0, 0, 1, 1], [], []>} : vector<2x256xf32>, vector<256x512xf32>, vector<2x512xf32> -> vector<2x512xf32>
    %264 = arith.addf %263, %6 : vector<2x512xf32>
    %265 = vector.extract_strided_slice %264 {offsets = [0, 0], sizes = [2, 384], strides = [1, 1]} : vector<2x512xf32> to vector<2x384xf32>
    %266 = arith.negf %265 : vector<2x384xf32>
    %267 = math.exp %266 : vector<2x384xf32>
    %cst_42 = arith.constant 1.000000e+00 : f32
    %268 = vector.broadcast %cst_42 : f32 to vector<2x384xf32>
    %269 = arith.addf %268, %267 : vector<2x384xf32>
    %270 = arith.divf %268, %269 : vector<2x384xf32>
    %271 = vector.extract_strided_slice %270 {offsets = [0, 0], sizes = [2, 128], strides = [1, 1]} : vector<2x384xf32> to vector<2x128xf32>
    %272 = vector.extract_strided_slice %270 {offsets = [0, 128], sizes = [2, 128], strides = [1, 1]} : vector<2x384xf32> to vector<2x128xf32>
    %273 = vector.extract_strided_slice %270 {offsets = [0, 256], sizes = [2, 128], strides = [1, 1]} : vector<2x384xf32> to vector<2x128xf32>
    %274 = vector.extract_strided_slice %264 {offsets = [0, 384], sizes = [2, 128], strides = [1, 1]} : vector<2x512xf32> to vector<2x128xf32>
    %275 = math.tanh %274 : vector<2x128xf32>
    %276 = arith.mulf %272, %240 : vector<2x128xf32>
    %277 = arith.mulf %271, %275 : vector<2x128xf32>
    %278 = arith.addf %276, %277 : vector<2x128xf32>
    %279 = math.tanh %278 : vector<2x128xf32>
    %280 = arith.mulf %273, %279 : vector<2x128xf32>
    %281 = vector.extract_strided_slice %10 {offsets = [14, 0], sizes = [2, 512], strides = [1, 1]} : vector<16x512xf32> to vector<2x512xf32>
    %cst_43 = arith.constant dense<0.000000e+00> : vector<2x512xf32>
    %282 = tpu.matmul %261, %1, %cst_43 {dimension_numbers = #tpu.dot_dimension_numbers<[1], [0], [0], [1], [0, 0, 1, 1], [], []>} : vector<2x128xf32>, vector<128x512xf32>, vector<2x512xf32> -> vector<2x512xf32>
    %283 = arith.addf %281, %282 : vector<2x512xf32>
    %284 = vector.extract_strided_slice %283 {offsets = [0, 0], sizes = [2, 384], strides = [1, 1]} : vector<2x512xf32> to vector<2x384xf32>
    %285 = arith.negf %284 : vector<2x384xf32>
    %286 = math.exp %285 : vector<2x384xf32>
    %cst_44 = arith.constant 1.000000e+00 : f32
    %287 = vector.broadcast %cst_44 : f32 to vector<2x384xf32>
    %288 = arith.addf %287, %286 : vector<2x384xf32>
    %289 = arith.divf %287, %288 : vector<2x384xf32>
    %290 = vector.extract_strided_slice %289 {offsets = [0, 0], sizes = [2, 128], strides = [1, 1]} : vector<2x384xf32> to vector<2x128xf32>
    %291 = vector.extract_strided_slice %289 {offsets = [0, 128], sizes = [2, 128], strides = [1, 1]} : vector<2x384xf32> to vector<2x128xf32>
    %292 = vector.extract_strided_slice %289 {offsets = [0, 256], sizes = [2, 128], strides = [1, 1]} : vector<2x384xf32> to vector<2x128xf32>
    %293 = vector.extract_strided_slice %283 {offsets = [0, 384], sizes = [2, 128], strides = [1, 1]} : vector<2x512xf32> to vector<2x128xf32>
    %294 = math.tanh %293 : vector<2x128xf32>
    %295 = arith.mulf %291, %259 : vector<2x128xf32>
    %296 = arith.mulf %290, %294 : vector<2x128xf32>
    %297 = arith.addf %295, %296 : vector<2x128xf32>
    %298 = math.tanh %297 : vector<2x128xf32>
    %299 = arith.mulf %292, %298 : vector<2x128xf32>
    %300 = tpu.concatenate %299, %280 in 1 : vector<2x128xf32>, vector<2x128xf32> -> vector<2x256xf32>
    %cst_45 = arith.constant dense<0.000000e+00> : vector<2x512xf32>
    %301 = tpu.matmul %300, %3, %cst_45 {dimension_numbers = #tpu.dot_dimension_numbers<[1], [0], [0], [1], [0, 0, 1, 1], [], []>} : vector<2x256xf32>, vector<256x512xf32>, vector<2x512xf32> -> vector<2x512xf32>
    %302 = arith.addf %301, %6 : vector<2x512xf32>
    %303 = vector.extract_strided_slice %302 {offsets = [0, 0], sizes = [2, 384], strides = [1, 1]} : vector<2x512xf32> to vector<2x384xf32>
    %304 = arith.negf %303 : vector<2x384xf32>
    %305 = math.exp %304 : vector<2x384xf32>
    %cst_46 = arith.constant 1.000000e+00 : f32
    %306 = vector.broadcast %cst_46 : f32 to vector<2x384xf32>
    %307 = arith.addf %306, %305 : vector<2x384xf32>
    %308 = arith.divf %306, %307 : vector<2x384xf32>
    %309 = vector.extract_strided_slice %308 {offsets = [0, 0], sizes = [2, 128], strides = [1, 1]} : vector<2x384xf32> to vector<2x128xf32>
    %310 = vector.extract_strided_slice %308 {offsets = [0, 128], sizes = [2, 128], strides = [1, 1]} : vector<2x384xf32> to vector<2x128xf32>
    %311 = vector.extract_strided_slice %308 {offsets = [0, 256], sizes = [2, 128], strides = [1, 1]} : vector<2x384xf32> to vector<2x128xf32>
    %312 = vector.extract_strided_slice %302 {offsets = [0, 384], sizes = [2, 128], strides = [1, 1]} : vector<2x512xf32> to vector<2x128xf32>
    %313 = math.tanh %312 : vector<2x128xf32>
    %314 = arith.mulf %310, %278 : vector<2x128xf32>
    %315 = arith.mulf %309, %313 : vector<2x128xf32>
    %316 = arith.addf %314, %315 : vector<2x128xf32>
    %317 = math.tanh %316 : vector<2x128xf32>
    %318 = arith.mulf %311, %317 : vector<2x128xf32>
    %319 = vector.extract_strided_slice %299 {offsets = [0, 0], sizes = [2, 5], strides = [1, 1]} : vector<2x128xf32> to vector<2x5xf32>
    %c0_47 = arith.constant 0 : index
    %c0_48 = arith.constant 0 : index
    %c0_49 = arith.constant 0 : index
    %320 = vector.load %arg6[%c0_47, %c0_48, %c0_49] : memref<2x2x5xf32, #tpu.memory_space<vmem>>, vector<1x2x5xf32>
    %321 = vector.shape_cast %320 : vector<1x2x5xf32> to vector<2x5xf32>
    %322 = vector.shape_cast %319 : vector<2x5xf32> to vector<1x2x5xf32>
    tpu.vector_store %arg6[%c0_47, %c0_48, %c0_49], %322 {strides = array<i32>} : memref<2x2x5xf32, #tpu.memory_space<vmem>>, vector<1x2x5xf32>,
    %323 = vector.extract_strided_slice %297 {offsets = [0, 0], sizes = [2, 5], strides = [1, 1]} : vector<2x128xf32> to vector<2x5xf32>
    %c0_50 = arith.constant 0 : index
    %c0_51 = arith.constant 0 : index
    %c0_52 = arith.constant 0 : index
    %324 = vector.load %arg7[%c0_50, %c0_51, %c0_52] : memref<2x2x5xf32, #tpu.memory_space<vmem>>, vector<1x2x5xf32>
    %325 = vector.shape_cast %324 : vector<1x2x5xf32> to vector<2x5xf32>
    %326 = vector.shape_cast %323 : vector<2x5xf32> to vector<1x2x5xf32>
    tpu.vector_store %arg7[%c0_50, %c0_51, %c0_52], %326 {strides = array<i32>} : memref<2x2x5xf32, #tpu.memory_space<vmem>>, vector<1x2x5xf32>,
    %327 = vector.extract_strided_slice %318 {offsets = [0, 0], sizes = [2, 5], strides = [1, 1]} : vector<2x128xf32> to vector<2x5xf32>
    %c1 = arith.constant 1 : index
    %c0_53 = arith.constant 0 : index
    %c0_54 = arith.constant 0 : index
    %328 = vector.load %arg6[%c1, %c0_53, %c0_54] : memref<2x2x5xf32, #tpu.memory_space<vmem>>, vector<1x2x5xf32>
    %329 = vector.shape_cast %328 : vector<1x2x5xf32> to vector<2x5xf32>
    %330 = vector.shape_cast %327 : vector<2x5xf32> to vector<1x2x5xf32>
    tpu.vector_store %arg6[%c1, %c0_53, %c0_54], %330 {strides = array<i32>} : memref<2x2x5xf32, #tpu.memory_space<vmem>>, vector<1x2x5xf32>,
    %331 = vector.extract_strided_slice %316 {offsets = [0, 0], sizes = [2, 5], strides = [1, 1]} : vector<2x128xf32> to vector<2x5xf32>
    %c1_55 = arith.constant 1 : index
    %c0_56 = arith.constant 0 : index
    %c0_57 = arith.constant 0 : index
    %332 = vector.load %arg7[%c1_55, %c0_56, %c0_57] : memref<2x2x5xf32, #tpu.memory_space<vmem>>, vector<1x2x5xf32>
    %333 = vector.shape_cast %332 : vector<1x2x5xf32> to vector<2x5xf32>
    %334 = vector.shape_cast %331 : vector<2x5xf32> to vector<1x2x5xf32>
    tpu.vector_store %arg7[%c1_55, %c0_56, %c0_57], %334 {strides = array<i32>} : memref<2x2x5xf32, #tpu.memory_space<vmem>>, vector<1x2x5xf32>,
    return
  }
}

</mosaic_0001>

<llo_original>
// kernel: _encoder_forward.1
$region0: #{_encoder_forward.1}
  #allocation0 [shape = 'u32[]', space=smem, size = 0x4, offset = 0x4, fixed_abs, tag = 'smem constant byte address 0x4 - core index']
  #allocation1 [shape = 'u32[72,128]{1,0:T(1,128)}', space=vmem, size = 0x9000, scoped, tag = 'internal scratch']
  %s0 = inlined_call_operand.vmem [shape: f32[16,10], index: 0, kind: input, shape index: {}]
  %s1 = inlined_call_operand.hbm [shape: f32[10,512], index: 1, kind: input, shape index: {}]
  %s2 = inlined_call_operand.hbm [shape: f32[128,512], index: 2, kind: input, shape index: {}]
  %s3 = inlined_call_operand.vmem [shape: f32[1,512], index: 3, kind: input, shape index: {}]
  %s4 = inlined_call_operand.hbm [shape: f32[256,512], index: 4, kind: input, shape index: {}]
  %s5 = inlined_call_operand.vmem [shape: f32[1,512], index: 5, kind: input, shape index: {}]
  %s6 = inlined_call_operand.hbm [shape: f32[2,2,5], index: 6, kind: output, shape index: {0}]
  %s7 = inlined_call_operand.hbm [shape: f32[2,2,5], index: 7, kind: output, shape index: {1}]
  %8 = xla_tuple %s6, %s7
  %s9 = sld [smem:[#allocation0]]
  $region54: #{_encoder_forward.1} parent=0
    _
  %s11 = ssub.s32 1, %s9
  %s12 = scalar_select 0, %s11, %s9
  $region1: #{_encoder_forward.1} parent=0
    #allocation2 [shape = 'u8[32768]{0}', space=vmem, size = 0x8000, scoped, tag = 'input window, operand 1, single buffered']
    #allocation3 [shape = 's32[1]{0}', space=sflag, size = 0x4, scoped, tag = 'scoped memory for _encoder_forward.1']
    #allocation4 [shape = 's32[1]{0}', space=sflag, size = 0x4, scoped, tag = 'scoped memory for _encoder_forward.1']
    #allocation5 [shape = 'u8[262144]{0}', space=vmem, size = 0x40000, scoped, tag = 'input window, operand 2, single buffered']
    #allocation6 [shape = 's32[1]{0}', space=sflag, size = 0x4, scoped, tag = 'scoped memory for _encoder_forward.1']
    #allocation7 [shape = 'u8[524288]{0}', space=vmem, size = 0x80000, scoped, tag = 'input window, operand 4, single buffered']
    #allocation8 [shape = 'u8[2048]{0}', space=vmem, size = 0x800, scoped, tag = 'output window, operand 0, single buffered']
    #allocation9 [shape = 'u8[2048]{0}', space=vmem, size = 0x800, scoped, tag = 'output window, operand 1, single buffered']
    #allocation10 [shape = 's32[1]{0}', space=sflag, size = 0x4, scoped, tag = 'scoped memory for _encoder_forward.1']
    %13 = vsyncpa [#allocation3], 0
    %14 = vsyncpa [#allocation6], 0
    %15 = vsyncpa [#allocation4], 0
    %16 = vsyncpa [#allocation10], 0
    // Predicated region
    $region2: #{_encoder_forward.1} parent=1 // pred_check
      _
    $region3: #{_encoder_forward.1} parent=1 // pred_check_branch
      %18 = sbr.rel (0) target = $region5
    $region4: #{_encoder_forward.1} parent=1 // pred_region
      _
    $region5: #{_encoder_forward.1} parent=1 // pred_fallthru
      _
    // Predicated region
    $region6: #{_encoder_forward.1} parent=1 // pred_check
      _
    $region7: #{_encoder_forward.1} parent=1 // pred_check_branch
      %20 = sbr.rel (0) target = $region9
    $region8: #{_encoder_forward.1} parent=1 // pred_region
      %22 = vsyncadd [#allocation3], 0
      %s23 = sshll.u32 %s1, 4
      %s24 = int_to_ptr.hbm [resolvable:$true] %s23
      %s25 = sshll.u32 [#allocation2], 4
      %s26 = int_to_ptr.vmem [resolvable:$true] %s25
      %31 = dma.hbm_to_vmem [thread:$0]  %s24, 1024, %s26, [#allocation3], 512, 512, 32
    $region9: #{_encoder_forward.1} parent=1 // pred_fallthru
      _
    // Predicated region
    $region10: #{_encoder_forward.1} parent=1 // pred_check
      _
    $region11: #{_encoder_forward.1} parent=1 // pred_check_branch
      %33 = sbr.rel (0) target = $region13
    $region12: #{_encoder_forward.1} parent=1 // pred_region
      %35 = vsyncadd [#allocation6], 0
      %s36 = sshll.u32 %s2, 4
      %s37 = int_to_ptr.hbm [resolvable:$true] %s36
      %s38 = sshll.u32 [#allocation5], 4
      %s39 = int_to_ptr.vmem [resolvable:$true] %s38
      %44 = dma.hbm_to_vmem [thread:$0]  %s37, 8192, %s39, [#allocation6], 512, 512, 32
    $region13: #{_encoder_forward.1} parent=1 // pred_fallthru
      _
    // Predicated region
    $region14: #{_encoder_forward.1} parent=1 // pred_check
      _
    $region15: #{_encoder_forward.1} parent=1 // pred_check_branch
      %46 = sbr.rel (0) target = $region17
    $region16: #{_encoder_forward.1} parent=1 // pred_region
      _
    $region17: #{_encoder_forward.1} parent=1 // pred_fallthru
      _
    // Predicated region
    $region18: #{_encoder_forward.1} parent=1 // pred_check
      _
    $region19: #{_encoder_forward.1} parent=1 // pred_check_branch
      %48 = sbr.rel (0) target = $region21
    $region20: #{_encoder_forward.1} parent=1 // pred_region
      %50 = vsyncadd [#allocation6], 0
      %s51 = sshll.u32 %s4, 4
      %s52 = int_to_ptr.hbm [resolvable:$true] %s51
      %s53 = sshll.u32 [#allocation7], 4
      %s54 = int_to_ptr.vmem [resolvable:$true] %s53
      %59 = dma.hbm_to_vmem [thread:$0]  %s52, 16384, %s54, [#allocation6], 512, 512, 32
    $region21: #{_encoder_forward.1} parent=1 // pred_fallthru
      _
    // Predicated region
    $region22: #{_encoder_forward.1} parent=1 // pred_check
      _
    $region23: #{_encoder_forward.1} parent=1 // pred_check_branch
      %61 = sbr.rel (0) target = $region25
    $region24: #{_encoder_forward.1} parent=1 // pred_region
      _
    $region25: #{_encoder_forward.1} parent=1 // pred_fallthru
      _
    // Predicated region
    $region26: #{_encoder_forward.1} parent=1 // pred_check
      _
    $region27: #{_encoder_forward.1} parent=1 // pred_check_branch
      %63 = sbr.rel (0) target = $region29
    $region28: #{_encoder_forward.1} parent=1 // pred_region
      %65 = dma.done [#allocation3], 1024
    $region29: #{_encoder_forward.1} parent=1 // pred_fallthru
      _
    // Predicated region
    $region30: #{_encoder_forward.1} parent=1 // pred_check
      _
    $region31: #{_encoder_forward.1} parent=1 // pred_check_branch
      %67 = sbr.rel (0) target = $region33
    $region32: #{_encoder_forward.1} parent=1 // pred_region
      %69 = dma.done [#allocation6], 8192
    $region33: #{_encoder_forward.1} parent=1 // pred_fallthru
      _
    // Predicated region
    $region34: #{_encoder_forward.1} parent=1 // pred_check
      _
    $region35: #{_encoder_forward.1} parent=1 // pred_check_branch
      %71 = sbr.rel (0) target = $region37
    $region36: #{_encoder_forward.1} parent=1 // pred_region
      %73 = dma.done [#allocation6], 16384
    $region37: #{_encoder_forward.1} parent=1 // pred_fallthru
      _
    %v74 = vld [vmem:[#allocation2] sm:$0xff]
    %v75 = vld [vmem:[#allocation2 + $0x8] sm:$0xff]
    %v76 = vld [vmem:[#allocation2 + $0x10] sm:$0xff]
    %v77 = vld [vmem:[#allocation2 + $0x18] sm:$0xff]
    %v78 = vld [vmem:[#allocation2 + $0x20] sm:$0x3]
    %v79 = vld [vmem:[#allocation2 + $0x28] sm:$0x3]
    %v80 = vld [vmem:[#allocation2 + $0x30] sm:$0x3]
    %v81 = vld [vmem:[#allocation2 + $0x38] sm:$0x3]
    %v82 = vld [vmem:[#allocation5] sm:$0xff]
    %v83 = vld [vmem:[#allocation5 + $0x8] sm:$0xff]
    %v84 = vld [vmem:[#allocation5 + $0x10] sm:$0xff]
    %v85 = vld [vmem:[#allocation5 + $0x18] sm:$0xff]
    %v86 = vld [vmem:[#allocation5 + $0x20] sm:$0xff]
    %v87 = vld [vmem:[#allocation5 + $0x28] sm:$0xff]
    %v88 = vld [vmem:[#allocation5 + $0x30] sm:$0xff]
    %v89 = vld [vmem:[#allocation5 + $0x38] sm:$0xff]
    %v90 = vld [vmem:[#allocation5 + $0x40] sm:$0xff]
    %v91 = vld [vmem:[#allocation5 + $0x48] sm:$0xff]
    %v92 = vld [vmem:[#allocation5 + $0x50] sm:$0xff]
    %v93 = vld [vmem:[#allocation5 + $0x58] sm:$0xff]
    %v94 = vld [vmem:[#allocation5 + $0x60] sm:$0xff]
    %v95 = vld [vmem:[#allocation5 + $0x68] sm:$0xff]
    %v96 = vld [vmem:[#allocation5 + $0x70] sm:$0xff]
    %v97 = vld [vmem:[#allocation5 + $0x78] sm:$0xff]
    %v98 = vld [vmem:[#allocation5 + $0x80] sm:$0xff]
    %v99 = vld [vmem:[#allocation5 + $0x88] sm:$0xff]
    %v100 = vld [vmem:[#allocation5 + $0x90] sm:$0xff]
    %v101 = vld [vmem:[#allocation5 + $0x98] sm:$0xff]
    %v102 = vld [vmem:[#allocation5 + $0xa0] sm:$0xff]
    %v103 = vld [vmem:[#allocation5 + $0xa8] sm:$0xff]
    %v104 = vld [vmem:[#allocation5 + $0xb0] sm:$0xff]
    %v105 = vld [vmem:[#allocation5 + $0xb8] sm:$0xff]
    %v106 = vld [vmem:[#allocation5 + $0xc0] sm:$0xff]
    %v107 = vld [vmem:[#allocation5 + $0xc8] sm:$0xff]
    %v108 = vld [vmem:[#allocation5 + $0xd0] sm:$0xff]
    %v109 = vld [vmem:[#allocation5 + $0xd8] sm:$0xff]
    %v110 = vld [vmem:[#allocation5 + $0xe0] sm:$0xff]
    %v111 = vld [vmem:[#allocation5 + $0xe8] sm:$0xff]
    %v112 = vld [vmem:[#allocation5 + $0xf0] sm:$0xff]
    %v113 = vld [vmem:[#allocation5 + $0xf8] sm:$0xff]
    %v114 = vld [vmem:[#allocation5 + $0x100] sm:$0xff]
    %v115 = vld [vmem:[#allocation5 + $0x108] sm:$0xff]
    %v116 = vld [vmem:[#allocation5 + $0x110] sm:$0xff]
    %v117 = vld [vmem:[#allocation5 + $0x118] sm:$0xff]
    %v118 = vld [vmem:[#allocation5 + $0x120] sm:$0xff]
    %v119 = vld [vmem:[#allocation5 + $0x128] sm:$0xff]
    %v120 = vld [vmem:[#allocation5 + $0x130] sm:$0xff]
    %v121 = vld [vmem:[#allocation5 + $0x138] sm:$0xff]
    %v122 = vld [vmem:[#allocation5 + $0x140] sm:$0xff]
    %v123 = vld [vmem:[#allocation5 + $0x148] sm:$0xff]
    %v124 = vld [vmem:[#allocation5 + $0x150] sm:$0xff]
    %v125 = vld [vmem:[#allocation5 + $0x158] sm:$0xff]
    %v126 = vld [vmem:[#allocation5 + $0x160] sm:$0xff]
    %v127 = vld [vmem:[#allocation5 + $0x168] sm:$0xff]
    %v128 = vld [vmem:[#allocation5 + $0x170] sm:$0xff]
    %v129 = vld [vmem:[#allocation5 + $0x178] sm:$0xff]
    %v130 = vld [vmem:[#allocation5 + $0x180] sm:$0xff]
    %v131 = vld [vmem:[#allocation5 + $0x188] sm:$0xff]
    %v132 = vld [vmem:[#allocation5 + $0x190] sm:$0xff]
    %v133 = vld [vmem:[#allocation5 + $0x198] sm:$0xff]
    %v134 = vld [vmem:[#allocation5 + $0x1a0] sm:$0xff]
    %v135 = vld [vmem:[#allocation5 + $0x1a8] sm:$0xff]
    %v136 = vld [vmem:[#allocation5 + $0x1b0] sm:$0xff]
    %v137 = vld [vmem:[#allocation5 + $0x1b8] sm:$0xff]
    %v138 = vld [vmem:[#allocation5 + $0x1c0] sm:$0xff]
    %v139 = vld [vmem:[#allocation5 + $0x1c8] sm:$0xff]
    %v140 = vld [vmem:[#allocation5 + $0x1d0] sm:$0xff]
    %v141 = vld [vmem:[#allocation5 + $0x1d8] sm:$0xff]
    %v142 = vld [vmem:[#allocation5 + $0x1e0] sm:$0xff]
    %v143 = vld [vmem:[#allocation5 + $0x1e8] sm:$0xff]
    %v144 = vld [vmem:[#allocation5 + $0x1f0] sm:$0xff]
    %v145 = vld [vmem:[#allocation5 + $0x1f8] sm:$0xff]
    %v146 = vld [vmem:[%s3] sm:$0xf]
    %v147 = vld [vmem:[#allocation7] sm:$0xff]
    %v148 = vld [vmem:[#allocation7 + $0x8] sm:$0xff]
    %v149 = vld [vmem:[#allocation7 + $0x10] sm:$0xff]
    %v150 = vld [vmem:[#allocation7 + $0x18] sm:$0xff]
    %v151 = vld [vmem:[#allocation7 + $0x20] sm:$0xff]
    %v152 = vld [vmem:[#allocation7 + $0x28] sm:$0xff]
    %v153 = vld [vmem:[#allocation7 + $0x30] sm:$0xff]
    %v154 = vld [vmem:[#allocation7 + $0x38] sm:$0xff]
    %v155 = vld [vmem:[#allocation7 + $0x40] sm:$0xff]
    %v156 = vld [vmem:[#allocation7 + $0x48] sm:$0xff]
    %v157 = vld [vmem:[#allocation7 + $0x50] sm:$0xff]
    %v158 = vld [vmem:[#allocation7 + $0x58] sm:$0xff]
    %v159 = vld [vmem:[#allocation7 + $0x60] sm:$0xff]
    %v160 = vld [vmem:[#allocation7 + $0x68] sm:$0xff]
    %v161 = vld [vmem:[#allocation7 + $0x70] sm:$0xff]
    %v162 = vld [vmem:[#allocation7 + $0x78] sm:$0xff]
    %v163 = vld [vmem:[#allocation7 + $0x80] sm:$0xff]
    %v164 = vld [vmem:[#allocation7 + $0x88] sm:$0xff]
    %v165 = vld [vmem:[#allocation7 + $0x90] sm:$0xff]
    %v166 = vld [vmem:[#allocation7 + $0x98] sm:$0xff]
    %v167 = vld [vmem:[#allocation7 + $0xa0] sm:$0xff]
    %v168 = vld [vmem:[#allocation7 + $0xa8] sm:$0xff]
    %v169 = vld [vmem:[#allocation7 + $0xb0] sm:$0xff]
    %v170 = vld [vmem:[#allocation7 + $0xb8] sm:$0xff]
    %v171 = vld [vmem:[#allocation7 + $0xc0] sm:$0xff]
    %v172 = vld [vmem:[#allocation7 + $0xc8] sm:$0xff]
    %v173 = vld [vmem:[#allocation7 + $0xd0] sm:$0xff]
    %v174 = vld [vmem:[#allocation7 + $0xd8] sm:$0xff]
    %v175 = vld [vmem:[#allocation7 + $0xe0] sm:$0xff]
    %v176 = vld [vmem:[#allocation7 + $0xe8] sm:$0xff]
    %v177 = vld [vmem:[#allocation7 + $0xf0] sm:$0xff]
    %v178 = vld [vmem:[#allocation7 + $0xf8] sm:$0xff]
    %v179 = vld [vmem:[#allocation7 + $0x100] sm:$0xff]
    %v180 = vld [vmem:[#allocation7 + $0x108] sm:$0xff]
    %v181 = vld [vmem:[#allocation7 + $0x110] sm:$0xff]
    %v182 = vld [vmem:[#allocation7 + $0x118] sm:$0xff]
    %v183 = vld [vmem:[#allocation7 + $0x120] sm:$0xff]
    %v184 = vld [vmem:[#allocation7 + $0x128] sm:$0xff]
    %v185 = vld [vmem:[#allocation7 + $0x130] sm:$0xff]
    %v186 = vld [vmem:[#allocation7 + $0x138] sm:$0xff]
    %v187 = vld [vmem:[#allocation7 + $0x140] sm:$0xff]
    %v188 = vld [vmem:[#allocation7 + $0x148] sm:$0xff]
    %v189 = vld [vmem:[#allocation7 + $0x150] sm:$0xff]
    %v190 = vld [vmem:[#allocation7 + $0x158] sm:$0xff]
    %v191 = vld [vmem:[#allocation7 + $0x160] sm:$0xff]
    %v192 = vld [vmem:[#allocation7 + $0x168] sm:$0xff]
    %v193 = vld [vmem:[#allocation7 + $0x170] sm:$0xff]
    %v194 = vld [vmem:[#allocation7 + $0x178] sm:$0xff]
    %v195 = vld [vmem:[#allocation7 + $0x180] sm:$0xff]
    %v196 = vld [vmem:[#allocation7 + $0x188] sm:$0xff]
    %v197 = vld [vmem:[#allocation7 + $0x190] sm:$0xff]
    %v198 = vld [vmem:[#allocation7 + $0x198] sm:$0xff]
    %v199 = vld [vmem:[#allocation7 + $0x1a0] sm:$0xff]
    %v200 = vld [vmem:[#allocation7 + $0x1a8] sm:$0xff]
    %v201 = vld [vmem:[#allocation7 + $0x1b0] sm:$0xff]
    %v202 = vld [vmem:[#allocation7 + $0x1b8] sm:$0xff]
    %v203 = vld [vmem:[#allocation7 + $0x1c0] sm:$0xff]
    %v204 = vld [vmem:[#allocation7 + $0x1c8] sm:$0xff]
    %v205 = vld [vmem:[#allocation7 + $0x1d0] sm:$0xff]
    %v206 = vld [vmem:[#allocation7 + $0x1d8] sm:$0xff]
    %v207 = vld [vmem:[#allocation7 + $0x1e0] sm:$0xff]
    %v208 = vld [vmem:[#allocation7 + $0x1e8] sm:$0xff]
    %v209 = vld [vmem:[#allocation7 + $0x1f0] sm:$0xff]
    %v210 = vld [vmem:[#allocation7 + $0x1f8] sm:$0xff]
    %v211 = vld [vmem:[#allocation7 + $0x200] sm:$0xff]
    %v212 = vld [vmem:[#allocation7 + $0x208] sm:$0xff]
    %v213 = vld [vmem:[#allocation7 + $0x210] sm:$0xff]
    %v214 = vld [vmem:[#allocation7 + $0x218] sm:$0xff]
    %v215 = vld [vmem:[#allocation7 + $0x220] sm:$0xff]
    %v216 = vld [vmem:[#allocation7 + $0x228] sm:$0xff]
    %v217 = vld [vmem:[#allocation7 + $0x230] sm:$0xff]
    %v218 = vld [vmem:[#allocation7 + $0x238] sm:$0xff]
    %v219 = vld [vmem:[#allocation7 + $0x240] sm:$0xff]
    %v220 = vld [vmem:[#allocation7 + $0x248] sm:$0xff]
    %v221 = vld [vmem:[#allocation7 + $0x250] sm:$0xff]
    %v222 = vld [vmem:[#allocation7 + $0x258] sm:$0xff]
    %v223 = vld [vmem:[#allocation7 + $0x260] sm:$0xff]
    %v224 = vld [vmem:[#allocation7 + $0x268] sm:$0xff]
    %v225 = vld [vmem:[#allocation7 + $0x270] sm:$0xff]
    %v226 = vld [vmem:[#allocation7 + $0x278] sm:$0xff]
    %v227 = vld [vmem:[#allocation7 + $0x280] sm:$0xff]
    %v228 = vld [vmem:[#allocation7 + $0x288] sm:$0xff]
    %v229 = vld [vmem:[#allocation7 + $0x290] sm:$0xff]
    %v230 = vld [vmem:[#allocation7 + $0x298] sm:$0xff]
    %v231 = vld [vmem:[#allocation7 + $0x2a0] sm:$0xff]
    %v232 = vld [vmem:[#allocation7 + $0x2a8] sm:$0xff]
    %v233 = vld [vmem:[#allocation7 + $0x2b0] sm:$0xff]
    %v234 = vld [vmem:[#allocation7 + $0x2b8] sm:$0xff]
    %v235 = vld [vmem:[#allocation7 + $0x2c0] sm:$0xff]
    %v236 = vld [vmem:[#allocation7 + $0x2c8] sm:$0xff]
    %v237 = vld [vmem:[#allocation7 + $0x2d0] sm:$0xff]
    %v238 = vld [vmem:[#allocation7 + $0x2d8] sm:$0xff]
    %v239 = vld [vmem:[#allocation7 + $0x2e0] sm:$0xff]
    %v240 = vld [vmem:[#allocation7 + $0x2e8] sm:$0xff]
    %v241 = vld [vmem:[#allocation7 + $0x2f0] sm:$0xff]
    %v242 = vld [vmem:[#allocation7 + $0x2f8] sm:$0xff]
    %v243 = vld [vmem:[#allocation7 + $0x300] sm:$0xff]
    %v244 = vld [vmem:[#allocation7 + $0x308] sm:$0xff]
    %v245 = vld [vmem:[#allocation7 + $0x310] sm:$0xff]
    %v246 = vld [vmem:[#allocation7 + $0x318] sm:$0xff]
    %v247 = vld [vmem:[#allocation7 + $0x320] sm:$0xff]
    %v248 = vld [vmem:[#allocation7 + $0x328] sm:$0xff]
    %v249 = vld [vmem:[#allocation7 + $0x330] sm:$0xff]
    %v250 = vld [vmem:[#allocation7 + $0x338] sm:$0xff]
    %v251 = vld [vmem:[#allocation7 + $0x340] sm:$0xff]
    %v252 = vld [vmem:[#allocation7 + $0x348] sm:$0xff]
    %v253 = vld [vmem:[#allocation7 + $0x350] sm:$0xff]
    %v254 = vld [vmem:[#allocation7 + $0x358] sm:$0xff]
    %v255 = vld [vmem:[#allocation7 + $0x360] sm:$0xff]
    %v256 = vld [vmem:[#allocation7 + $0x368] sm:$0xff]
    %v257 = vld [vmem:[#allocation7 + $0x370] sm:$0xff]
    %v258 = vld [vmem:[#allocation7 + $0x378] sm:$0xff]
    %v259 = vld [vmem:[#allocation7 + $0x380] sm:$0xff]
    %v260 = vld [vmem:[#allocation7 + $0x388] sm:$0xff]
    %v261 = vld [vmem:[#allocation7 + $0x390] sm:$0xff]
    %v262 = vld [vmem:[#allocation7 + $0x398] sm:$0xff]
    %v263 = vld [vmem:[#allocation7 + $0x3a0] sm:$0xff]
    %v264 = vld [vmem:[#allocation7 + $0x3a8] sm:$0xff]
    %v265 = vld [vmem:[#allocation7 + $0x3b0] sm:$0xff]
    %v266 = vld [vmem:[#allocation7 + $0x3b8] sm:$0xff]
    %v267 = vld [vmem:[#allocation7 + $0x3c0] sm:$0xff]
    %v268 = vld [vmem:[#allocation7 + $0x3c8] sm:$0xff]
    %v269 = vld [vmem:[#allocation7 + $0x3d0] sm:$0xff]
    %v270 = vld [vmem:[#allocation7 + $0x3d8] sm:$0xff]
    %v271 = vld [vmem:[#allocation7 + $0x3e0] sm:$0xff]
    %v272 = vld [vmem:[#allocation7 + $0x3e8] sm:$0xff]
    %v273 = vld [vmem:[#allocation7 + $0x3f0] sm:$0xff]
    %v274 = vld [vmem:[#allocation7 + $0x3f8] sm:$0xff]
    %v275 = vld [vmem:[%s5] sm:$0xf]
    %v277 = vperm.slane %v275, 0
    %v278 = vperm.slane %v275, 1
    %v279 = vperm.slane %v275, 2
    %v280 = vperm.slane %v275, 3
    %v285 = vld [vmem:[%s0] sm:$0xff]
    %v286 = vld [vmem:[%s0 + $0x8] sm:$0xff]
    %v288 = vperm.slane %v146, 0
    %v289 = vperm.slane %v146, 1
    %v290 = vperm.slane %v146, 2
    %v291 = vperm.slane %v146, 3
    %vm296 = vcmask 80896
    %v298 = vsel %vm296, %v285, 0
    %v301 = vsel %vm296, %v286, 0
    %vm303 = vcmask 1041408
    %v305 = vsel %vm303, %v78, 0
    %v308 = vsel %vm303, %v79, 0
    %v311 = vsel %vm303, %v80, 0
    %v314 = vsel %vm303, %v81, 0
    %316 = vmatpush.msra.mxu0 0.0
    %317 = vmatpush.msra.mxu0 0.0
    %318 = vmatpush.msra.mxu0 0.0
    %319 = vmatpush.msra.mxu0 0.0
    %320 = vmatpush.msra.mxu0 0.0
    %321 = vmatpush.msra.mxu0 0.0
    %322 = vmatpush.msra.mxu0 0.0
    %323 = vmatpush.msra.mxu0 0.0
    %324 = vmatpush.msra.mxu0 0.0
    %325 = vmatpush.msra.mxu0 0.0
    %326 = vmatpush.msra.mxu0 0.0
    %327 = vmatpush.msra.mxu0 0.0
    %328 = vmatpush.msra.mxu0 0.0
    %329 = vmatpush.msra.mxu0 0.0
    %330 = vmatpush.msra.mxu0 %v305
    %331 = vmatpush.msra.mxu0 %v74
    %332 = vmatmul.f32.gmra.mxu0 %v298
    %v333 = vpop.f32.mrf.mxu0
    %v334 = vadd.f32 %v288, %v333
    %335 = vmatmul.f32.gmra.mxu0 %v301
    %v336 = vpop.f32.mrf.mxu0
    %v337 = vadd.f32 %v288, %v336
    %338 = vdwg.mxu0
    %339 = vmatpush.msra.mxu0 0.0
    %340 = vmatpush.msra.mxu0 0.0
    %341 = vmatpush.msra.mxu0 0.0
    %342 = vmatpush.msra.mxu0 0.0
    %343 = vmatpush.msra.mxu0 0.0
    %344 = vmatpush.msra.mxu0 0.0
    %345 = vmatpush.msra.mxu0 0.0
    %346 = vmatpush.msra.mxu0 0.0
    %347 = vmatpush.msra.mxu0 0.0
    %348 = vmatpush.msra.mxu0 0.0
    %349 = vmatpush.msra.mxu0 0.0
    %350 = vmatpush.msra.mxu0 0.0
    %351 = vmatpush.msra.mxu0 0.0
    %352 = vmatpush.msra.mxu0 0.0
    %353 = vmatpush.msra.mxu0 %v308
    %354 = vmatpush.msra.mxu0 %v75
    %355 = vmatmul.f32.gmra.mxu0 %v298
    %v356 = vpop.f32.mrf.mxu0
    %v357 = vadd.f32 %v289, %v356
    %358 = vmatmul.f32.gmra.mxu0 %v301
    %v359 = vpop.f32.mrf.mxu0
    %v360 = vadd.f32 %v289, %v359
    %361 = vdwg.mxu0
    %362 = vmatpush.msra.mxu0 0.0
    %363 = vmatpush.msra.mxu0 0.0
    %364 = vmatpush.msra.mxu0 0.0
    %365 = vmatpush.msra.mxu0 0.0
    %366 = vmatpush.msra.mxu0 0.0
    %367 = vmatpush.msra.mxu0 0.0
    %368 = vmatpush.msra.mxu0 0.0
    %369 = vmatpush.msra.mxu0 0.0
    %370 = vmatpush.msra.mxu0 0.0
    %371 = vmatpush.msra.mxu0 0.0
    %372 = vmatpush.msra.mxu0 0.0
    %373 = vmatpush.msra.mxu0 0.0
    %374 = vmatpush.msra.mxu0 0.0
    %375 = vmatpush.msra.mxu0 0.0
    %376 = vmatpush.msra.mxu0 %v311
    %377 = vmatpush.msra.mxu0 %v76
    %378 = vmatmul.f32.gmra.mxu0 %v298
    %v379 = vpop.f32.mrf.mxu0
    %v380 = vadd.f32 %v290, %v379
    %381 = vmatmul.f32.gmra.mxu0 %v301
    %v382 = vpop.f32.mrf.mxu0
    %v383 = vadd.f32 %v290, %v382
    %384 = vdwg.mxu0
    %385 = vmatpush.msra.mxu0 0.0
    %386 = vmatpush.msra.mxu0 0.0
    %387 = vmatpush.msra.mxu0 0.0
    %388 = vmatpush.msra.mxu0 0.0
    %389 = vmatpush.msra.mxu0 0.0
    %390 = vmatpush.msra.mxu0 0.0
    %391 = vmatpush.msra.mxu0 0.0
    %392 = vmatpush.msra.mxu0 0.0
    %393 = vmatpush.msra.mxu0 0.0
    %394 = vmatpush.msra.mxu0 0.0
    %395 = vmatpush.msra.mxu0 0.0
    %396 = vmatpush.msra.mxu0 0.0
    %397 = vmatpush.msra.mxu0 0.0
    %398 = vmatpush.msra.mxu0 0.0
    %399 = vmatpush.msra.mxu0 %v314
    %400 = vmatpush.msra.mxu0 %v77
    %401 = vmatmul.f32.gmra.mxu0 %v298
    %v402 = vpop.f32.mrf.mxu0
    %v403 = vadd.f32 %v291, %v402
    %404 = vmatmul.f32.gmra.mxu0 %v301
    %v405 = vpop.f32.mrf.mxu0
    %v406 = vadd.f32 %v291, %v405
    %407 = vdwg.mxu0
    %408 = vmatpush.msra.mxu0 %v142
    %409 = vmatpush.msra.mxu0 %v138
    %410 = vmatpush.msra.mxu0 %v134
    %411 = vmatpush.msra.mxu0 %v130
    %412 = vmatpush.msra.mxu0 %v126
    %413 = vmatpush.msra.mxu0 %v122
    %414 = vmatpush.msra.mxu0 %v118
    %415 = vmatpush.msra.mxu0 %v114
    %416 = vmatpush.msra.mxu0 %v110
    %417 = vmatpush.msra.mxu0 %v106
    %418 = vmatpush.msra.mxu0 %v102
    %419 = vmatpush.msra.mxu0 %v98
    %420 = vmatpush.msra.mxu0 %v94
    %421 = vmatpush.msra.mxu0 %v90
    %422 = vmatpush.msra.mxu0 %v86
    %423 = vmatpush.msra.mxu0 %v82
    %424 = vmatmul.f32.gmra.mxu0 0.0
    %v425 = vpop.f32.mrf.mxu0
    %v426 = vadd.f32 0.0, %v425
    %427 = vdwg.mxu0
    %428 = vmatpush.msra.mxu0 %v143
    %429 = vmatpush.msra.mxu0 %v139
    %430 = vmatpush.msra.mxu0 %v135
    %431 = vmatpush.msra.mxu0 %v131
    %432 = vmatpush.msra.mxu0 %v127
    %433 = vmatpush.msra.mxu0 %v123
    %434 = vmatpush.msra.mxu0 %v119
    %435 = vmatpush.msra.mxu0 %v115
    %436 = vmatpush.msra.mxu0 %v111
    %437 = vmatpush.msra.mxu0 %v107
    %438 = vmatpush.msra.mxu0 %v103
    %439 = vmatpush.msra.mxu0 %v99
    %440 = vmatpush.msra.mxu0 %v95
    %441 = vmatpush.msra.mxu0 %v91
    %442 = vmatpush.msra.mxu0 %v87
    %443 = vmatpush.msra.mxu0 %v83
    %444 = vmatmul.f32.gmra.mxu0 0.0
    %v445 = vpop.f32.mrf.mxu0
    %v446 = vadd.f32 0.0, %v445
    %447 = vdwg.mxu0
    %448 = vmatpush.msra.mxu0 %v144
    %449 = vmatpush.msra.mxu0 %v140
    %450 = vmatpush.msra.mxu0 %v136
    %451 = vmatpush.msra.mxu0 %v132
    %452 = vmatpush.msra.mxu0 %v128
    %453 = vmatpush.msra.mxu0 %v124
    %454 = vmatpush.msra.mxu0 %v120
    %455 = vmatpush.msra.mxu0 %v116
    %456 = vmatpush.msra.mxu0 %v112
    %457 = vmatpush.msra.mxu0 %v108
    %458 = vmatpush.msra.mxu0 %v104
    %459 = vmatpush.msra.mxu0 %v100
    %460 = vmatpush.msra.mxu0 %v96
    %461 = vmatpush.msra.mxu0 %v92
    %462 = vmatpush.msra.mxu0 %v88
    %463 = vmatpush.msra.mxu0 %v84
    %464 = vmatmul.f32.gmra.mxu0 0.0
    %v465 = vpop.f32.mrf.mxu0
    %v466 = vadd.f32 0.0, %v465
    %467 = vdwg.mxu0
    %468 = vmatpush.msra.mxu0 %v145
    %469 = vmatpush.msra.mxu0 %v141
    %470 = vmatpush.msra.mxu0 %v137
    %471 = vmatpush.msra.mxu0 %v133
    %472 = vmatpush.msra.mxu0 %v129
    %473 = vmatpush.msra.mxu0 %v125
    %474 = vmatpush.msra.mxu0 %v121
    %475 = vmatpush.msra.mxu0 %v117
    %476 = vmatpush.msra.mxu0 %v113
    %477 = vmatpush.msra.mxu0 %v109
    %478 = vmatpush.msra.mxu0 %v105
    %479 = vmatpush.msra.mxu0 %v101
    %480 = vmatpush.msra.mxu0 %v97
    %481 = vmatpush.msra.mxu0 %v93
    %482 = vmatpush.msra.mxu0 %v89
    %483 = vmatpush.msra.mxu0 %v85
    %484 = vmatmul.f32.gmra.mxu0 0.0
    %v485 = vpop.f32.mrf.mxu0
    %v486 = vadd.f32 0.0, %v485
    %487 = vdwg.mxu0
    %v488 = vadd.f32 %v334, %v426
    %v489 = vadd.f32 %v357, %v446
    %v490 = vadd.f32 %v380, %v466
    %v491 = vadd.f32 %v403, %v486
    %v492 = vxor.u32 %v488, 2147483648
    %v493 = vxor.u32 %v489, 2147483648
    %v494 = vxor.u32 %v490, 2147483648
    %v495 = vmul.f32 %v492, 1.442695
    %v496 = vpow.pop %v495
    %v497 = vmul.f32 %v493, 1.442695
    %v498 = vpow.pop %v497
    %v499 = vmul.f32 %v494, 1.442695
    %v500 = vpow.pop %v499
    %v501 = vadd.f32 %v496, 1.0
    %v502 = vadd.f32 %v498, 1.0
    %v503 = vadd.f32 %v500, 1.0
    %v504 = vrcp.pop %v501
    %v505 = vmul.f32 %v501, %v504
    %v506 = vsub.f32 1.0, %v505
    %v507 = vmul.f32 %v504, %v506
    %v508 = vadd.f32 %v504, %v507
    %vm509 = vweird.f32 %v501
    %vm510 = vweird.f32 %v504
    %vm511 = vmor %vm509, %vm510
    %v512 = vsel %vm511, %v504, %v508
    %v513 = vand.u32 2147483647, %v501
    %vm514 = vcmp.eq.f32.partialorder %v513, 8.507059e+37
    %v515 = vand.u32 %v501, 2147483648
    %v516 = vor.u32 1.1754944e-38, %v515
    %v517 = vsel %vm514, %v516, %v512
    %v518 = vmul.f32 1.0, %v517
    %v519 = vrcp.pop %v502
    %v520 = vmul.f32 %v502, %v519
    %v521 = vsub.f32 1.0, %v520
    %v522 = vmul.f32 %v519, %v521
    %v523 = vadd.f32 %v519, %v522
    %vm524 = vweird.f32 %v502
    %vm525 = vweird.f32 %v519
    %vm526 = vmor %vm524, %vm525
    %v527 = vsel %vm526, %v519, %v523
    %v528 = vand.u32 2147483647, %v502
    %vm529 = vcmp.eq.f32.partialorder %v528, 8.507059e+37
    %v530 = vand.u32 %v502, 2147483648
    %v531 = vor.u32 1.1754944e-38, %v530
    %v532 = vsel %vm529, %v531, %v527
    %v533 = vmul.f32 1.0, %v532
    %v534 = vrcp.pop %v503
    %v535 = vmul.f32 %v503, %v534
    %v536 = vsub.f32 1.0, %v535
    %v537 = vmul.f32 %v534, %v536
    %v538 = vadd.f32 %v534, %v537
    %vm539 = vweird.f32 %v503
    %vm540 = vweird.f32 %v534
    %vm541 = vmor %vm539, %vm540
    %v542 = vsel %vm541, %v534, %v538
    %v543 = vand.u32 2147483647, %v503
    %vm544 = vcmp.eq.f32.partialorder %v543, 8.507059e+37
    %v545 = vand.u32 %v503, 2147483648
    %v546 = vor.u32 1.1754944e-38, %v545
    %v547 = vsel %vm544, %v546, %v542
    %v548 = vmul.f32 1.0, %v547
    %v549 = vtanh.pop %v491
    %v550 = vmul.f32 %v533, 0.0
    %v551 = vmul.f32 %v518, %v549
    %v552 = vadd.f32 %v550, %v551
    %v553 = vtanh.pop %v552
    %v554 = vmul.f32 %v548, %v553
    %555 = vmatpush.msra.mxu0 %v207
    %556 = vmatpush.msra.mxu0 %v203
    %557 = vmatpush.msra.mxu0 %v199
    %558 = vmatpush.msra.mxu0 %v195
    %559 = vmatpush.msra.mxu0 %v191
    %560 = vmatpush.msra.mxu0 %v187
    %561 = vmatpush.msra.mxu0 %v183
    %562 = vmatpush.msra.mxu0 %v179
    %563 = vmatpush.msra.mxu0 %v175
    %564 = vmatpush.msra.mxu0 %v171
    %565 = vmatpush.msra.mxu0 %v167
    %566 = vmatpush.msra.mxu0 %v163
    %567 = vmatpush.msra.mxu0 %v159
    %568 = vmatpush.msra.mxu0 %v155
    %569 = vmatpush.msra.mxu0 %v151
    %570 = vmatpush.msra.mxu0 %v147
    %571 = vmatmul.f32.gmra.mxu0 %v554
    %v572 = vpop.f32.mrf.mxu0
    %v573 = vadd.f32 %v277, %v572
    %574 = vdwg.mxu0
    %575 = vmatpush.msra.mxu0 %v271
    %576 = vmatpush.msra.mxu0 %v267
    %577 = vmatpush.msra.mxu0 %v263
    %578 = vmatpush.msra.mxu0 %v259
    %579 = vmatpush.msra.mxu0 %v255
    %580 = vmatpush.msra.mxu0 %v251
    %581 = vmatpush.msra.mxu0 %v247
    %582 = vmatpush.msra.mxu0 %v243
    %583 = vmatpush.msra.mxu0 %v239
    %584 = vmatpush.msra.mxu0 %v235
    %585 = vmatpush.msra.mxu0 %v231
    %586 = vmatpush.msra.mxu0 %v227
    %587 = vmatpush.msra.mxu0 %v223
    %588 = vmatpush.msra.mxu0 %v219
    %589 = vmatpush.msra.mxu0 %v215
    %590 = vmatpush.msra.mxu0 %v211
    %591 = vmatmul.f32.gmra.mxu0 0.0
    %v592 = vpop.f32.mrf.mxu0
    %v593 = vadd.f32 %v573, %v592
    %594 = vdwg.mxu0
    %595 = vmatpush.msra.mxu0 %v208
    %596 = vmatpush.msra.mxu0 %v204
    %597 = vmatpush.msra.mxu0 %v200
    %598 = vmatpush.msra.mxu0 %v196
    %599 = vmatpush.msra.mxu0 %v192
    %600 = vmatpush.msra.mxu0 %v188
    %601 = vmatpush.msra.mxu0 %v184
    %602 = vmatpush.msra.mxu0 %v180
    %603 = vmatpush.msra.mxu0 %v176
    %604 = vmatpush.msra.mxu0 %v172
    %605 = vmatpush.msra.mxu0 %v168
    %606 = vmatpush.msra.mxu0 %v164
    %607 = vmatpush.msra.mxu0 %v160
    %608 = vmatpush.msra.mxu0 %v156
    %609 = vmatpush.msra.mxu0 %v152
    %610 = vmatpush.msra.mxu0 %v148
    %611 = vmatmul.f32.gmra.mxu0 %v554
    %v612 = vpop.f32.mrf.mxu0
    %v613 = vadd.f32 %v278, %v612
    %614 = vdwg.mxu0
    %615 = vmatpush.msra.mxu0 %v272
    %616 = vmatpush.msra.mxu0 %v268
    %617 = vmatpush.msra.mxu0 %v264
    %618 = vmatpush.msra.mxu0 %v260
    %619 = vmatpush.msra.mxu0 %v256
    %620 = vmatpush.msra.mxu0 %v252
    %621 = vmatpush.msra.mxu0 %v248
    %622 = vmatpush.msra.mxu0 %v244
    %623 = vmatpush.msra.mxu0 %v240
    %624 = vmatpush.msra.mxu0 %v236
    %625 = vmatpush.msra.mxu0 %v232
    %626 = vmatpush.msra.mxu0 %v228
    %627 = vmatpush.msra.mxu0 %v224
    %628 = vmatpush.msra.mxu0 %v220
    %629 = vmatpush.msra.mxu0 %v216
    %630 = vmatpush.msra.mxu0 %v212
    %631 = vmatmul.f32.gmra.mxu0 0.0
    %v632 = vpop.f32.mrf.mxu0
    %v633 = vadd.f32 %v613, %v632
    %634 = vdwg.mxu0
    %635 = vmatpush.msra.mxu0 %v209
    %636 = vmatpush.msra.mxu0 %v205
    %637 = vmatpush.msra.mxu0 %v201
    %638 = vmatpush.msra.mxu0 %v197
    %639 = vmatpush.msra.mxu0 %v193
    %640 = vmatpush.msra.mxu0 %v189
    %641 = vmatpush.msra.mxu0 %v185
    %642 = vmatpush.msra.mxu0 %v181
    %643 = vmatpush.msra.mxu0 %v177
    %644 = vmatpush.msra.mxu0 %v173
    %645 = vmatpush.msra.mxu0 %v169
    %646 = vmatpush.msra.mxu0 %v165
    %647 = vmatpush.msra.mxu0 %v161
    %648 = vmatpush.msra.mxu0 %v157
    %649 = vmatpush.msra.mxu0 %v153
    %650 = vmatpush.msra.mxu0 %v149
    %651 = vmatmul.f32.gmra.mxu0 %v554
    %v652 = vpop.f32.mrf.mxu0
    %v653 = vadd.f32 %v279, %v652
    %654 = vdwg.mxu0
    %655 = vmatpush.msra.mxu0 %v273
    %656 = vmatpush.msra.mxu0 %v269
    %657 = vmatpush.msra.mxu0 %v265
    %658 = vmatpush.msra.mxu0 %v261
    %659 = vmatpush.msra.mxu0 %v257
    %660 = vmatpush.msra.mxu0 %v253
    %661 = vmatpush.msra.mxu0 %v249
    %662 = vmatpush.msra.mxu0 %v245
    %663 = vmatpush.msra.mxu0 %v241
    %664 = vmatpush.msra.mxu0 %v237
    %665 = vmatpush.msra.mxu0 %v233
    %666 = vmatpush.msra.mxu0 %v229
    %667 = vmatpush.msra.mxu0 %v225
    %668 = vmatpush.msra.mxu0 %v221
    %669 = vmatpush.msra.mxu0 %v217
    %670 = vmatpush.msra.mxu0 %v213
    %671 = vmatmul.f32.gmra.mxu0 0.0
    %v672 = vpop.f32.mrf.mxu0
    %v673 = vadd.f32 %v653, %v672
    %674 = vdwg.mxu0
    %675 = vmatpush.msra.mxu0 %v210
    %676 = vmatpush.msra.mxu0 %v206
    %677 = vmatpush.msra.mxu0 %v202
    %678 = vmatpush.msra.mxu0 %v198
    %679 = vmatpush.msra.mxu0 %v194
    %680 = vmatpush.msra.mxu0 %v190
    %681 = vmatpush.msra.mxu0 %v186
    %682 = vmatpush.msra.mxu0 %v182
    %683 = vmatpush.msra.mxu0 %v178
    %684 = vmatpush.msra.mxu0 %v174
    %685 = vmatpush.msra.mxu0 %v170
    %686 = vmatpush.msra.mxu0 %v166
    %687 = vmatpush.msra.mxu0 %v162
    %688 = vmatpush.msra.mxu0 %v158
    %689 = vmatpush.msra.mxu0 %v154
    %690 = vmatpush.msra.mxu0 %v150
    %691 = vmatmul.f32.gmra.mxu0 %v554
    %v692 = vpop.f32.mrf.mxu0
    %v693 = vadd.f32 %v280, %v692
    %694 = vdwg.mxu0
    %695 = vmatpush.msra.mxu0 %v274
    %696 = vmatpush.msra.mxu0 %v270
    %697 = vmatpush.msra.mxu0 %v266
    %698 = vmatpush.msra.mxu0 %v262
    %699 = vmatpush.msra.mxu0 %v258
    %700 = vmatpush.msra.mxu0 %v254
    %701 = vmatpush.msra.mxu0 %v250
    %702 = vmatpush.msra.mxu0 %v246
    %703 = vmatpush.msra.mxu0 %v242
    %704 = vmatpush.msra.mxu0 %v238
    %705 = vmatpush.msra.mxu0 %v234
    %706 = vmatpush.msra.mxu0 %v230
    %707 = vmatpush.msra.mxu0 %v226
    %708 = vmatpush.msra.mxu0 %v222
    %709 = vmatpush.msra.mxu0 %v218
    %710 = vmatpush.msra.mxu0 %v214
    %711 = vmatmul.f32.gmra.mxu0 0.0
    %v712 = vpop.f32.mrf.mxu0
    %v713 = vadd.f32 %v693, %v712
    %714 = vdwg.mxu0
    %v715 = vxor.u32 %v593, 2147483648
    %v716 = vxor.u32 %v633, 2147483648
    %v717 = vxor.u32 %v673, 2147483648
    %v718 = vmul.f32 %v715, 1.442695
    %v719 = vpow.pop %v718
    %v720 = vmul.f32 %v716, 1.442695
    %v721 = vpow.pop %v720
    %v722 = vmul.f32 %v717, 1.442695
    %v723 = vpow.pop %v722
    %v724 = vadd.f32 %v719, 1.0
    %v725 = vadd.f32 %v721, 1.0
    %v726 = vadd.f32 %v723, 1.0
    %v727 = vrcp.pop %v724
    %v728 = vmul.f32 %v724, %v727
    %v729 = vsub.f32 1.0, %v728
    %v730 = vmul.f32 %v727, %v729
    %v731 = vadd.f32 %v727, %v730
    %vm732 = vweird.f32 %v724
    %vm733 = vweird.f32 %v727
    %vm734 = vmor %vm732, %vm733
    %v735 = vsel %vm734, %v727, %v731
    %v736 = vand.u32 2147483647, %v724
    %vm737 = vcmp.eq.f32.partialorder %v736, 8.507059e+37
    %v738 = vand.u32 %v724, 2147483648
    %v739 = vor.u32 1.1754944e-38, %v738
    %v740 = vsel %vm737, %v739, %v735
    %v741 = vmul.f32 1.0, %v740
    %v742 = vrcp.pop %v725
    %v743 = vmul.f32 %v725, %v742
    %v744 = vsub.f32 1.0, %v743
    %v745 = vmul.f32 %v742, %v744
    %v746 = vadd.f32 %v742, %v745
    %vm747 = vweird.f32 %v725
    %vm748 = vweird.f32 %v742
    %vm749 = vmor %vm747, %vm748
    %v750 = vsel %vm749, %v742, %v746
    %v751 = vand.u32 2147483647, %v725
    %vm752 = vcmp.eq.f32.partialorder %v751, 8.507059e+37
    %v753 = vand.u32 %v725, 2147483648
    %v754 = vor.u32 1.1754944e-38, %v753
    %v755 = vsel %vm752, %v754, %v750
    %v756 = vmul.f32 1.0, %v755
    %v757 = vrcp.pop %v726
    %v758 = vmul.f32 %v726, %v757
    %v759 = vsub.f32 1.0, %v758
    %v760 = vmul.f32 %v757, %v759
    %v761 = vadd.f32 %v757, %v760
    %vm762 = vweird.f32 %v726
    %vm763 = vweird.f32 %v757
    %vm764 = vmor %vm762, %vm763
    %v765 = vsel %vm764, %v757, %v761
    %v766 = vand.u32 2147483647, %v726
    %vm767 = vcmp.eq.f32.partialorder %v766, 8.507059e+37
    %v768 = vand.u32 %v726, 2147483648
    %v769 = vor.u32 1.1754944e-38, %v768
    %v770 = vsel %vm767, %v769, %v765
    %v771 = vmul.f32 1.0, %v770
    %v772 = vtanh.pop %v713
    %v773 = vmul.f32 %v756, 0.0
    %v774 = vmul.f32 %v741, %v772
    %v775 = vadd.f32 %v773, %v774
    %v776 = vtanh.pop %v775
    %v777 = vmul.f32 %v771, %v776
    %778 = vmatpush.msra.mxu0 %v142
    %779 = vmatpush.msra.mxu0 %v138
    %780 = vmatpush.msra.mxu0 %v134
    %781 = vmatpush.msra.mxu0 %v130
    %782 = vmatpush.msra.mxu0 %v126
    %783 = vmatpush.msra.mxu0 %v122
    %784 = vmatpush.msra.mxu0 %v118
    %785 = vmatpush.msra.mxu0 %v114
    %786 = vmatpush.msra.mxu0 %v110
    %787 = vmatpush.msra.mxu0 %v106
    %788 = vmatpush.msra.mxu0 %v102
    %789 = vmatpush.msra.mxu0 %v98
    %790 = vmatpush.msra.mxu0 %v94
    %791 = vmatpush.msra.mxu0 %v90
    %792 = vmatpush.msra.mxu0 %v86
    %793 = vmatpush.msra.mxu0 %v82
    %794 = vmatmul.f32.gmra.mxu0 %v554
    %v795 = vpop.f32.mrf.mxu0
    %v796 = vadd.f32 0.0, %v795
    %797 = vdwg.mxu0
    %798 = vmatpush.msra.mxu0 %v143
    %799 = vmatpush.msra.mxu0 %v139
    %800 = vmatpush.msra.mxu0 %v135
    %801 = vmatpush.msra.mxu0 %v131
    %802 = vmatpush.msra.mxu0 %v127
    %803 = vmatpush.msra.mxu0 %v123
    %804 = vmatpush.msra.mxu0 %v119
    %805 = vmatpush.msra.mxu0 %v115
    %806 = vmatpush.msra.mxu0 %v111
    %807 = vmatpush.msra.mxu0 %v107
    %808 = vmatpush.msra.mxu0 %v103
    %809 = vmatpush.msra.mxu0 %v99
    %810 = vmatpush.msra.mxu0 %v95
    %811 = vmatpush.msra.mxu0 %v91
    %812 = vmatpush.msra.mxu0 %v87
    %813 = vmatpush.msra.mxu0 %v83
    %814 = vmatmul.f32.gmra.mxu0 %v554
    %v815 = vpop.f32.mrf.mxu0
    %v816 = vadd.f32 0.0, %v815
    %817 = vdwg.mxu0
    %818 = vmatpush.msra.mxu0 %v144
    %819 = vmatpush.msra.mxu0 %v140
    %820 = vmatpush.msra.mxu0 %v136
    %821 = vmatpush.msra.mxu0 %v132
    %822 = vmatpush.msra.mxu0 %v128
    %823 = vmatpush.msra.mxu0 %v124
    %824 = vmatpush.msra.mxu0 %v120
    %825 = vmatpush.msra.mxu0 %v116
    %826 = vmatpush.msra.mxu0 %v112
    %827 = vmatpush.msra.mxu0 %v108
    %828 = vmatpush.msra.mxu0 %v104
    %829 = vmatpush.msra.mxu0 %v100
    %830 = vmatpush.msra.mxu0 %v96
    %831 = vmatpush.msra.mxu0 %v92
    %832 = vmatpush.msra.mxu0 %v88
    %833 = vmatpush.msra.mxu0 %v84
    %834 = vmatmul.f32.gmra.mxu0 %v554
    %v835 = vpop.f32.mrf.mxu0
    %v836 = vadd.f32 0.0, %v835
    %837 = vdwg.mxu0
    %838 = vmatpush.msra.mxu0 %v145
    %839 = vmatpush.msra.mxu0 %v141
    %840 = vmatpush.msra.mxu0 %v137
    %841 = vmatpush.msra.mxu0 %v133
    %842 = vmatpush.msra.mxu0 %v129
    %843 = vmatpush.msra.mxu0 %v125
    %844 = vmatpush.msra.mxu0 %v121
    %845 = vmatpush.msra.mxu0 %v117
    %846 = vmatpush.msra.mxu0 %v113
    %847 = vmatpush.msra.mxu0 %v109
    %848 = vmatpush.msra.mxu0 %v105
    %849 = vmatpush.msra.mxu0 %v101
    %850 = vmatpush.msra.mxu0 %v97
    %851 = vmatpush.msra.mxu0 %v93
    %852 = vmatpush.msra.mxu0 %v89
    %853 = vmatpush.msra.mxu0 %v85
    %854 = vmatmul.f32.gmra.mxu0 %v554
    %v855 = vpop.f32.mrf.mxu0
    %v856 = vadd.f32 0.0, %v855
    %857 = vdwg.mxu0
    %v862 = vrot.slane %v796, 6
    %v863 = vrot.slane %v816, 6
    %v864 = vrot.slane %v836, 6
    %v865 = vrot.slane %v856, 6
    %v870 = vadd.f32 %v334, %v862
    %v871 = vadd.f32 %v357, %v863
    %v872 = vadd.f32 %v380, %v864
    %v873 = vadd.f32 %v403, %v865
    %v874 = vxor.u32 %v870, 2147483648
    %v875 = vxor.u32 %v871, 2147483648
    %v876 = vxor.u32 %v872, 2147483648
    %v877 = vmul.f32 %v874, 1.442695
    %v878 = vpow.pop %v877
    %v879 = vmul.f32 %v875, 1.442695
    %v880 = vpow.pop %v879
    %v881 = vmul.f32 %v876, 1.442695
    %v882 = vpow.pop %v881
    %v883 = vadd.f32 %v878, 1.0
    %v884 = vadd.f32 %v880, 1.0
    %v885 = vadd.f32 %v882, 1.0
    %v886 = vrcp.pop %v883
    %v887 = vmul.f32 %v883, %v886
    %v888 = vsub.f32 1.0, %v887
    %v889 = vmul.f32 %v886, %v888
    %v890 = vadd.f32 %v886, %v889
    %vm891 = vweird.f32 %v883
    %vm892 = vweird.f32 %v886
    %vm893 = vmor %vm891, %vm892
    %v894 = vsel %vm893, %v886, %v890
    %v895 = vand.u32 2147483647, %v883
    %vm896 = vcmp.eq.f32.partialorder %v895, 8.507059e+37
    %v897 = vand.u32 %v883, 2147483648
    %v898 = vor.u32 1.1754944e-38, %v897
    %v899 = vsel %vm896, %v898, %v894
    %v900 = vmul.f32 1.0, %v899
    %v901 = vrcp.pop %v884
    %v902 = vmul.f32 %v884, %v901
    %v903 = vsub.f32 1.0, %v902
    %v904 = vmul.f32 %v901, %v903
    %v905 = vadd.f32 %v901, %v904
    %vm906 = vweird.f32 %v884
    %vm907 = vweird.f32 %v901
    %vm908 = vmor %vm906, %vm907
    %v909 = vsel %vm908, %v901, %v905
    %v910 = vand.u32 2147483647, %v884
    %vm911 = vcmp.eq.f32.partialorder %v910, 8.507059e+37
    %v912 = vand.u32 %v884, 2147483648
    %v913 = vor.u32 1.1754944e-38, %v912
    %v914 = vsel %vm911, %v913, %v909
    %v915 = vmul.f32 1.0, %v914
    %v916 = vrcp.pop %v885
    %v917 = vmul.f32 %v885, %v916
    %v918 = vsub.f32 1.0, %v917
    %v919 = vmul.f32 %v916, %v918
    %v920 = vadd.f32 %v916, %v919
    %vm921 = vweird.f32 %v885
    %vm922 = vweird.f32 %v916
    %vm923 = vmor %vm921, %vm922
    %v924 = vsel %vm923, %v916, %v920
    %v925 = vand.u32 2147483647, %v885
    %vm926 = vcmp.eq.f32.partialorder %v925, 8.507059e+37
    %v927 = vand.u32 %v885, 2147483648
    %v928 = vor.u32 1.1754944e-38, %v927
    %v929 = vsel %vm926, %v928, %v924
    %v930 = vmul.f32 1.0, %v929
    %v931 = vtanh.pop %v873
    %v933 = vrot.slane %v552, 6
    %v935 = vmul.f32 %v915, %v933
    %v936 = vmul.f32 %v900, %v931
    %v937 = vadd.f32 %v935, %v936
    %v938 = vtanh.pop %v937
    %v939 = vmul.f32 %v930, %v938
    %v941 = vrot.slane %v777, 6
    %v943 = vrot.slane %v939, 2
    %v944 = vrot.slane %v941, 2
    %947 = vmatpush.msra.mxu0 %v207
    %948 = vmatpush.msra.mxu0 %v203
    %949 = vmatpush.msra.mxu0 %v199
    %950 = vmatpush.msra.mxu0 %v195
    %951 = vmatpush.msra.mxu0 %v191
    %952 = vmatpush.msra.mxu0 %v187
    %953 = vmatpush.msra.mxu0 %v183
    %954 = vmatpush.msra.mxu0 %v179
    %955 = vmatpush.msra.mxu0 %v175
    %956 = vmatpush.msra.mxu0 %v171
    %957 = vmatpush.msra.mxu0 %v167
    %958 = vmatpush.msra.mxu0 %v163
    %959 = vmatpush.msra.mxu0 %v159
    %960 = vmatpush.msra.mxu0 %v155
    %961 = vmatpush.msra.mxu0 %v151
    %962 = vmatpush.msra.mxu0 %v147
    %963 = vmatmul.f32.gmra.mxu0 %v943
    %v964 = vpop.f32.mrf.mxu0
    %v965 = vadd.f32 %v277, %v964
    %966 = vdwg.mxu0
    %967 = vmatpush.msra.mxu0 %v271
    %968 = vmatpush.msra.mxu0 %v267
    %969 = vmatpush.msra.mxu0 %v263
    %970 = vmatpush.msra.mxu0 %v259
    %971 = vmatpush.msra.mxu0 %v255
    %972 = vmatpush.msra.mxu0 %v251
    %973 = vmatpush.msra.mxu0 %v247
    %974 = vmatpush.msra.mxu0 %v243
    %975 = vmatpush.msra.mxu0 %v239
    %976 = vmatpush.msra.mxu0 %v235
    %977 = vmatpush.msra.mxu0 %v231
    %978 = vmatpush.msra.mxu0 %v227
    %979 = vmatpush.msra.mxu0 %v223
    %980 = vmatpush.msra.mxu0 %v219
    %981 = vmatpush.msra.mxu0 %v215
    %982 = vmatpush.msra.mxu0 %v211
    %983 = vmatmul.f32.gmra.mxu0 %v944
    %v984 = vpop.f32.mrf.mxu0
    %v985 = vadd.f32 %v965, %v984
    %986 = vdwg.mxu0
    %987 = vmatpush.msra.mxu0 %v208
    %988 = vmatpush.msra.mxu0 %v204
    %989 = vmatpush.msra.mxu0 %v200
    %990 = vmatpush.msra.mxu0 %v196
    %991 = vmatpush.msra.mxu0 %v192
    %992 = vmatpush.msra.mxu0 %v188
    %993 = vmatpush.msra.mxu0 %v184
    %994 = vmatpush.msra.mxu0 %v180
    %995 = vmatpush.msra.mxu0 %v176
    %996 = vmatpush.msra.mxu0 %v172
    %997 = vmatpush.msra.mxu0 %v168
    %998 = vmatpush.msra.mxu0 %v164
    %999 = vmatpush.msra.mxu0 %v160
    %1000 = vmatpush.msra.mxu0 %v156
    %1001 = vmatpush.msra.mxu0 %v152
    %1002 = vmatpush.msra.mxu0 %v148
    %1003 = vmatmul.f32.gmra.mxu0 %v943
    %v1004 = vpop.f32.mrf.mxu0
    %v1005 = vadd.f32 %v278, %v1004
    %1006 = vdwg.mxu0
    %1007 = vmatpush.msra.mxu0 %v272
    %1008 = vmatpush.msra.mxu0 %v268
    %1009 = vmatpush.msra.mxu0 %v264
    %1010 = vmatpush.msra.mxu0 %v260
    %1011 = vmatpush.msra.mxu0 %v256
    %1012 = vmatpush.msra.mxu0 %v252
    %1013 = vmatpush.msra.mxu0 %v248
    %1014 = vmatpush.msra.mxu0 %v244
    %1015 = vmatpush.msra.mxu0 %v240
    %1016 = vmatpush.msra.mxu0 %v236
    %1017 = vmatpush.msra.mxu0 %v232
    %1018 = vmatpush.msra.mxu0 %v228
    %1019 = vmatpush.msra.mxu0 %v224
    %1020 = vmatpush.msra.mxu0 %v220
    %1021 = vmatpush.msra.mxu0 %v216
    %1022 = vmatpush.msra.mxu0 %v212
    %1023 = vmatmul.f32.gmra.mxu0 %v944
    %v1024 = vpop.f32.mrf.mxu0
    %v1025 = vadd.f32 %v1005, %v1024
    %1026 = vdwg.mxu0
    %1027 = vmatpush.msra.mxu0 %v209
    %1028 = vmatpush.msra.mxu0 %v205
    %1029 = vmatpush.msra.mxu0 %v201
    %1030 = vmatpush.msra.mxu0 %v197
    %1031 = vmatpush.msra.mxu0 %v193
    %1032 = vmatpush.msra.mxu0 %v189
    %1033 = vmatpush.msra.mxu0 %v185
    %1034 = vmatpush.msra.mxu0 %v181
    %1035 = vmatpush.msra.mxu0 %v177
    %1036 = vmatpush.msra.mxu0 %v173
    %1037 = vmatpush.msra.mxu0 %v169
    %1038 = vmatpush.msra.mxu0 %v165
    %1039 = vmatpush.msra.mxu0 %v161
    %1040 = vmatpush.msra.mxu0 %v157
    %1041 = vmatpush.msra.mxu0 %v153
    %1042 = vmatpush.msra.mxu0 %v149
    %1043 = vmatmul.f32.gmra.mxu0 %v943
    %v1044 = vpop.f32.mrf.mxu0
    %v1045 = vadd.f32 %v279, %v1044
    %1046 = vdwg.mxu0
    %1047 = vmatpush.msra.mxu0 %v273
    %1048 = vmatpush.msra.mxu0 %v269
    %1049 = vmatpush.msra.mxu0 %v265
    %1050 = vmatpush.msra.mxu0 %v261
    %1051 = vmatpush.msra.mxu0 %v257
    %1052 = vmatpush.msra.mxu0 %v253
    %1053 = vmatpush.msra.mxu0 %v249
    %1054 = vmatpush.msra.mxu0 %v245
    %1055 = vmatpush.msra.mxu0 %v241
    %1056 = vmatpush.msra.mxu0 %v237
    %1057 = vmatpush.msra.mxu0 %v233
    %1058 = vmatpush.msra.mxu0 %v229
    %1059 = vmatpush.msra.mxu0 %v225
    %1060 = vmatpush.msra.mxu0 %v221
    %1061 = vmatpush.msra.mxu0 %v217
    %1062 = vmatpush.msra.mxu0 %v213
    %1063 = vmatmul.f32.gmra.mxu0 %v944
    %v1064 = vpop.f32.mrf.mxu0
    %v1065 = vadd.f32 %v1045, %v1064
    %1066 = vdwg.mxu0
    %1067 = vmatpush.msra.mxu0 %v210
    %1068 = vmatpush.msra.mxu0 %v206
    %1069 = vmatpush.msra.mxu0 %v202
    %1070 = vmatpush.msra.mxu0 %v198
    %1071 = vmatpush.msra.mxu0 %v194
    %1072 = vmatpush.msra.mxu0 %v190
    %1073 = vmatpush.msra.mxu0 %v186
    %1074 = vmatpush.msra.mxu0 %v182
    %1075 = vmatpush.msra.mxu0 %v178
    %1076 = vmatpush.msra.mxu0 %v174
    %1077 = vmatpush.msra.mxu0 %v170
    %1078 = vmatpush.msra.mxu0 %v166
    %1079 = vmatpush.msra.mxu0 %v162
    %1080 = vmatpush.msra.mxu0 %v158
    %1081 = vmatpush.msra.mxu0 %v154
    %1082 = vmatpush.msra.mxu0 %v150
    %1083 = vmatmul.f32.gmra.mxu0 %v943
    %v1084 = vpop.f32.mrf.mxu0
    %v1085 = vadd.f32 %v280, %v1084
    %1086 = vdwg.mxu0
    %1087 = vmatpush.msra.mxu0 %v274
    %1088 = vmatpush.msra.mxu0 %v270
    %1089 = vmatpush.msra.mxu0 %v266
    %1090 = vmatpush.msra.mxu0 %v262
    %1091 = vmatpush.msra.mxu0 %v258
    %1092 = vmatpush.msra.mxu0 %v254
    %1093 = vmatpush.msra.mxu0 %v250
    %1094 = vmatpush.msra.mxu0 %v246
    %1095 = vmatpush.msra.mxu0 %v242
    %1096 = vmatpush.msra.mxu0 %v238
    %1097 = vmatpush.msra.mxu0 %v234
    %1098 = vmatpush.msra.mxu0 %v230
    %1099 = vmatpush.msra.mxu0 %v226
    %1100 = vmatpush.msra.mxu0 %v222
    %1101 = vmatpush.msra.mxu0 %v218
    %1102 = vmatpush.msra.mxu0 %v214
    %1103 = vmatmul.f32.gmra.mxu0 %v944
    %v1104 = vpop.f32.mrf.mxu0
    %v1105 = vadd.f32 %v1085, %v1104
    %1106 = vdwg.mxu0
    %v1107 = vxor.u32 %v985, 2147483648
    %v1108 = vxor.u32 %v1025, 2147483648
    %v1109 = vxor.u32 %v1065, 2147483648
    %v1110 = vmul.f32 %v1107, 1.442695
    %v1111 = vpow.pop %v1110
    %v1112 = vmul.f32 %v1108, 1.442695
    %v1113 = vpow.pop %v1112
    %v1114 = vmul.f32 %v1109, 1.442695
    %v1115 = vpow.pop %v1114
    %v1116 = vadd.f32 %v1111, 1.0
    %v1117 = vadd.f32 %v1113, 1.0
    %v1118 = vadd.f32 %v1115, 1.0
    %v1119 = vrcp.pop %v1116
    %v1120 = vmul.f32 %v1116, %v1119
    %v1121 = vsub.f32 1.0, %v1120
    %v1122 = vmul.f32 %v1119, %v1121
    %v1123 = vadd.f32 %v1119, %v1122
    %vm1124 = vweird.f32 %v1116
    %vm1125 = vweird.f32 %v1119
    %vm1126 = vmor %vm1124, %vm1125
    %v1127 = vsel %vm1126, %v1119, %v1123
    %v1128 = vand.u32 2147483647, %v1116
    %vm1129 = vcmp.eq.f32.partialorder %v1128, 8.507059e+37
    %v1130 = vand.u32 %v1116, 2147483648
    %v1131 = vor.u32 1.1754944e-38, %v1130
    %v1132 = vsel %vm1129, %v1131, %v1127
    %v1133 = vmul.f32 1.0, %v1132
    %v1134 = vrcp.pop %v1117
    %v1135 = vmul.f32 %v1117, %v1134
    %v1136 = vsub.f32 1.0, %v1135
    %v1137 = vmul.f32 %v1134, %v1136
    %v1138 = vadd.f32 %v1134, %v1137
    %vm1139 = vweird.f32 %v1117
    %vm1140 = vweird.f32 %v1134
    %vm1141 = vmor %vm1139, %vm1140
    %v1142 = vsel %vm1141, %v1134, %v1138
    %v1143 = vand.u32 2147483647, %v1117
    %vm1144 = vcmp.eq.f32.partialorder %v1143, 8.507059e+37
    %v1145 = vand.u32 %v1117, 2147483648
    %v1146 = vor.u32 1.1754944e-38, %v1145
    %v1147 = vsel %vm1144, %v1146, %v1142
    %v1148 = vmul.f32 1.0, %v1147
    %v1149 = vrcp.pop %v1118
    %v1150 = vmul.f32 %v1118, %v1149
    %v1151 = vsub.f32 1.0, %v1150
    %v1152 = vmul.f32 %v1149, %v1151
    %v1153 = vadd.f32 %v1149, %v1152
    %vm1154 = vweird.f32 %v1118
    %vm1155 = vweird.f32 %v1149
    %vm1156 = vmor %vm1154, %vm1155
    %v1157 = vsel %vm1156, %v1149, %v1153
    %v1158 = vand.u32 2147483647, %v1118
    %vm1159 = vcmp.eq.f32.partialorder %v1158, 8.507059e+37
    %v1160 = vand.u32 %v1118, 2147483648
    %v1161 = vor.u32 1.1754944e-38, %v1160
    %v1162 = vsel %vm1159, %v1161, %v1157
    %v1163 = vmul.f32 1.0, %v1162
    %v1164 = vtanh.pop %v1105
    %v1165 = vmul.f32 %v1148, %v775
    %v1166 = vmul.f32 %v1133, %v1164
    %v1167 = vadd.f32 %v1165, %v1166
    %v1168 = vtanh.pop %v1167
    %v1169 = vmul.f32 %v1163, %v1168
    %1170 = vmatpush.msra.mxu0 %v142
    %1171 = vmatpush.msra.mxu0 %v138
    %1172 = vmatpush.msra.mxu0 %v134
    %1173 = vmatpush.msra.mxu0 %v130
    %1174 = vmatpush.msra.mxu0 %v126
    %1175 = vmatpush.msra.mxu0 %v122
    %1176 = vmatpush.msra.mxu0 %v118
    %1177 = vmatpush.msra.mxu0 %v114
    %1178 = vmatpush.msra.mxu0 %v110
    %1179 = vmatpush.msra.mxu0 %v106
    %1180 = vmatpush.msra.mxu0 %v102
    %1181 = vmatpush.msra.mxu0 %v98
    %1182 = vmatpush.msra.mxu0 %v94
    %1183 = vmatpush.msra.mxu0 %v90
    %1184 = vmatpush.msra.mxu0 %v86
    %1185 = vmatpush.msra.mxu0 %v82
    %1186 = vmatmul.f32.gmra.mxu0 %v943
    %v1187 = vpop.f32.mrf.mxu0
    %v1188 = vadd.f32 0.0, %v1187
    %1189 = vdwg.mxu0
    %1190 = vmatpush.msra.mxu0 %v143
    %1191 = vmatpush.msra.mxu0 %v139
    %1192 = vmatpush.msra.mxu0 %v135
    %1193 = vmatpush.msra.mxu0 %v131
    %1194 = vmatpush.msra.mxu0 %v127
    %1195 = vmatpush.msra.mxu0 %v123
    %1196 = vmatpush.msra.mxu0 %v119
    %1197 = vmatpush.msra.mxu0 %v115
    %1198 = vmatpush.msra.mxu0 %v111
    %1199 = vmatpush.msra.mxu0 %v107
    %1200 = vmatpush.msra.mxu0 %v103
    %1201 = vmatpush.msra.mxu0 %v99
    %1202 = vmatpush.msra.mxu0 %v95
    %1203 = vmatpush.msra.mxu0 %v91
    %1204 = vmatpush.msra.mxu0 %v87
    %1205 = vmatpush.msra.mxu0 %v83
    %1206 = vmatmul.f32.gmra.mxu0 %v943
    %v1207 = vpop.f32.mrf.mxu0
    %v1208 = vadd.f32 0.0, %v1207
    %1209 = vdwg.mxu0
    %1210 = vmatpush.msra.mxu0 %v144
    %1211 = vmatpush.msra.mxu0 %v140
    %1212 = vmatpush.msra.mxu0 %v136
    %1213 = vmatpush.msra.mxu0 %v132
    %1214 = vmatpush.msra.mxu0 %v128
    %1215 = vmatpush.msra.mxu0 %v124
    %1216 = vmatpush.msra.mxu0 %v120
    %1217 = vmatpush.msra.mxu0 %v116
    %1218 = vmatpush.msra.mxu0 %v112
    %1219 = vmatpush.msra.mxu0 %v108
    %1220 = vmatpush.msra.mxu0 %v104
    %1221 = vmatpush.msra.mxu0 %v100
    %1222 = vmatpush.msra.mxu0 %v96
    %1223 = vmatpush.msra.mxu0 %v92
    %1224 = vmatpush.msra.mxu0 %v88
    %1225 = vmatpush.msra.mxu0 %v84
    %1226 = vmatmul.f32.gmra.mxu0 %v943
    %v1227 = vpop.f32.mrf.mxu0
    %v1228 = vadd.f32 0.0, %v1227
    %1229 = vdwg.mxu0
    %1230 = vmatpush.msra.mxu0 %v145
    %1231 = vmatpush.msra.mxu0 %v141
    %1232 = vmatpush.msra.mxu0 %v137
    %1233 = vmatpush.msra.mxu0 %v133
    %1234 = vmatpush.msra.mxu0 %v129
    %1235 = vmatpush.msra.mxu0 %v125
    %1236 = vmatpush.msra.mxu0 %v121
    %1237 = vmatpush.msra.mxu0 %v117
    %1238 = vmatpush.msra.mxu0 %v113
    %1239 = vmatpush.msra.mxu0 %v109
    %1240 = vmatpush.msra.mxu0 %v105
    %1241 = vmatpush.msra.mxu0 %v101
    %1242 = vmatpush.msra.mxu0 %v97
    %1243 = vmatpush.msra.mxu0 %v93
    %1244 = vmatpush.msra.mxu0 %v89
    %1245 = vmatpush.msra.mxu0 %v85
    %1246 = vmatmul.f32.gmra.mxu0 %v943
    %v1247 = vpop.f32.mrf.mxu0
    %v1248 = vadd.f32 0.0, %v1247
    %1249 = vdwg.mxu0
    %v1254 = vrot.slane %v1188, 4
    %v1255 = vrot.slane %v1208, 4
    %v1256 = vrot.slane %v1228, 4
    %v1257 = vrot.slane %v1248, 4
    %v1262 = vadd.f32 %v334, %v1254
    %v1263 = vadd.f32 %v357, %v1255
    %v1264 = vadd.f32 %v380, %v1256
    %v1265 = vadd.f32 %v403, %v1257
    %v1266 = vxor.u32 %v1262, 2147483648
    %v1267 = vxor.u32 %v1263, 2147483648
    %v1268 = vxor.u32 %v1264, 2147483648
    %v1269 = vmul.f32 %v1266, 1.442695
    %v1270 = vpow.pop %v1269
    %v1271 = vmul.f32 %v1267, 1.442695
    %v1272 = vpow.pop %v1271
    %v1273 = vmul.f32 %v1268, 1.442695
    %v1274 = vpow.pop %v1273
    %v1275 = vadd.f32 %v1270, 1.0
    %v1276 = vadd.f32 %v1272, 1.0
    %v1277 = vadd.f32 %v1274, 1.0
    %v1278 = vrcp.pop %v1275
    %v1279 = vmul.f32 %v1275, %v1278
    %v1280 = vsub.f32 1.0, %v1279
    %v1281 = vmul.f32 %v1278, %v1280
    %v1282 = vadd.f32 %v1278, %v1281
    %vm1283 = vweird.f32 %v1275
    %vm1284 = vweird.f32 %v1278
    %vm1285 = vmor %vm1283, %vm1284
    %v1286 = vsel %vm1285, %v1278, %v1282
    %v1287 = vand.u32 2147483647, %v1275
    %vm1288 = vcmp.eq.f32.partialorder %v1287, 8.507059e+37
    %v1289 = vand.u32 %v1275, 2147483648
    %v1290 = vor.u32 1.1754944e-38, %v1289
    %v1291 = vsel %vm1288, %v1290, %v1286
    %v1292 = vmul.f32 1.0, %v1291
    %v1293 = vrcp.pop %v1276
    %v1294 = vmul.f32 %v1276, %v1293
    %v1295 = vsub.f32 1.0, %v1294
    %v1296 = vmul.f32 %v1293, %v1295
    %v1297 = vadd.f32 %v1293, %v1296
    %vm1298 = vweird.f32 %v1276
    %vm1299 = vweird.f32 %v1293
    %vm1300 = vmor %vm1298, %vm1299
    %v1301 = vsel %vm1300, %v1293, %v1297
    %v1302 = vand.u32 2147483647, %v1276
    %vm1303 = vcmp.eq.f32.partialorder %v1302, 8.507059e+37
    %v1304 = vand.u32 %v1276, 2147483648
    %v1305 = vor.u32 1.1754944e-38, %v1304
    %v1306 = vsel %vm1303, %v1305, %v1301
    %v1307 = vmul.f32 1.0, %v1306
    %v1308 = vrcp.pop %v1277
    %v1309 = vmul.f32 %v1277, %v1308
    %v1310 = vsub.f32 1.0, %v1309
    %v1311 = vmul.f32 %v1308, %v1310
    %v1312 = vadd.f32 %v1308, %v1311
    %vm1313 = vweird.f32 %v1277
    %vm1314 = vweird.f32 %v1308
    %vm1315 = vmor %vm1313, %vm1314
    %v1316 = vsel %vm1315, %v1308, %v1312
    %v1317 = vand.u32 2147483647, %v1277
    %vm1318 = vcmp.eq.f32.partialorder %v1317, 8.507059e+37
    %v1319 = vand.u32 %v1277, 2147483648
    %v1320 = vor.u32 1.1754944e-38, %v1319
    %v1321 = vsel %vm1318, %v1320, %v1316
    %v1322 = vmul.f32 1.0, %v1321
    %v1323 = vtanh.pop %v1265
    %v1325 = vrot.slane %v937, 6
    %v1327 = vmul.f32 %v1307, %v1325
    %v1328 = vmul.f32 %v1292, %v1323
    %v1329 = vadd.f32 %v1327, %v1328
    %v1330 = vtanh.pop %v1329
    %v1331 = vmul.f32 %v1322, %v1330
    %v1333 = vrot.slane %v1169, 4
    %v1335 = vrot.slane %v1331, 4
    %v1336 = vrot.slane %v1333, 4
    %1339 = vmatpush.msra.mxu0 %v207
    %1340 = vmatpush.msra.mxu0 %v203
    %1341 = vmatpush.msra.mxu0 %v199
    %1342 = vmatpush.msra.mxu0 %v195
    %1343 = vmatpush.msra.mxu0 %v191
    %1344 = vmatpush.msra.mxu0 %v187
    %1345 = vmatpush.msra.mxu0 %v183
    %1346 = vmatpush.msra.mxu0 %v179
    %1347 = vmatpush.msra.mxu0 %v175
    %1348 = vmatpush.msra.mxu0 %v171
    %1349 = vmatpush.msra.mxu0 %v167
    %1350 = vmatpush.msra.mxu0 %v163
    %1351 = vmatpush.msra.mxu0 %v159
    %1352 = vmatpush.msra.mxu0 %v155
    %1353 = vmatpush.msra.mxu0 %v151
    %1354 = vmatpush.msra.mxu0 %v147
    %1355 = vmatmul.f32.gmra.mxu0 %v1335
    %v1356 = vpop.f32.mrf.mxu0
    %v1357 = vadd.f32 %v277, %v1356
    %1358 = vdwg.mxu0
    %1359 = vmatpush.msra.mxu0 %v271
    %1360 = vmatpush.msra.mxu0 %v267
    %1361 = vmatpush.msra.mxu0 %v263
    %1362 = vmatpush.msra.mxu0 %v259
    %1363 = vmatpush.msra.mxu0 %v255
    %1364 = vmatpush.msra.mxu0 %v251
    %1365 = vmatpush.msra.mxu0 %v247
    %1366 = vmatpush.msra.mxu0 %v243
    %1367 = vmatpush.msra.mxu0 %v239
    %1368 = vmatpush.msra.mxu0 %v235
    %1369 = vmatpush.msra.mxu0 %v231
    %1370 = vmatpush.msra.mxu0 %v227
    %1371 = vmatpush.msra.mxu0 %v223
    %1372 = vmatpush.msra.mxu0 %v219
    %1373 = vmatpush.msra.mxu0 %v215
    %1374 = vmatpush.msra.mxu0 %v211
    %1375 = vmatmul.f32.gmra.mxu0 %v1336
    %v1376 = vpop.f32.mrf.mxu0
    %v1377 = vadd.f32 %v1357, %v1376
    %1378 = vdwg.mxu0
    %1379 = vmatpush.msra.mxu0 %v208
    %1380 = vmatpush.msra.mxu0 %v204
    %1381 = vmatpush.msra.mxu0 %v200
    %1382 = vmatpush.msra.mxu0 %v196
    %1383 = vmatpush.msra.mxu0 %v192
    %1384 = vmatpush.msra.mxu0 %v188
    %1385 = vmatpush.msra.mxu0 %v184
    %1386 = vmatpush.msra.mxu0 %v180
    %1387 = vmatpush.msra.mxu0 %v176
    %1388 = vmatpush.msra.mxu0 %v172
    %1389 = vmatpush.msra.mxu0 %v168
    %1390 = vmatpush.msra.mxu0 %v164
    %1391 = vmatpush.msra.mxu0 %v160
    %1392 = vmatpush.msra.mxu0 %v156
    %1393 = vmatpush.msra.mxu0 %v152
    %1394 = vmatpush.msra.mxu0 %v148
    %1395 = vmatmul.f32.gmra.mxu0 %v1335
    %v1396 = vpop.f32.mrf.mxu0
    %v1397 = vadd.f32 %v278, %v1396
    %1398 = vdwg.mxu0
    %1399 = vmatpush.msra.mxu0 %v272
    %1400 = vmatpush.msra.mxu0 %v268
    %1401 = vmatpush.msra.mxu0 %v264
    %1402 = vmatpush.msra.mxu0 %v260
    %1403 = vmatpush.msra.mxu0 %v256
    %1404 = vmatpush.msra.mxu0 %v252
    %1405 = vmatpush.msra.mxu0 %v248
    %1406 = vmatpush.msra.mxu0 %v244
    %1407 = vmatpush.msra.mxu0 %v240
    %1408 = vmatpush.msra.mxu0 %v236
    %1409 = vmatpush.msra.mxu0 %v232
    %1410 = vmatpush.msra.mxu0 %v228
    %1411 = vmatpush.msra.mxu0 %v224
    %1412 = vmatpush.msra.mxu0 %v220
    %1413 = vmatpush.msra.mxu0 %v216
    %1414 = vmatpush.msra.mxu0 %v212
    %1415 = vmatmul.f32.gmra.mxu0 %v1336
    %v1416 = vpop.f32.mrf.mxu0
    %v1417 = vadd.f32 %v1397, %v1416
    %1418 = vdwg.mxu0
    %1419 = vmatpush.msra.mxu0 %v209
    %1420 = vmatpush.msra.mxu0 %v205
    %1421 = vmatpush.msra.mxu0 %v201
    %1422 = vmatpush.msra.mxu0 %v197
    %1423 = vmatpush.msra.mxu0 %v193
    %1424 = vmatpush.msra.mxu0 %v189
    %1425 = vmatpush.msra.mxu0 %v185
    %1426 = vmatpush.msra.mxu0 %v181
    %1427 = vmatpush.msra.mxu0 %v177
    %1428 = vmatpush.msra.mxu0 %v173
    %1429 = vmatpush.msra.mxu0 %v169
    %1430 = vmatpush.msra.mxu0 %v165
    %1431 = vmatpush.msra.mxu0 %v161
    %1432 = vmatpush.msra.mxu0 %v157
    %1433 = vmatpush.msra.mxu0 %v153
    %1434 = vmatpush.msra.mxu0 %v149
    %1435 = vmatmul.f32.gmra.mxu0 %v1335
    %v1436 = vpop.f32.mrf.mxu0
    %v1437 = vadd.f32 %v279, %v1436
    %1438 = vdwg.mxu0
    %1439 = vmatpush.msra.mxu0 %v273
    %1440 = vmatpush.msra.mxu0 %v269
    %1441 = vmatpush.msra.mxu0 %v265
    %1442 = vmatpush.msra.mxu0 %v261
    %1443 = vmatpush.msra.mxu0 %v257
    %1444 = vmatpush.msra.mxu0 %v253
    %1445 = vmatpush.msra.mxu0 %v249
    %1446 = vmatpush.msra.mxu0 %v245
    %1447 = vmatpush.msra.mxu0 %v241
    %1448 = vmatpush.msra.mxu0 %v237
    %1449 = vmatpush.msra.mxu0 %v233
    %1450 = vmatpush.msra.mxu0 %v229
    %1451 = vmatpush.msra.mxu0 %v225
    %1452 = vmatpush.msra.mxu0 %v221
    %1453 = vmatpush.msra.mxu0 %v217
    %1454 = vmatpush.msra.mxu0 %v213
    %1455 = vmatmul.f32.gmra.mxu0 %v1336
    %v1456 = vpop.f32.mrf.mxu0
    %v1457 = vadd.f32 %v1437, %v1456
    %1458 = vdwg.mxu0
    %1459 = vmatpush.msra.mxu0 %v210
    %1460 = vmatpush.msra.mxu0 %v206
    %1461 = vmatpush.msra.mxu0 %v202
    %1462 = vmatpush.msra.mxu0 %v198
    %1463 = vmatpush.msra.mxu0 %v194
    %1464 = vmatpush.msra.mxu0 %v190
    %1465 = vmatpush.msra.mxu0 %v186
    %1466 = vmatpush.msra.mxu0 %v182
    %1467 = vmatpush.msra.mxu0 %v178
    %1468 = vmatpush.msra.mxu0 %v174
    %1469 = vmatpush.msra.mxu0 %v170
    %1470 = vmatpush.msra.mxu0 %v166
    %1471 = vmatpush.msra.mxu0 %v162
    %1472 = vmatpush.msra.mxu0 %v158
    %1473 = vmatpush.msra.mxu0 %v154
    %1474 = vmatpush.msra.mxu0 %v150
    %1475 = vmatmul.f32.gmra.mxu0 %v1335
    %v1476 = vpop.f32.mrf.mxu0
    %v1477 = vadd.f32 %v280, %v1476
    %1478 = vdwg.mxu0
    %1479 = vmatpush.msra.mxu0 %v274
    %1480 = vmatpush.msra.mxu0 %v270
    %1481 = vmatpush.msra.mxu0 %v266
    %1482 = vmatpush.msra.mxu0 %v262
    %1483 = vmatpush.msra.mxu0 %v258
    %1484 = vmatpush.msra.mxu0 %v254
    %1485 = vmatpush.msra.mxu0 %v250
    %1486 = vmatpush.msra.mxu0 %v246
    %1487 = vmatpush.msra.mxu0 %v242
    %1488 = vmatpush.msra.mxu0 %v238
    %1489 = vmatpush.msra.mxu0 %v234
    %1490 = vmatpush.msra.mxu0 %v230
    %1491 = vmatpush.msra.mxu0 %v226
    %1492 = vmatpush.msra.mxu0 %v222
    %1493 = vmatpush.msra.mxu0 %v218
    %1494 = vmatpush.msra.mxu0 %v214
    %1495 = vmatmul.f32.gmra.mxu0 %v1336
    %v1496 = vpop.f32.mrf.mxu0
    %v1497 = vadd.f32 %v1477, %v1496
    %1498 = vdwg.mxu0
    %v1499 = vxor.u32 %v1377, 2147483648
    %v1500 = vxor.u32 %v1417, 2147483648
    %v1501 = vxor.u32 %v1457, 2147483648
    %v1502 = vmul.f32 %v1499, 1.442695
    %v1503 = vpow.pop %v1502
    %v1504 = vmul.f32 %v1500, 1.442695
    %v1505 = vpow.pop %v1504
    %v1506 = vmul.f32 %v1501, 1.442695
    %v1507 = vpow.pop %v1506
    %v1508 = vadd.f32 %v1503, 1.0
    %v1509 = vadd.f32 %v1505, 1.0
    %v1510 = vadd.f32 %v1507, 1.0
    %v1511 = vrcp.pop %v1508
    %v1512 = vmul.f32 %v1508, %v1511
    %v1513 = vsub.f32 1.0, %v1512
    %v1514 = vmul.f32 %v1511, %v1513
    %v1515 = vadd.f32 %v1511, %v1514
    %vm1516 = vweird.f32 %v1508
    %vm1517 = vweird.f32 %v1511
    %vm1518 = vmor %vm1516, %vm1517
    %v1519 = vsel %vm1518, %v1511, %v1515
    %v1520 = vand.u32 2147483647, %v1508
    %vm1521 = vcmp.eq.f32.partialorder %v1520, 8.507059e+37
    %v1522 = vand.u32 %v1508, 2147483648
    %v1523 = vor.u32 1.1754944e-38, %v1522
    %v1524 = vsel %vm1521, %v1523, %v1519
    %v1525 = vmul.f32 1.0, %v1524
    %v1526 = vrcp.pop %v1509
    %v1527 = vmul.f32 %v1509, %v1526
    %v1528 = vsub.f32 1.0, %v1527
    %v1529 = vmul.f32 %v1526, %v1528
    %v1530 = vadd.f32 %v1526, %v1529
    %vm1531 = vweird.f32 %v1509
    %vm1532 = vweird.f32 %v1526
    %vm1533 = vmor %vm1531, %vm1532
    %v1534 = vsel %vm1533, %v1526, %v1530
    %v1535 = vand.u32 2147483647, %v1509
    %vm1536 = vcmp.eq.f32.partialorder %v1535, 8.507059e+37
    %v1537 = vand.u32 %v1509, 2147483648
    %v1538 = vor.u32 1.1754944e-38, %v1537
    %v1539 = vsel %vm1536, %v1538, %v1534
    %v1540 = vmul.f32 1.0, %v1539
    %v1541 = vrcp.pop %v1510
    %v1542 = vmul.f32 %v1510, %v1541
    %v1543 = vsub.f32 1.0, %v1542
    %v1544 = vmul.f32 %v1541, %v1543
    %v1545 = vadd.f32 %v1541, %v1544
    %vm1546 = vweird.f32 %v1510
    %vm1547 = vweird.f32 %v1541
    %vm1548 = vmor %vm1546, %vm1547
    %v1549 = vsel %vm1548, %v1541, %v1545
    %v1550 = vand.u32 2147483647, %v1510
    %vm1551 = vcmp.eq.f32.partialorder %v1550, 8.507059e+37
    %v1552 = vand.u32 %v1510, 2147483648
    %v1553 = vor.u32 1.1754944e-38, %v1552
    %v1554 = vsel %vm1551, %v1553, %v1549
    %v1555 = vmul.f32 1.0, %v1554
    %v1556 = vtanh.pop %v1497
    %v1557 = vmul.f32 %v1540, %v1167
    %v1558 = vmul.f32 %v1525, %v1556
    %v1559 = vadd.f32 %v1557, %v1558
    %v1560 = vtanh.pop %v1559
    %v1561 = vmul.f32 %v1555, %v1560
    %1562 = vmatpush.msra.mxu0 %v142
    %1563 = vmatpush.msra.mxu0 %v138
    %1564 = vmatpush.msra.mxu0 %v134
    %1565 = vmatpush.msra.mxu0 %v130
    %1566 = vmatpush.msra.mxu0 %v126
    %1567 = vmatpush.msra.mxu0 %v122
    %1568 = vmatpush.msra.mxu0 %v118
    %1569 = vmatpush.msra.mxu0 %v114
    %1570 = vmatpush.msra.mxu0 %v110
    %1571 = vmatpush.msra.mxu0 %v106
    %1572 = vmatpush.msra.mxu0 %v102
    %1573 = vmatpush.msra.mxu0 %v98
    %1574 = vmatpush.msra.mxu0 %v94
    %1575 = vmatpush.msra.mxu0 %v90
    %1576 = vmatpush.msra.mxu0 %v86
    %1577 = vmatpush.msra.mxu0 %v82
    %1578 = vmatmul.f32.gmra.mxu0 %v1335
    %v1579 = vpop.f32.mrf.mxu0
    %v1580 = vadd.f32 0.0, %v1579
    %1581 = vdwg.mxu0
    %1582 = vmatpush.msra.mxu0 %v143
    %1583 = vmatpush.msra.mxu0 %v139
    %1584 = vmatpush.msra.mxu0 %v135
    %1585 = vmatpush.msra.mxu0 %v131
    %1586 = vmatpush.msra.mxu0 %v127
    %1587 = vmatpush.msra.mxu0 %v123
    %1588 = vmatpush.msra.mxu0 %v119
    %1589 = vmatpush.msra.mxu0 %v115
    %1590 = vmatpush.msra.mxu0 %v111
    %1591 = vmatpush.msra.mxu0 %v107
    %1592 = vmatpush.msra.mxu0 %v103
    %1593 = vmatpush.msra.mxu0 %v99
    %1594 = vmatpush.msra.mxu0 %v95
    %1595 = vmatpush.msra.mxu0 %v91
    %1596 = vmatpush.msra.mxu0 %v87
    %1597 = vmatpush.msra.mxu0 %v83
    %1598 = vmatmul.f32.gmra.mxu0 %v1335
    %v1599 = vpop.f32.mrf.mxu0
    %v1600 = vadd.f32 0.0, %v1599
    %1601 = vdwg.mxu0
    %1602 = vmatpush.msra.mxu0 %v144
    %1603 = vmatpush.msra.mxu0 %v140
    %1604 = vmatpush.msra.mxu0 %v136
    %1605 = vmatpush.msra.mxu0 %v132
    %1606 = vmatpush.msra.mxu0 %v128
    %1607 = vmatpush.msra.mxu0 %v124
    %1608 = vmatpush.msra.mxu0 %v120
    %1609 = vmatpush.msra.mxu0 %v116
    %1610 = vmatpush.msra.mxu0 %v112
    %1611 = vmatpush.msra.mxu0 %v108
    %1612 = vmatpush.msra.mxu0 %v104
    %1613 = vmatpush.msra.mxu0 %v100
    %1614 = vmatpush.msra.mxu0 %v96
    %1615 = vmatpush.msra.mxu0 %v92
    %1616 = vmatpush.msra.mxu0 %v88
    %1617 = vmatpush.msra.mxu0 %v84
    %1618 = vmatmul.f32.gmra.mxu0 %v1335
    %v1619 = vpop.f32.mrf.mxu0
    %v1620 = vadd.f32 0.0, %v1619
    %1621 = vdwg.mxu0
    %1622 = vmatpush.msra.mxu0 %v145
    %1623 = vmatpush.msra.mxu0 %v141
    %1624 = vmatpush.msra.mxu0 %v137
    %1625 = vmatpush.msra.mxu0 %v133
    %1626 = vmatpush.msra.mxu0 %v129
    %1627 = vmatpush.msra.mxu0 %v125
    %1628 = vmatpush.msra.mxu0 %v121
    %1629 = vmatpush.msra.mxu0 %v117
    %1630 = vmatpush.msra.mxu0 %v113
    %1631 = vmatpush.msra.mxu0 %v109
    %1632 = vmatpush.msra.mxu0 %v105
    %1633 = vmatpush.msra.mxu0 %v101
    %1634 = vmatpush.msra.mxu0 %v97
    %1635 = vmatpush.msra.mxu0 %v93
    %1636 = vmatpush.msra.mxu0 %v89
    %1637 = vmatpush.msra.mxu0 %v85
    %1638 = vmatmul.f32.gmra.mxu0 %v1335
    %v1639 = vpop.f32.mrf.mxu0
    %v1640 = vadd.f32 0.0, %v1639
    %1641 = vdwg.mxu0
    %v1646 = vrot.slane %v1580, 2
    %v1647 = vrot.slane %v1600, 2
    %v1648 = vrot.slane %v1620, 2
    %v1649 = vrot.slane %v1640, 2
    %v1654 = vadd.f32 %v334, %v1646
    %v1655 = vadd.f32 %v357, %v1647
    %v1656 = vadd.f32 %v380, %v1648
    %v1657 = vadd.f32 %v403, %v1649
    %v1658 = vxor.u32 %v1654, 2147483648
    %v1659 = vxor.u32 %v1655, 2147483648
    %v1660 = vxor.u32 %v1656, 2147483648
    %v1661 = vmul.f32 %v1658, 1.442695
    %v1662 = vpow.pop %v1661
    %v1663 = vmul.f32 %v1659, 1.442695
    %v1664 = vpow.pop %v1663
    %v1665 = vmul.f32 %v1660, 1.442695
    %v1666 = vpow.pop %v1665
    %v1667 = vadd.f32 %v1662, 1.0
    %v1668 = vadd.f32 %v1664, 1.0
    %v1669 = vadd.f32 %v1666, 1.0
    %v1670 = vrcp.pop %v1667
    %v1671 = vmul.f32 %v1667, %v1670
    %v1672 = vsub.f32 1.0, %v1671
    %v1673 = vmul.f32 %v1670, %v1672
    %v1674 = vadd.f32 %v1670, %v1673
    %vm1675 = vweird.f32 %v1667
    %vm1676 = vweird.f32 %v1670
    %vm1677 = vmor %vm1675, %vm1676
    %v1678 = vsel %vm1677, %v1670, %v1674
    %v1679 = vand.u32 2147483647, %v1667
    %vm1680 = vcmp.eq.f32.partialorder %v1679, 8.507059e+37
    %v1681 = vand.u32 %v1667, 2147483648
    %v1682 = vor.u32 1.1754944e-38, %v1681
    %v1683 = vsel %vm1680, %v1682, %v1678
    %v1684 = vmul.f32 1.0, %v1683
    %v1685 = vrcp.pop %v1668
    %v1686 = vmul.f32 %v1668, %v1685
    %v1687 = vsub.f32 1.0, %v1686
    %v1688 = vmul.f32 %v1685, %v1687
    %v1689 = vadd.f32 %v1685, %v1688
    %vm1690 = vweird.f32 %v1668
    %vm1691 = vweird.f32 %v1685
    %vm1692 = vmor %vm1690, %vm1691
    %v1693 = vsel %vm1692, %v1685, %v1689
    %v1694 = vand.u32 2147483647, %v1668
    %vm1695 = vcmp.eq.f32.partialorder %v1694, 8.507059e+37
    %v1696 = vand.u32 %v1668, 2147483648
    %v1697 = vor.u32 1.1754944e-38, %v1696
    %v1698 = vsel %vm1695, %v1697, %v1693
    %v1699 = vmul.f32 1.0, %v1698
    %v1700 = vrcp.pop %v1669
    %v1701 = vmul.f32 %v1669, %v1700
    %v1702 = vsub.f32 1.0, %v1701
    %v1703 = vmul.f32 %v1700, %v1702
    %v1704 = vadd.f32 %v1700, %v1703
    %vm1705 = vweird.f32 %v1669
    %vm1706 = vweird.f32 %v1700
    %vm1707 = vmor %vm1705, %vm1706
    %v1708 = vsel %vm1707, %v1700, %v1704
    %v1709 = vand.u32 2147483647, %v1669
    %vm1710 = vcmp.eq.f32.partialorder %v1709, 8.507059e+37
    %v1711 = vand.u32 %v1669, 2147483648
    %v1712 = vor.u32 1.1754944e-38, %v1711
    %v1713 = vsel %vm1710, %v1712, %v1708
    %v1714 = vmul.f32 1.0, %v1713
    %v1715 = vtanh.pop %v1657
    %v1717 = vrot.slane %v1329, 6
    %v1719 = vmul.f32 %v1699, %v1717
    %v1720 = vmul.f32 %v1684, %v1715
    %v1721 = vadd.f32 %v1719, %v1720
    %v1722 = vtanh.pop %v1721
    %v1723 = vmul.f32 %v1714, %v1722
    %v1725 = vrot.slane %v1561, 2
    %v1727 = vrot.slane %v1723, 6
    %v1728 = vrot.slane %v1725, 6
    %1731 = vmatpush.msra.mxu0 %v207
    %1732 = vmatpush.msra.mxu0 %v203
    %1733 = vmatpush.msra.mxu0 %v199
    %1734 = vmatpush.msra.mxu0 %v195
    %1735 = vmatpush.msra.mxu0 %v191
    %1736 = vmatpush.msra.mxu0 %v187
    %1737 = vmatpush.msra.mxu0 %v183
    %1738 = vmatpush.msra.mxu0 %v179
    %1739 = vmatpush.msra.mxu0 %v175
    %1740 = vmatpush.msra.mxu0 %v171
    %1741 = vmatpush.msra.mxu0 %v167
    %1742 = vmatpush.msra.mxu0 %v163
    %1743 = vmatpush.msra.mxu0 %v159
    %1744 = vmatpush.msra.mxu0 %v155
    %1745 = vmatpush.msra.mxu0 %v151
    %1746 = vmatpush.msra.mxu0 %v147
    %1747 = vmatmul.f32.gmra.mxu0 %v1727
    %v1748 = vpop.f32.mrf.mxu0
    %v1749 = vadd.f32 %v277, %v1748
    %1750 = vdwg.mxu0
    %1751 = vmatpush.msra.mxu0 %v271
    %1752 = vmatpush.msra.mxu0 %v267
    %1753 = vmatpush.msra.mxu0 %v263
    %1754 = vmatpush.msra.mxu0 %v259
    %1755 = vmatpush.msra.mxu0 %v255
    %1756 = vmatpush.msra.mxu0 %v251
    %1757 = vmatpush.msra.mxu0 %v247
    %1758 = vmatpush.msra.mxu0 %v243
    %1759 = vmatpush.msra.mxu0 %v239
    %1760 = vmatpush.msra.mxu0 %v235
    %1761 = vmatpush.msra.mxu0 %v231
    %1762 = vmatpush.msra.mxu0 %v227
    %1763 = vmatpush.msra.mxu0 %v223
    %1764 = vmatpush.msra.mxu0 %v219
    %1765 = vmatpush.msra.mxu0 %v215
    %1766 = vmatpush.msra.mxu0 %v211
    %1767 = vmatmul.f32.gmra.mxu0 %v1728
    %v1768 = vpop.f32.mrf.mxu0
    %v1769 = vadd.f32 %v1749, %v1768
    %1770 = vdwg.mxu0
    %1771 = vmatpush.msra.mxu0 %v208
    %1772 = vmatpush.msra.mxu0 %v204
    %1773 = vmatpush.msra.mxu0 %v200
    %1774 = vmatpush.msra.mxu0 %v196
    %1775 = vmatpush.msra.mxu0 %v192
    %1776 = vmatpush.msra.mxu0 %v188
    %1777 = vmatpush.msra.mxu0 %v184
    %1778 = vmatpush.msra.mxu0 %v180
    %1779 = vmatpush.msra.mxu0 %v176
    %1780 = vmatpush.msra.mxu0 %v172
    %1781 = vmatpush.msra.mxu0 %v168
    %1782 = vmatpush.msra.mxu0 %v164
    %1783 = vmatpush.msra.mxu0 %v160
    %1784 = vmatpush.msra.mxu0 %v156
    %1785 = vmatpush.msra.mxu0 %v152
    %1786 = vmatpush.msra.mxu0 %v148
    %1787 = vmatmul.f32.gmra.mxu0 %v1727
    %v1788 = vpop.f32.mrf.mxu0
    %v1789 = vadd.f32 %v278, %v1788
    %1790 = vdwg.mxu0
    %1791 = vmatpush.msra.mxu0 %v272
    %1792 = vmatpush.msra.mxu0 %v268
    %1793 = vmatpush.msra.mxu0 %v264
    %1794 = vmatpush.msra.mxu0 %v260
    %1795 = vmatpush.msra.mxu0 %v256
    %1796 = vmatpush.msra.mxu0 %v252
    %1797 = vmatpush.msra.mxu0 %v248
    %1798 = vmatpush.msra.mxu0 %v244
    %1799 = vmatpush.msra.mxu0 %v240
    %1800 = vmatpush.msra.mxu0 %v236
    %1801 = vmatpush.msra.mxu0 %v232
    %1802 = vmatpush.msra.mxu0 %v228
    %1803 = vmatpush.msra.mxu0 %v224
    %1804 = vmatpush.msra.mxu0 %v220
    %1805 = vmatpush.msra.mxu0 %v216
    %1806 = vmatpush.msra.mxu0 %v212
    %1807 = vmatmul.f32.gmra.mxu0 %v1728
    %v1808 = vpop.f32.mrf.mxu0
    %v1809 = vadd.f32 %v1789, %v1808
    %1810 = vdwg.mxu0
    %1811 = vmatpush.msra.mxu0 %v209
    %1812 = vmatpush.msra.mxu0 %v205
    %1813 = vmatpush.msra.mxu0 %v201
    %1814 = vmatpush.msra.mxu0 %v197
    %1815 = vmatpush.msra.mxu0 %v193
    %1816 = vmatpush.msra.mxu0 %v189
    %1817 = vmatpush.msra.mxu0 %v185
    %1818 = vmatpush.msra.mxu0 %v181
    %1819 = vmatpush.msra.mxu0 %v177
    %1820 = vmatpush.msra.mxu0 %v173
    %1821 = vmatpush.msra.mxu0 %v169
    %1822 = vmatpush.msra.mxu0 %v165
    %1823 = vmatpush.msra.mxu0 %v161
    %1824 = vmatpush.msra.mxu0 %v157
    %1825 = vmatpush.msra.mxu0 %v153
    %1826 = vmatpush.msra.mxu0 %v149
    %1827 = vmatmul.f32.gmra.mxu0 %v1727
    %v1828 = vpop.f32.mrf.mxu0
    %v1829 = vadd.f32 %v279, %v1828
    %1830 = vdwg.mxu0
    %1831 = vmatpush.msra.mxu0 %v273
    %1832 = vmatpush.msra.mxu0 %v269
    %1833 = vmatpush.msra.mxu0 %v265
    %1834 = vmatpush.msra.mxu0 %v261
    %1835 = vmatpush.msra.mxu0 %v257
    %1836 = vmatpush.msra.mxu0 %v253
    %1837 = vmatpush.msra.mxu0 %v249
    %1838 = vmatpush.msra.mxu0 %v245
    %1839 = vmatpush.msra.mxu0 %v241
    %1840 = vmatpush.msra.mxu0 %v237
    %1841 = vmatpush.msra.mxu0 %v233
    %1842 = vmatpush.msra.mxu0 %v229
    %1843 = vmatpush.msra.mxu0 %v225
    %1844 = vmatpush.msra.mxu0 %v221
    %1845 = vmatpush.msra.mxu0 %v217
    %1846 = vmatpush.msra.mxu0 %v213
    %1847 = vmatmul.f32.gmra.mxu0 %v1728
    %v1848 = vpop.f32.mrf.mxu0
    %v1849 = vadd.f32 %v1829, %v1848
    %1850 = vdwg.mxu0
    %1851 = vmatpush.msra.mxu0 %v210
    %1852 = vmatpush.msra.mxu0 %v206
    %1853 = vmatpush.msra.mxu0 %v202
    %1854 = vmatpush.msra.mxu0 %v198
    %1855 = vmatpush.msra.mxu0 %v194
    %1856 = vmatpush.msra.mxu0 %v190
    %1857 = vmatpush.msra.mxu0 %v186
    %1858 = vmatpush.msra.mxu0 %v182
    %1859 = vmatpush.msra.mxu0 %v178
    %1860 = vmatpush.msra.mxu0 %v174
    %1861 = vmatpush.msra.mxu0 %v170
    %1862 = vmatpush.msra.mxu0 %v166
    %1863 = vmatpush.msra.mxu0 %v162
    %1864 = vmatpush.msra.mxu0 %v158
    %1865 = vmatpush.msra.mxu0 %v154
    %1866 = vmatpush.msra.mxu0 %v150
    %1867 = vmatmul.f32.gmra.mxu0 %v1727
    %v1868 = vpop.f32.mrf.mxu0
    %v1869 = vadd.f32 %v280, %v1868
    %1870 = vdwg.mxu0
    %1871 = vmatpush.msra.mxu0 %v274
    %1872 = vmatpush.msra.mxu0 %v270
    %1873 = vmatpush.msra.mxu0 %v266
    %1874 = vmatpush.msra.mxu0 %v262
    %1875 = vmatpush.msra.mxu0 %v258
    %1876 = vmatpush.msra.mxu0 %v254
    %1877 = vmatpush.msra.mxu0 %v250
    %1878 = vmatpush.msra.mxu0 %v246
    %1879 = vmatpush.msra.mxu0 %v242
    %1880 = vmatpush.msra.mxu0 %v238
    %1881 = vmatpush.msra.mxu0 %v234
    %1882 = vmatpush.msra.mxu0 %v230
    %1883 = vmatpush.msra.mxu0 %v226
    %1884 = vmatpush.msra.mxu0 %v222
    %1885 = vmatpush.msra.mxu0 %v218
    %1886 = vmatpush.msra.mxu0 %v214
    %1887 = vmatmul.f32.gmra.mxu0 %v1728
    %v1888 = vpop.f32.mrf.mxu0
    %v1889 = vadd.f32 %v1869, %v1888
    %1890 = vdwg.mxu0
    %v1891 = vxor.u32 %v1769, 2147483648
    %v1892 = vxor.u32 %v1809, 2147483648
    %v1893 = vxor.u32 %v1849, 2147483648
    %v1894 = vmul.f32 %v1891, 1.442695
    %v1895 = vpow.pop %v1894
    %v1896 = vmul.f32 %v1892, 1.442695
    %v1897 = vpow.pop %v1896
    %v1898 = vmul.f32 %v1893, 1.442695
    %v1899 = vpow.pop %v1898
    %v1900 = vadd.f32 %v1895, 1.0
    %v1901 = vadd.f32 %v1897, 1.0
    %v1902 = vadd.f32 %v1899, 1.0
    %v1903 = vrcp.pop %v1900
    %v1904 = vmul.f32 %v1900, %v1903
    %v1905 = vsub.f32 1.0, %v1904
    %v1906 = vmul.f32 %v1903, %v1905
    %v1907 = vadd.f32 %v1903, %v1906
    %vm1908 = vweird.f32 %v1900
    %vm1909 = vweird.f32 %v1903
    %vm1910 = vmor %vm1908, %vm1909
    %v1911 = vsel %vm1910, %v1903, %v1907
    %v1912 = vand.u32 2147483647, %v1900
    %vm1913 = vcmp.eq.f32.partialorder %v1912, 8.507059e+37
    %v1914 = vand.u32 %v1900, 2147483648
    %v1915 = vor.u32 1.1754944e-38, %v1914
    %v1916 = vsel %vm1913, %v1915, %v1911
    %v1917 = vmul.f32 1.0, %v1916
    %v1918 = vrcp.pop %v1901
    %v1919 = vmul.f32 %v1901, %v1918
    %v1920 = vsub.f32 1.0, %v1919
    %v1921 = vmul.f32 %v1918, %v1920
    %v1922 = vadd.f32 %v1918, %v1921
    %vm1923 = vweird.f32 %v1901
    %vm1924 = vweird.f32 %v1918
    %vm1925 = vmor %vm1923, %vm1924
    %v1926 = vsel %vm1925, %v1918, %v1922
    %v1927 = vand.u32 2147483647, %v1901
    %vm1928 = vcmp.eq.f32.partialorder %v1927, 8.507059e+37
    %v1929 = vand.u32 %v1901, 2147483648
    %v1930 = vor.u32 1.1754944e-38, %v1929
    %v1931 = vsel %vm1928, %v1930, %v1926
    %v1932 = vmul.f32 1.0, %v1931
    %v1933 = vrcp.pop %v1902
    %v1934 = vmul.f32 %v1902, %v1933
    %v1935 = vsub.f32 1.0, %v1934
    %v1936 = vmul.f32 %v1933, %v1935
    %v1937 = vadd.f32 %v1933, %v1936
    %vm1938 = vweird.f32 %v1902
    %vm1939 = vweird.f32 %v1933
    %vm1940 = vmor %vm1938, %vm1939
    %v1941 = vsel %vm1940, %v1933, %v1937
    %v1942 = vand.u32 2147483647, %v1902
    %vm1943 = vcmp.eq.f32.partialorder %v1942, 8.507059e+37
    %v1944 = vand.u32 %v1902, 2147483648
    %v1945 = vor.u32 1.1754944e-38, %v1944
    %v1946 = vsel %vm1943, %v1945, %v1941
    %v1947 = vmul.f32 1.0, %v1946
    %v1948 = vtanh.pop %v1889
    %v1949 = vmul.f32 %v1932, %v1559
    %v1950 = vmul.f32 %v1917, %v1948
    %v1951 = vadd.f32 %v1949, %v1950
    %v1952 = vtanh.pop %v1951
    %v1953 = vmul.f32 %v1947, %v1952
    %1954 = vmatpush.msra.mxu0 %v142
    %1955 = vmatpush.msra.mxu0 %v138
    %1956 = vmatpush.msra.mxu0 %v134
    %1957 = vmatpush.msra.mxu0 %v130
    %1958 = vmatpush.msra.mxu0 %v126
    %1959 = vmatpush.msra.mxu0 %v122
    %1960 = vmatpush.msra.mxu0 %v118
    %1961 = vmatpush.msra.mxu0 %v114
    %1962 = vmatpush.msra.mxu0 %v110
    %1963 = vmatpush.msra.mxu0 %v106
    %1964 = vmatpush.msra.mxu0 %v102
    %1965 = vmatpush.msra.mxu0 %v98
    %1966 = vmatpush.msra.mxu0 %v94
    %1967 = vmatpush.msra.mxu0 %v90
    %1968 = vmatpush.msra.mxu0 %v86
    %1969 = vmatpush.msra.mxu0 %v82
    %1970 = vmatmul.f32.gmra.mxu0 %v1727
    %v1971 = vpop.f32.mrf.mxu0
    %v1972 = vadd.f32 0.0, %v1971
    %1973 = vdwg.mxu0
    %1974 = vmatpush.msra.mxu0 %v143
    %1975 = vmatpush.msra.mxu0 %v139
    %1976 = vmatpush.msra.mxu0 %v135
    %1977 = vmatpush.msra.mxu0 %v131
    %1978 = vmatpush.msra.mxu0 %v127
    %1979 = vmatpush.msra.mxu0 %v123
    %1980 = vmatpush.msra.mxu0 %v119
    %1981 = vmatpush.msra.mxu0 %v115
    %1982 = vmatpush.msra.mxu0 %v111
    %1983 = vmatpush.msra.mxu0 %v107
    %1984 = vmatpush.msra.mxu0 %v103
    %1985 = vmatpush.msra.mxu0 %v99
    %1986 = vmatpush.msra.mxu0 %v95
    %1987 = vmatpush.msra.mxu0 %v91
    %1988 = vmatpush.msra.mxu0 %v87
    %1989 = vmatpush.msra.mxu0 %v83
    %1990 = vmatmul.f32.gmra.mxu0 %v1727
    %v1991 = vpop.f32.mrf.mxu0
    %v1992 = vadd.f32 0.0, %v1991
    %1993 = vdwg.mxu0
    %1994 = vmatpush.msra.mxu0 %v144
    %1995 = vmatpush.msra.mxu0 %v140
    %1996 = vmatpush.msra.mxu0 %v136
    %1997 = vmatpush.msra.mxu0 %v132
    %1998 = vmatpush.msra.mxu0 %v128
    %1999 = vmatpush.msra.mxu0 %v124
    %2000 = vmatpush.msra.mxu0 %v120
    %2001 = vmatpush.msra.mxu0 %v116
    %2002 = vmatpush.msra.mxu0 %v112
    %2003 = vmatpush.msra.mxu0 %v108
    %2004 = vmatpush.msra.mxu0 %v104
    %2005 = vmatpush.msra.mxu0 %v100
    %2006 = vmatpush.msra.mxu0 %v96
    %2007 = vmatpush.msra.mxu0 %v92
    %2008 = vmatpush.msra.mxu0 %v88
    %2009 = vmatpush.msra.mxu0 %v84
    %2010 = vmatmul.f32.gmra.mxu0 %v1727
    %v2011 = vpop.f32.mrf.mxu0
    %v2012 = vadd.f32 0.0, %v2011
    %2013 = vdwg.mxu0
    %2014 = vmatpush.msra.mxu0 %v145
    %2015 = vmatpush.msra.mxu0 %v141
    %2016 = vmatpush.msra.mxu0 %v137
    %2017 = vmatpush.msra.mxu0 %v133
    %2018 = vmatpush.msra.mxu0 %v129
    %2019 = vmatpush.msra.mxu0 %v125
    %2020 = vmatpush.msra.mxu0 %v121
    %2021 = vmatpush.msra.mxu0 %v117
    %2022 = vmatpush.msra.mxu0 %v113
    %2023 = vmatpush.msra.mxu0 %v109
    %2024 = vmatpush.msra.mxu0 %v105
    %2025 = vmatpush.msra.mxu0 %v101
    %2026 = vmatpush.msra.mxu0 %v97
    %2027 = vmatpush.msra.mxu0 %v93
    %2028 = vmatpush.msra.mxu0 %v89
    %2029 = vmatpush.msra.mxu0 %v85
    %2030 = vmatmul.f32.gmra.mxu0 %v1727
    %v2031 = vpop.f32.mrf.mxu0
    %v2032 = vadd.f32 0.0, %v2031
    %2033 = vdwg.mxu0
    %v2034 = vadd.f32 %v337, %v1972
    %v2035 = vadd.f32 %v360, %v1992
    %v2036 = vadd.f32 %v383, %v2012
    %v2037 = vadd.f32 %v406, %v2032
    %v2038 = vxor.u32 %v2034, 2147483648
    %v2039 = vxor.u32 %v2035, 2147483648
    %v2040 = vxor.u32 %v2036, 2147483648
    %v2041 = vmul.f32 %v2038, 1.442695
    %v2042 = vpow.pop %v2041
    %v2043 = vmul.f32 %v2039, 1.442695
    %v2044 = vpow.pop %v2043
    %v2045 = vmul.f32 %v2040, 1.442695
    %v2046 = vpow.pop %v2045
    %v2047 = vadd.f32 %v2042, 1.0
    %v2048 = vadd.f32 %v2044, 1.0
    %v2049 = vadd.f32 %v2046, 1.0
    %v2050 = vrcp.pop %v2047
    %v2051 = vmul.f32 %v2047, %v2050
    %v2052 = vsub.f32 1.0, %v2051
    %v2053 = vmul.f32 %v2050, %v2052
    %v2054 = vadd.f32 %v2050, %v2053
    %vm2055 = vweird.f32 %v2047
    %vm2056 = vweird.f32 %v2050
    %vm2057 = vmor %vm2055, %vm2056
    %v2058 = vsel %vm2057, %v2050, %v2054
    %v2059 = vand.u32 2147483647, %v2047
    %vm2060 = vcmp.eq.f32.partialorder %v2059, 8.507059e+37
    %v2061 = vand.u32 %v2047, 2147483648
    %v2062 = vor.u32 1.1754944e-38, %v2061
    %v2063 = vsel %vm2060, %v2062, %v2058
    %v2064 = vmul.f32 1.0, %v2063
    %v2065 = vrcp.pop %v2048
    %v2066 = vmul.f32 %v2048, %v2065
    %v2067 = vsub.f32 1.0, %v2066
    %v2068 = vmul.f32 %v2065, %v2067
    %v2069 = vadd.f32 %v2065, %v2068
    %vm2070 = vweird.f32 %v2048
    %vm2071 = vweird.f32 %v2065
    %vm2072 = vmor %vm2070, %vm2071
    %v2073 = vsel %vm2072, %v2065, %v2069
    %v2074 = vand.u32 2147483647, %v2048
    %vm2075 = vcmp.eq.f32.partialorder %v2074, 8.507059e+37
    %v2076 = vand.u32 %v2048, 2147483648
    %v2077 = vor.u32 1.1754944e-38, %v2076
    %v2078 = vsel %vm2075, %v2077, %v2073
    %v2079 = vmul.f32 1.0, %v2078
    %v2080 = vrcp.pop %v2049
    %v2081 = vmul.f32 %v2049, %v2080
    %v2082 = vsub.f32 1.0, %v2081
    %v2083 = vmul.f32 %v2080, %v2082
    %v2084 = vadd.f32 %v2080, %v2083
    %vm2085 = vweird.f32 %v2049
    %vm2086 = vweird.f32 %v2080
    %vm2087 = vmor %vm2085, %vm2086
    %v2088 = vsel %vm2087, %v2080, %v2084
    %v2089 = vand.u32 2147483647, %v2049
    %vm2090 = vcmp.eq.f32.partialorder %v2089, 8.507059e+37
    %v2091 = vand.u32 %v2049, 2147483648
    %v2092 = vor.u32 1.1754944e-38, %v2091
    %v2093 = vsel %vm2090, %v2092, %v2088
    %v2094 = vmul.f32 1.0, %v2093
    %v2095 = vtanh.pop %v2037
    %v2097 = vrot.slane %v1721, 6
    %v2099 = vmul.f32 %v2079, %v2097
    %v2100 = vmul.f32 %v2064, %v2095
    %v2101 = vadd.f32 %v2099, %v2100
    %v2102 = vtanh.pop %v2101
    %v2103 = vmul.f32 %v2094, %v2102
    %2104 = vmatpush.msra.mxu0 %v207
    %2105 = vmatpush.msra.mxu0 %v203
    %2106 = vmatpush.msra.mxu0 %v199
    %2107 = vmatpush.msra.mxu0 %v195
    %2108 = vmatpush.msra.mxu0 %v191
    %2109 = vmatpush.msra.mxu0 %v187
    %2110 = vmatpush.msra.mxu0 %v183
    %2111 = vmatpush.msra.mxu0 %v179
    %2112 = vmatpush.msra.mxu0 %v175
    %2113 = vmatpush.msra.mxu0 %v171
    %2114 = vmatpush.msra.mxu0 %v167
    %2115 = vmatpush.msra.mxu0 %v163
    %2116 = vmatpush.msra.mxu0 %v159
    %2117 = vmatpush.msra.mxu0 %v155
    %2118 = vmatpush.msra.mxu0 %v151
    %2119 = vmatpush.msra.mxu0 %v147
    %2120 = vmatmul.f32.gmra.mxu0 %v2103
    %v2121 = vpop.f32.mrf.mxu0
    %v2122 = vadd.f32 %v277, %v2121
    %2123 = vdwg.mxu0
    %2124 = vmatpush.msra.mxu0 %v271
    %2125 = vmatpush.msra.mxu0 %v267
    %2126 = vmatpush.msra.mxu0 %v263
    %2127 = vmatpush.msra.mxu0 %v259
    %2128 = vmatpush.msra.mxu0 %v255
    %2129 = vmatpush.msra.mxu0 %v251
    %2130 = vmatpush.msra.mxu0 %v247
    %2131 = vmatpush.msra.mxu0 %v243
    %2132 = vmatpush.msra.mxu0 %v239
    %2133 = vmatpush.msra.mxu0 %v235
    %2134 = vmatpush.msra.mxu0 %v231
    %2135 = vmatpush.msra.mxu0 %v227
    %2136 = vmatpush.msra.mxu0 %v223
    %2137 = vmatpush.msra.mxu0 %v219
    %2138 = vmatpush.msra.mxu0 %v215
    %2139 = vmatpush.msra.mxu0 %v211
    %2140 = vmatmul.f32.gmra.mxu0 %v1953
    %v2141 = vpop.f32.mrf.mxu0
    %v2142 = vadd.f32 %v2122, %v2141
    %2143 = vdwg.mxu0
    %2144 = vmatpush.msra.mxu0 %v208
    %2145 = vmatpush.msra.mxu0 %v204
    %2146 = vmatpush.msra.mxu0 %v200
    %2147 = vmatpush.msra.mxu0 %v196
    %2148 = vmatpush.msra.mxu0 %v192
    %2149 = vmatpush.msra.mxu0 %v188
    %2150 = vmatpush.msra.mxu0 %v184
    %2151 = vmatpush.msra.mxu0 %v180
    %2152 = vmatpush.msra.mxu0 %v176
    %2153 = vmatpush.msra.mxu0 %v172
    %2154 = vmatpush.msra.mxu0 %v168
    %2155 = vmatpush.msra.mxu0 %v164
    %2156 = vmatpush.msra.mxu0 %v160
    %2157 = vmatpush.msra.mxu0 %v156
    %2158 = vmatpush.msra.mxu0 %v152
    %2159 = vmatpush.msra.mxu0 %v148
    %2160 = vmatmul.f32.gmra.mxu0 %v2103
    %v2161 = vpop.f32.mrf.mxu0
    %v2162 = vadd.f32 %v278, %v2161
    %2163 = vdwg.mxu0
    %2164 = vmatpush.msra.mxu0 %v272
    %2165 = vmatpush.msra.mxu0 %v268
    %2166 = vmatpush.msra.mxu0 %v264
    %2167 = vmatpush.msra.mxu0 %v260
    %2168 = vmatpush.msra.mxu0 %v256
    %2169 = vmatpush.msra.mxu0 %v252
    %2170 = vmatpush.msra.mxu0 %v248
    %2171 = vmatpush.msra.mxu0 %v244
    %2172 = vmatpush.msra.mxu0 %v240
    %2173 = vmatpush.msra.mxu0 %v236
    %2174 = vmatpush.msra.mxu0 %v232
    %2175 = vmatpush.msra.mxu0 %v228
    %2176 = vmatpush.msra.mxu0 %v224
    %2177 = vmatpush.msra.mxu0 %v220
    %2178 = vmatpush.msra.mxu0 %v216
    %2179 = vmatpush.msra.mxu0 %v212
    %2180 = vmatmul.f32.gmra.mxu0 %v1953
    %v2181 = vpop.f32.mrf.mxu0
    %v2182 = vadd.f32 %v2162, %v2181
    %2183 = vdwg.mxu0
    %2184 = vmatpush.msra.mxu0 %v209
    %2185 = vmatpush.msra.mxu0 %v205
    %2186 = vmatpush.msra.mxu0 %v201
    %2187 = vmatpush.msra.mxu0 %v197
    %2188 = vmatpush.msra.mxu0 %v193
    %2189 = vmatpush.msra.mxu0 %v189
    %2190 = vmatpush.msra.mxu0 %v185
    %2191 = vmatpush.msra.mxu0 %v181
    %2192 = vmatpush.msra.mxu0 %v177
    %2193 = vmatpush.msra.mxu0 %v173
    %2194 = vmatpush.msra.mxu0 %v169
    %2195 = vmatpush.msra.mxu0 %v165
    %2196 = vmatpush.msra.mxu0 %v161
    %2197 = vmatpush.msra.mxu0 %v157
    %2198 = vmatpush.msra.mxu0 %v153
    %2199 = vmatpush.msra.mxu0 %v149
    %2200 = vmatmul.f32.gmra.mxu0 %v2103
    %v2201 = vpop.f32.mrf.mxu0
    %v2202 = vadd.f32 %v279, %v2201
    %2203 = vdwg.mxu0
    %2204 = vmatpush.msra.mxu0 %v273
    %2205 = vmatpush.msra.mxu0 %v269
    %2206 = vmatpush.msra.mxu0 %v265
    %2207 = vmatpush.msra.mxu0 %v261
    %2208 = vmatpush.msra.mxu0 %v257
    %2209 = vmatpush.msra.mxu0 %v253
    %2210 = vmatpush.msra.mxu0 %v249
    %2211 = vmatpush.msra.mxu0 %v245
    %2212 = vmatpush.msra.mxu0 %v241
    %2213 = vmatpush.msra.mxu0 %v237
    %2214 = vmatpush.msra.mxu0 %v233
    %2215 = vmatpush.msra.mxu0 %v229
    %2216 = vmatpush.msra.mxu0 %v225
    %2217 = vmatpush.msra.mxu0 %v221
    %2218 = vmatpush.msra.mxu0 %v217
    %2219 = vmatpush.msra.mxu0 %v213
    %2220 = vmatmul.f32.gmra.mxu0 %v1953
    %v2221 = vpop.f32.mrf.mxu0
    %v2222 = vadd.f32 %v2202, %v2221
    %2223 = vdwg.mxu0
    %2224 = vmatpush.msra.mxu0 %v210
    %2225 = vmatpush.msra.mxu0 %v206
    %2226 = vmatpush.msra.mxu0 %v202
    %2227 = vmatpush.msra.mxu0 %v198
    %2228 = vmatpush.msra.mxu0 %v194
    %2229 = vmatpush.msra.mxu0 %v190
    %2230 = vmatpush.msra.mxu0 %v186
    %2231 = vmatpush.msra.mxu0 %v182
    %2232 = vmatpush.msra.mxu0 %v178
    %2233 = vmatpush.msra.mxu0 %v174
    %2234 = vmatpush.msra.mxu0 %v170
    %2235 = vmatpush.msra.mxu0 %v166
    %2236 = vmatpush.msra.mxu0 %v162
    %2237 = vmatpush.msra.mxu0 %v158
    %2238 = vmatpush.msra.mxu0 %v154
    %2239 = vmatpush.msra.mxu0 %v150
    %2240 = vmatmul.f32.gmra.mxu0 %v2103
    %v2241 = vpop.f32.mrf.mxu0
    %v2242 = vadd.f32 %v280, %v2241
    %2243 = vdwg.mxu0
    %2244 = vmatpush.msra.mxu0 %v274
    %2245 = vmatpush.msra.mxu0 %v270
    %2246 = vmatpush.msra.mxu0 %v266
    %2247 = vmatpush.msra.mxu0 %v262
    %2248 = vmatpush.msra.mxu0 %v258
    %2249 = vmatpush.msra.mxu0 %v254
    %2250 = vmatpush.msra.mxu0 %v250
    %2251 = vmatpush.msra.mxu0 %v246
    %2252 = vmatpush.msra.mxu0 %v242
    %2253 = vmatpush.msra.mxu0 %v238
    %2254 = vmatpush.msra.mxu0 %v234
    %2255 = vmatpush.msra.mxu0 %v230
    %2256 = vmatpush.msra.mxu0 %v226
    %2257 = vmatpush.msra.mxu0 %v222
    %2258 = vmatpush.msra.mxu0 %v218
    %2259 = vmatpush.msra.mxu0 %v214
    %2260 = vmatmul.f32.gmra.mxu0 %v1953
    %v2261 = vpop.f32.mrf.mxu0
    %v2262 = vadd.f32 %v2242, %v2261
    %2263 = vdwg.mxu0
    %v2264 = vxor.u32 %v2142, 2147483648
    %v2265 = vxor.u32 %v2182, 2147483648
    %v2266 = vxor.u32 %v2222, 2147483648
    %v2267 = vmul.f32 %v2264, 1.442695
    %v2268 = vpow.pop %v2267
    %v2269 = vmul.f32 %v2265, 1.442695
    %v2270 = vpow.pop %v2269
    %v2271 = vmul.f32 %v2266, 1.442695
    %v2272 = vpow.pop %v2271
    %v2273 = vadd.f32 %v2268, 1.0
    %v2274 = vadd.f32 %v2270, 1.0
    %v2275 = vadd.f32 %v2272, 1.0
    %v2276 = vrcp.pop %v2273
    %v2277 = vmul.f32 %v2273, %v2276
    %v2278 = vsub.f32 1.0, %v2277
    %v2279 = vmul.f32 %v2276, %v2278
    %v2280 = vadd.f32 %v2276, %v2279
    %vm2281 = vweird.f32 %v2273
    %vm2282 = vweird.f32 %v2276
    %vm2283 = vmor %vm2281, %vm2282
    %v2284 = vsel %vm2283, %v2276, %v2280
    %v2285 = vand.u32 2147483647, %v2273
    %vm2286 = vcmp.eq.f32.partialorder %v2285, 8.507059e+37
    %v2287 = vand.u32 %v2273, 2147483648
    %v2288 = vor.u32 1.1754944e-38, %v2287
    %v2289 = vsel %vm2286, %v2288, %v2284
    %v2290 = vmul.f32 1.0, %v2289
    %v2291 = vrcp.pop %v2274
    %v2292 = vmul.f32 %v2274, %v2291
    %v2293 = vsub.f32 1.0, %v2292
    %v2294 = vmul.f32 %v2291, %v2293
    %v2295 = vadd.f32 %v2291, %v2294
    %vm2296 = vweird.f32 %v2274
    %vm2297 = vweird.f32 %v2291
    %vm2298 = vmor %vm2296, %vm2297
    %v2299 = vsel %vm2298, %v2291, %v2295
    %v2300 = vand.u32 2147483647, %v2274
    %vm2301 = vcmp.eq.f32.partialorder %v2300, 8.507059e+37
    %v2302 = vand.u32 %v2274, 2147483648
    %v2303 = vor.u32 1.1754944e-38, %v2302
    %v2304 = vsel %vm2301, %v2303, %v2299
    %v2305 = vmul.f32 1.0, %v2304
    %v2306 = vrcp.pop %v2275
    %v2307 = vmul.f32 %v2275, %v2306
    %v2308 = vsub.f32 1.0, %v2307
    %v2309 = vmul.f32 %v2306, %v2308
    %v2310 = vadd.f32 %v2306, %v2309
    %vm2311 = vweird.f32 %v2275
    %vm2312 = vweird.f32 %v2306
    %vm2313 = vmor %vm2311, %vm2312
    %v2314 = vsel %vm2313, %v2306, %v2310
    %v2315 = vand.u32 2147483647, %v2275
    %vm2316 = vcmp.eq.f32.partialorder %v2315, 8.507059e+37
    %v2317 = vand.u32 %v2275, 2147483648
    %v2318 = vor.u32 1.1754944e-38, %v2317
    %v2319 = vsel %vm2316, %v2318, %v2314
    %v2320 = vmul.f32 1.0, %v2319
    %v2321 = vtanh.pop %v2262
    %v2322 = vmul.f32 %v2305, %v1951
    %v2323 = vmul.f32 %v2290, %v2321
    %v2324 = vadd.f32 %v2322, %v2323
    %v2325 = vtanh.pop %v2324
    %v2326 = vmul.f32 %v2320, %v2325
    %2327 = vmatpush.msra.mxu0 %v142
    %2328 = vmatpush.msra.mxu0 %v138
    %2329 = vmatpush.msra.mxu0 %v134
    %2330 = vmatpush.msra.mxu0 %v130
    %2331 = vmatpush.msra.mxu0 %v126
    %2332 = vmatpush.msra.mxu0 %v122
    %2333 = vmatpush.msra.mxu0 %v118
    %2334 = vmatpush.msra.mxu0 %v114
    %2335 = vmatpush.msra.mxu0 %v110
    %2336 = vmatpush.msra.mxu0 %v106
    %2337 = vmatpush.msra.mxu0 %v102
    %2338 = vmatpush.msra.mxu0 %v98
    %2339 = vmatpush.msra.mxu0 %v94
    %2340 = vmatpush.msra.mxu0 %v90
    %2341 = vmatpush.msra.mxu0 %v86
    %2342 = vmatpush.msra.mxu0 %v82
    %2343 = vmatmul.f32.gmra.mxu0 %v2103
    %v2344 = vpop.f32.mrf.mxu0
    %v2345 = vadd.f32 0.0, %v2344
    %2346 = vdwg.mxu0
    %2347 = vmatpush.msra.mxu0 %v143
    %2348 = vmatpush.msra.mxu0 %v139
    %2349 = vmatpush.msra.mxu0 %v135
    %2350 = vmatpush.msra.mxu0 %v131
    %2351 = vmatpush.msra.mxu0 %v127
    %2352 = vmatpush.msra.mxu0 %v123
    %2353 = vmatpush.msra.mxu0 %v119
    %2354 = vmatpush.msra.mxu0 %v115
    %2355 = vmatpush.msra.mxu0 %v111
    %2356 = vmatpush.msra.mxu0 %v107
    %2357 = vmatpush.msra.mxu0 %v103
    %2358 = vmatpush.msra.mxu0 %v99
    %2359 = vmatpush.msra.mxu0 %v95
    %2360 = vmatpush.msra.mxu0 %v91
    %2361 = vmatpush.msra.mxu0 %v87
    %2362 = vmatpush.msra.mxu0 %v83
    %2363 = vmatmul.f32.gmra.mxu0 %v2103
    %v2364 = vpop.f32.mrf.mxu0
    %v2365 = vadd.f32 0.0, %v2364
    %2366 = vdwg.mxu0
    %2367 = vmatpush.msra.mxu0 %v144
    %2368 = vmatpush.msra.mxu0 %v140
    %2369 = vmatpush.msra.mxu0 %v136
    %2370 = vmatpush.msra.mxu0 %v132
    %2371 = vmatpush.msra.mxu0 %v128
    %2372 = vmatpush.msra.mxu0 %v124
    %2373 = vmatpush.msra.mxu0 %v120
    %2374 = vmatpush.msra.mxu0 %v116
    %2375 = vmatpush.msra.mxu0 %v112
    %2376 = vmatpush.msra.mxu0 %v108
    %2377 = vmatpush.msra.mxu0 %v104
    %2378 = vmatpush.msra.mxu0 %v100
    %2379 = vmatpush.msra.mxu0 %v96
    %2380 = vmatpush.msra.mxu0 %v92
    %2381 = vmatpush.msra.mxu0 %v88
    %2382 = vmatpush.msra.mxu0 %v84
    %2383 = vmatmul.f32.gmra.mxu0 %v2103
    %v2384 = vpop.f32.mrf.mxu0
    %v2385 = vadd.f32 0.0, %v2384
    %2386 = vdwg.mxu0
    %2387 = vmatpush.msra.mxu0 %v145
    %2388 = vmatpush.msra.mxu0 %v141
    %2389 = vmatpush.msra.mxu0 %v137
    %2390 = vmatpush.msra.mxu0 %v133
    %2391 = vmatpush.msra.mxu0 %v129
    %2392 = vmatpush.msra.mxu0 %v125
    %2393 = vmatpush.msra.mxu0 %v121
    %2394 = vmatpush.msra.mxu0 %v117
    %2395 = vmatpush.msra.mxu0 %v113
    %2396 = vmatpush.msra.mxu0 %v109
    %2397 = vmatpush.msra.mxu0 %v105
    %2398 = vmatpush.msra.mxu0 %v101
    %2399 = vmatpush.msra.mxu0 %v97
    %2400 = vmatpush.msra.mxu0 %v93
    %2401 = vmatpush.msra.mxu0 %v89
    %2402 = vmatpush.msra.mxu0 %v85
    %2403 = vmatmul.f32.gmra.mxu0 %v2103
    %v2404 = vpop.f32.mrf.mxu0
    %v2405 = vadd.f32 0.0, %v2404
    %2406 = vdwg.mxu0
    %v2411 = vrot.slane %v2345, 6
    %v2412 = vrot.slane %v2365, 6
    %v2413 = vrot.slane %v2385, 6
    %v2414 = vrot.slane %v2405, 6
    %v2419 = vadd.f32 %v337, %v2411
    %v2420 = vadd.f32 %v360, %v2412
    %v2421 = vadd.f32 %v383, %v2413
    %v2422 = vadd.f32 %v406, %v2414
    %v2423 = vxor.u32 %v2419, 2147483648
    %v2424 = vxor.u32 %v2420, 2147483648
    %v2425 = vxor.u32 %v2421, 2147483648
    %v2426 = vmul.f32 %v2423, 1.442695
    %v2427 = vpow.pop %v2426
    %v2428 = vmul.f32 %v2424, 1.442695
    %v2429 = vpow.pop %v2428
    %v2430 = vmul.f32 %v2425, 1.442695
    %v2431 = vpow.pop %v2430
    %v2432 = vadd.f32 %v2427, 1.0
    %v2433 = vadd.f32 %v2429, 1.0
    %v2434 = vadd.f32 %v2431, 1.0
    %v2435 = vrcp.pop %v2432
    %v2436 = vmul.f32 %v2432, %v2435
    %v2437 = vsub.f32 1.0, %v2436
    %v2438 = vmul.f32 %v2435, %v2437
    %v2439 = vadd.f32 %v2435, %v2438
    %vm2440 = vweird.f32 %v2432
    %vm2441 = vweird.f32 %v2435
    %vm2442 = vmor %vm2440, %vm2441
    %v2443 = vsel %vm2442, %v2435, %v2439
    %v2444 = vand.u32 2147483647, %v2432
    %vm2445 = vcmp.eq.f32.partialorder %v2444, 8.507059e+37
    %v2446 = vand.u32 %v2432, 2147483648
    %v2447 = vor.u32 1.1754944e-38, %v2446
    %v2448 = vsel %vm2445, %v2447, %v2443
    %v2449 = vmul.f32 1.0, %v2448
    %v2450 = vrcp.pop %v2433
    %v2451 = vmul.f32 %v2433, %v2450
    %v2452 = vsub.f32 1.0, %v2451
    %v2453 = vmul.f32 %v2450, %v2452
    %v2454 = vadd.f32 %v2450, %v2453
    %vm2455 = vweird.f32 %v2433
    %vm2456 = vweird.f32 %v2450
    %vm2457 = vmor %vm2455, %vm2456
    %v2458 = vsel %vm2457, %v2450, %v2454
    %v2459 = vand.u32 2147483647, %v2433
    %vm2460 = vcmp.eq.f32.partialorder %v2459, 8.507059e+37
    %v2461 = vand.u32 %v2433, 2147483648
    %v2462 = vor.u32 1.1754944e-38, %v2461
    %v2463 = vsel %vm2460, %v2462, %v2458
    %v2464 = vmul.f32 1.0, %v2463
    %v2465 = vrcp.pop %v2434
    %v2466 = vmul.f32 %v2434, %v2465
    %v2467 = vsub.f32 1.0, %v2466
    %v2468 = vmul.f32 %v2465, %v2467
    %v2469 = vadd.f32 %v2465, %v2468
    %vm2470 = vweird.f32 %v2434
    %vm2471 = vweird.f32 %v2465
    %vm2472 = vmor %vm2470, %vm2471
    %v2473 = vsel %vm2472, %v2465, %v2469
    %v2474 = vand.u32 2147483647, %v2434
    %vm2475 = vcmp.eq.f32.partialorder %v2474, 8.507059e+37
    %v2476 = vand.u32 %v2434, 2147483648
    %v2477 = vor.u32 1.1754944e-38, %v2476
    %v2478 = vsel %vm2475, %v2477, %v2473
    %v2479 = vmul.f32 1.0, %v2478
    %v2480 = vtanh.pop %v2422
    %v2482 = vrot.slane %v2101, 6
    %v2484 = vmul.f32 %v2464, %v2482
    %v2485 = vmul.f32 %v2449, %v2480
    %v2486 = vadd.f32 %v2484, %v2485
    %v2487 = vtanh.pop %v2486
    %v2488 = vmul.f32 %v2479, %v2487
    %v2490 = vrot.slane %v2326, 6
    %v2492 = vrot.slane %v2488, 2
    %v2493 = vrot.slane %v2490, 2
    %2496 = vmatpush.msra.mxu0 %v207
    %2497 = vmatpush.msra.mxu0 %v203
    %2498 = vmatpush.msra.mxu0 %v199
    %2499 = vmatpush.msra.mxu0 %v195
    %2500 = vmatpush.msra.mxu0 %v191
    %2501 = vmatpush.msra.mxu0 %v187
    %2502 = vmatpush.msra.mxu0 %v183
    %2503 = vmatpush.msra.mxu0 %v179
    %2504 = vmatpush.msra.mxu0 %v175
    %2505 = vmatpush.msra.mxu0 %v171
    %2506 = vmatpush.msra.mxu0 %v167
    %2507 = vmatpush.msra.mxu0 %v163
    %2508 = vmatpush.msra.mxu0 %v159
    %2509 = vmatpush.msra.mxu0 %v155
    %2510 = vmatpush.msra.mxu0 %v151
    %2511 = vmatpush.msra.mxu0 %v147
    %2512 = vmatmul.f32.gmra.mxu0 %v2492
    %v2513 = vpop.f32.mrf.mxu0
    %v2514 = vadd.f32 %v277, %v2513
    %2515 = vdwg.mxu0
    %2516 = vmatpush.msra.mxu0 %v271
    %2517 = vmatpush.msra.mxu0 %v267
    %2518 = vmatpush.msra.mxu0 %v263
    %2519 = vmatpush.msra.mxu0 %v259
    %2520 = vmatpush.msra.mxu0 %v255
    %2521 = vmatpush.msra.mxu0 %v251
    %2522 = vmatpush.msra.mxu0 %v247
    %2523 = vmatpush.msra.mxu0 %v243
    %2524 = vmatpush.msra.mxu0 %v239
    %2525 = vmatpush.msra.mxu0 %v235
    %2526 = vmatpush.msra.mxu0 %v231
    %2527 = vmatpush.msra.mxu0 %v227
    %2528 = vmatpush.msra.mxu0 %v223
    %2529 = vmatpush.msra.mxu0 %v219
    %2530 = vmatpush.msra.mxu0 %v215
    %2531 = vmatpush.msra.mxu0 %v211
    %2532 = vmatmul.f32.gmra.mxu0 %v2493
    %v2533 = vpop.f32.mrf.mxu0
    %v2534 = vadd.f32 %v2514, %v2533
    %2535 = vdwg.mxu0
    %2536 = vmatpush.msra.mxu0 %v208
    %2537 = vmatpush.msra.mxu0 %v204
    %2538 = vmatpush.msra.mxu0 %v200
    %2539 = vmatpush.msra.mxu0 %v196
    %2540 = vmatpush.msra.mxu0 %v192
    %2541 = vmatpush.msra.mxu0 %v188
    %2542 = vmatpush.msra.mxu0 %v184
    %2543 = vmatpush.msra.mxu0 %v180
    %2544 = vmatpush.msra.mxu0 %v176
    %2545 = vmatpush.msra.mxu0 %v172
    %2546 = vmatpush.msra.mxu0 %v168
    %2547 = vmatpush.msra.mxu0 %v164
    %2548 = vmatpush.msra.mxu0 %v160
    %2549 = vmatpush.msra.mxu0 %v156
    %2550 = vmatpush.msra.mxu0 %v152
    %2551 = vmatpush.msra.mxu0 %v148
    %2552 = vmatmul.f32.gmra.mxu0 %v2492
    %v2553 = vpop.f32.mrf.mxu0
    %v2554 = vadd.f32 %v278, %v2553
    %2555 = vdwg.mxu0
    %2556 = vmatpush.msra.mxu0 %v272
    %2557 = vmatpush.msra.mxu0 %v268
    %2558 = vmatpush.msra.mxu0 %v264
    %2559 = vmatpush.msra.mxu0 %v260
    %2560 = vmatpush.msra.mxu0 %v256
    %2561 = vmatpush.msra.mxu0 %v252
    %2562 = vmatpush.msra.mxu0 %v248
    %2563 = vmatpush.msra.mxu0 %v244
    %2564 = vmatpush.msra.mxu0 %v240
    %2565 = vmatpush.msra.mxu0 %v236
    %2566 = vmatpush.msra.mxu0 %v232
    %2567 = vmatpush.msra.mxu0 %v228
    %2568 = vmatpush.msra.mxu0 %v224
    %2569 = vmatpush.msra.mxu0 %v220
    %2570 = vmatpush.msra.mxu0 %v216
    %2571 = vmatpush.msra.mxu0 %v212
    %2572 = vmatmul.f32.gmra.mxu0 %v2493
    %v2573 = vpop.f32.mrf.mxu0
    %v2574 = vadd.f32 %v2554, %v2573
    %2575 = vdwg.mxu0
    %2576 = vmatpush.msra.mxu0 %v209
    %2577 = vmatpush.msra.mxu0 %v205
    %2578 = vmatpush.msra.mxu0 %v201
    %2579 = vmatpush.msra.mxu0 %v197
    %2580 = vmatpush.msra.mxu0 %v193
    %2581 = vmatpush.msra.mxu0 %v189
    %2582 = vmatpush.msra.mxu0 %v185
    %2583 = vmatpush.msra.mxu0 %v181
    %2584 = vmatpush.msra.mxu0 %v177
    %2585 = vmatpush.msra.mxu0 %v173
    %2586 = vmatpush.msra.mxu0 %v169
    %2587 = vmatpush.msra.mxu0 %v165
    %2588 = vmatpush.msra.mxu0 %v161
    %2589 = vmatpush.msra.mxu0 %v157
    %2590 = vmatpush.msra.mxu0 %v153
    %2591 = vmatpush.msra.mxu0 %v149
    %2592 = vmatmul.f32.gmra.mxu0 %v2492
    %v2593 = vpop.f32.mrf.mxu0
    %v2594 = vadd.f32 %v279, %v2593
    %2595 = vdwg.mxu0
    %2596 = vmatpush.msra.mxu0 %v273
    %2597 = vmatpush.msra.mxu0 %v269
    %2598 = vmatpush.msra.mxu0 %v265
    %2599 = vmatpush.msra.mxu0 %v261
    %2600 = vmatpush.msra.mxu0 %v257
    %2601 = vmatpush.msra.mxu0 %v253
    %2602 = vmatpush.msra.mxu0 %v249
    %2603 = vmatpush.msra.mxu0 %v245
    %2604 = vmatpush.msra.mxu0 %v241
    %2605 = vmatpush.msra.mxu0 %v237
    %2606 = vmatpush.msra.mxu0 %v233
    %2607 = vmatpush.msra.mxu0 %v229
    %2608 = vmatpush.msra.mxu0 %v225
    %2609 = vmatpush.msra.mxu0 %v221
    %2610 = vmatpush.msra.mxu0 %v217
    %2611 = vmatpush.msra.mxu0 %v213
    %2612 = vmatmul.f32.gmra.mxu0 %v2493
    %v2613 = vpop.f32.mrf.mxu0
    %v2614 = vadd.f32 %v2594, %v2613
    %2615 = vdwg.mxu0
    %2616 = vmatpush.msra.mxu0 %v210
    %2617 = vmatpush.msra.mxu0 %v206
    %2618 = vmatpush.msra.mxu0 %v202
    %2619 = vmatpush.msra.mxu0 %v198
    %2620 = vmatpush.msra.mxu0 %v194
    %2621 = vmatpush.msra.mxu0 %v190
    %2622 = vmatpush.msra.mxu0 %v186
    %2623 = vmatpush.msra.mxu0 %v182
    %2624 = vmatpush.msra.mxu0 %v178
    %2625 = vmatpush.msra.mxu0 %v174
    %2626 = vmatpush.msra.mxu0 %v170
    %2627 = vmatpush.msra.mxu0 %v166
    %2628 = vmatpush.msra.mxu0 %v162
    %2629 = vmatpush.msra.mxu0 %v158
    %2630 = vmatpush.msra.mxu0 %v154
    %2631 = vmatpush.msra.mxu0 %v150
    %2632 = vmatmul.f32.gmra.mxu0 %v2492
    %v2633 = vpop.f32.mrf.mxu0
    %v2634 = vadd.f32 %v280, %v2633
    %2635 = vdwg.mxu0
    %2636 = vmatpush.msra.mxu0 %v274
    %2637 = vmatpush.msra.mxu0 %v270
    %2638 = vmatpush.msra.mxu0 %v266
    %2639 = vmatpush.msra.mxu0 %v262
    %2640 = vmatpush.msra.mxu0 %v258
    %2641 = vmatpush.msra.mxu0 %v254
    %2642 = vmatpush.msra.mxu0 %v250
    %2643 = vmatpush.msra.mxu0 %v246
    %2644 = vmatpush.msra.mxu0 %v242
    %2645 = vmatpush.msra.mxu0 %v238
    %2646 = vmatpush.msra.mxu0 %v234
    %2647 = vmatpush.msra.mxu0 %v230
    %2648 = vmatpush.msra.mxu0 %v226
    %2649 = vmatpush.msra.mxu0 %v222
    %2650 = vmatpush.msra.mxu0 %v218
    %2651 = vmatpush.msra.mxu0 %v214
    %2652 = vmatmul.f32.gmra.mxu0 %v2493
    %v2653 = vpop.f32.mrf.mxu0
    %v2654 = vadd.f32 %v2634, %v2653
    %2655 = vdwg.mxu0
    %v2656 = vxor.u32 %v2534, 2147483648
    %v2657 = vxor.u32 %v2574, 2147483648
    %v2658 = vxor.u32 %v2614, 2147483648
    %v2659 = vmul.f32 %v2656, 1.442695
    %v2660 = vpow.pop %v2659
    %v2661 = vmul.f32 %v2657, 1.442695
    %v2662 = vpow.pop %v2661
    %v2663 = vmul.f32 %v2658, 1.442695
    %v2664 = vpow.pop %v2663
    %v2665 = vadd.f32 %v2660, 1.0
    %v2666 = vadd.f32 %v2662, 1.0
    %v2667 = vadd.f32 %v2664, 1.0
    %v2668 = vrcp.pop %v2665
    %v2669 = vmul.f32 %v2665, %v2668
    %v2670 = vsub.f32 1.0, %v2669
    %v2671 = vmul.f32 %v2668, %v2670
    %v2672 = vadd.f32 %v2668, %v2671
    %vm2673 = vweird.f32 %v2665
    %vm2674 = vweird.f32 %v2668
    %vm2675 = vmor %vm2673, %vm2674
    %v2676 = vsel %vm2675, %v2668, %v2672
    %v2677 = vand.u32 2147483647, %v2665
    %vm2678 = vcmp.eq.f32.partialorder %v2677, 8.507059e+37
    %v2679 = vand.u32 %v2665, 2147483648
    %v2680 = vor.u32 1.1754944e-38, %v2679
    %v2681 = vsel %vm2678, %v2680, %v2676
    %v2682 = vmul.f32 1.0, %v2681
    %v2683 = vrcp.pop %v2666
    %v2684 = vmul.f32 %v2666, %v2683
    %v2685 = vsub.f32 1.0, %v2684
    %v2686 = vmul.f32 %v2683, %v2685
    %v2687 = vadd.f32 %v2683, %v2686
    %vm2688 = vweird.f32 %v2666
    %vm2689 = vweird.f32 %v2683
    %vm2690 = vmor %vm2688, %vm2689
    %v2691 = vsel %vm2690, %v2683, %v2687
    %v2692 = vand.u32 2147483647, %v2666
    %vm2693 = vcmp.eq.f32.partialorder %v2692, 8.507059e+37
    %v2694 = vand.u32 %v2666, 2147483648
    %v2695 = vor.u32 1.1754944e-38, %v2694
    %v2696 = vsel %vm2693, %v2695, %v2691
    %v2697 = vmul.f32 1.0, %v2696
    %v2698 = vrcp.pop %v2667
    %v2699 = vmul.f32 %v2667, %v2698
    %v2700 = vsub.f32 1.0, %v2699
    %v2701 = vmul.f32 %v2698, %v2700
    %v2702 = vadd.f32 %v2698, %v2701
    %vm2703 = vweird.f32 %v2667
    %vm2704 = vweird.f32 %v2698
    %vm2705 = vmor %vm2703, %vm2704
    %v2706 = vsel %vm2705, %v2698, %v2702
    %v2707 = vand.u32 2147483647, %v2667
    %vm2708 = vcmp.eq.f32.partialorder %v2707, 8.507059e+37
    %v2709 = vand.u32 %v2667, 2147483648
    %v2710 = vor.u32 1.1754944e-38, %v2709
    %v2711 = vsel %vm2708, %v2710, %v2706
    %v2712 = vmul.f32 1.0, %v2711
    %v2713 = vtanh.pop %v2654
    %v2714 = vmul.f32 %v2697, %v2324
    %v2715 = vmul.f32 %v2682, %v2713
    %v2716 = vadd.f32 %v2714, %v2715
    %v2717 = vtanh.pop %v2716
    %v2718 = vmul.f32 %v2712, %v2717
    %2719 = vmatpush.msra.mxu0 %v142
    %2720 = vmatpush.msra.mxu0 %v138
    %2721 = vmatpush.msra.mxu0 %v134
    %2722 = vmatpush.msra.mxu0 %v130
    %2723 = vmatpush.msra.mxu0 %v126
    %2724 = vmatpush.msra.mxu0 %v122
    %2725 = vmatpush.msra.mxu0 %v118
    %2726 = vmatpush.msra.mxu0 %v114
    %2727 = vmatpush.msra.mxu0 %v110
    %2728 = vmatpush.msra.mxu0 %v106
    %2729 = vmatpush.msra.mxu0 %v102
    %2730 = vmatpush.msra.mxu0 %v98
    %2731 = vmatpush.msra.mxu0 %v94
    %2732 = vmatpush.msra.mxu0 %v90
    %2733 = vmatpush.msra.mxu0 %v86
    %2734 = vmatpush.msra.mxu0 %v82
    %2735 = vmatmul.f32.gmra.mxu0 %v2492
    %v2736 = vpop.f32.mrf.mxu0
    %v2737 = vadd.f32 0.0, %v2736
    %2738 = vdwg.mxu0
    %2739 = vmatpush.msra.mxu0 %v143
    %2740 = vmatpush.msra.mxu0 %v139
    %2741 = vmatpush.msra.mxu0 %v135
    %2742 = vmatpush.msra.mxu0 %v131
    %2743 = vmatpush.msra.mxu0 %v127
    %2744 = vmatpush.msra.mxu0 %v123
    %2745 = vmatpush.msra.mxu0 %v119
    %2746 = vmatpush.msra.mxu0 %v115
    %2747 = vmatpush.msra.mxu0 %v111
    %2748 = vmatpush.msra.mxu0 %v107
    %2749 = vmatpush.msra.mxu0 %v103
    %2750 = vmatpush.msra.mxu0 %v99
    %2751 = vmatpush.msra.mxu0 %v95
    %2752 = vmatpush.msra.mxu0 %v91
    %2753 = vmatpush.msra.mxu0 %v87
    %2754 = vmatpush.msra.mxu0 %v83
    %2755 = vmatmul.f32.gmra.mxu0 %v2492
    %v2756 = vpop.f32.mrf.mxu0
    %v2757 = vadd.f32 0.0, %v2756
    %2758 = vdwg.mxu0
    %2759 = vmatpush.msra.mxu0 %v144
    %2760 = vmatpush.msra.mxu0 %v140
    %2761 = vmatpush.msra.mxu0 %v136
    %2762 = vmatpush.msra.mxu0 %v132
    %2763 = vmatpush.msra.mxu0 %v128
    %2764 = vmatpush.msra.mxu0 %v124
    %2765 = vmatpush.msra.mxu0 %v120
    %2766 = vmatpush.msra.mxu0 %v116
    %2767 = vmatpush.msra.mxu0 %v112
    %2768 = vmatpush.msra.mxu0 %v108
    %2769 = vmatpush.msra.mxu0 %v104
    %2770 = vmatpush.msra.mxu0 %v100
    %2771 = vmatpush.msra.mxu0 %v96
    %2772 = vmatpush.msra.mxu0 %v92
    %2773 = vmatpush.msra.mxu0 %v88
    %2774 = vmatpush.msra.mxu0 %v84
    %2775 = vmatmul.f32.gmra.mxu0 %v2492
    %v2776 = vpop.f32.mrf.mxu0
    %v2777 = vadd.f32 0.0, %v2776
    %2778 = vdwg.mxu0
    %2779 = vmatpush.msra.mxu0 %v145
    %2780 = vmatpush.msra.mxu0 %v141
    %2781 = vmatpush.msra.mxu0 %v137
    %2782 = vmatpush.msra.mxu0 %v133
    %2783 = vmatpush.msra.mxu0 %v129
    %2784 = vmatpush.msra.mxu0 %v125
    %2785 = vmatpush.msra.mxu0 %v121
    %2786 = vmatpush.msra.mxu0 %v117
    %2787 = vmatpush.msra.mxu0 %v113
    %2788 = vmatpush.msra.mxu0 %v109
    %2789 = vmatpush.msra.mxu0 %v105
    %2790 = vmatpush.msra.mxu0 %v101
    %2791 = vmatpush.msra.mxu0 %v97
    %2792 = vmatpush.msra.mxu0 %v93
    %2793 = vmatpush.msra.mxu0 %v89
    %2794 = vmatpush.msra.mxu0 %v85
    %2795 = vmatmul.f32.gmra.mxu0 %v2492
    %v2796 = vpop.f32.mrf.mxu0
    %v2797 = vadd.f32 0.0, %v2796
    %2798 = vdwg.mxu0
    %v2803 = vrot.slane %v2737, 4
    %v2804 = vrot.slane %v2757, 4
    %v2805 = vrot.slane %v2777, 4
    %v2806 = vrot.slane %v2797, 4
    %v2811 = vadd.f32 %v337, %v2803
    %v2812 = vadd.f32 %v360, %v2804
    %v2813 = vadd.f32 %v383, %v2805
    %v2814 = vadd.f32 %v406, %v2806
    %v2815 = vxor.u32 %v2811, 2147483648
    %v2816 = vxor.u32 %v2812, 2147483648
    %v2817 = vxor.u32 %v2813, 2147483648
    %v2818 = vmul.f32 %v2815, 1.442695
    %v2819 = vpow.pop %v2818
    %v2820 = vmul.f32 %v2816, 1.442695
    %v2821 = vpow.pop %v2820
    %v2822 = vmul.f32 %v2817, 1.442695
    %v2823 = vpow.pop %v2822
    %v2824 = vadd.f32 %v2819, 1.0
    %v2825 = vadd.f32 %v2821, 1.0
    %v2826 = vadd.f32 %v2823, 1.0
    %v2827 = vrcp.pop %v2824
    %v2828 = vmul.f32 %v2824, %v2827
    %v2829 = vsub.f32 1.0, %v2828
    %v2830 = vmul.f32 %v2827, %v2829
    %v2831 = vadd.f32 %v2827, %v2830
    %vm2832 = vweird.f32 %v2824
    %vm2833 = vweird.f32 %v2827
    %vm2834 = vmor %vm2832, %vm2833
    %v2835 = vsel %vm2834, %v2827, %v2831
    %v2836 = vand.u32 2147483647, %v2824
    %vm2837 = vcmp.eq.f32.partialorder %v2836, 8.507059e+37
    %v2838 = vand.u32 %v2824, 2147483648
    %v2839 = vor.u32 1.1754944e-38, %v2838
    %v2840 = vsel %vm2837, %v2839, %v2835
    %v2841 = vmul.f32 1.0, %v2840
    %v2842 = vrcp.pop %v2825
    %v2843 = vmul.f32 %v2825, %v2842
    %v2844 = vsub.f32 1.0, %v2843
    %v2845 = vmul.f32 %v2842, %v2844
    %v2846 = vadd.f32 %v2842, %v2845
    %vm2847 = vweird.f32 %v2825
    %vm2848 = vweird.f32 %v2842
    %vm2849 = vmor %vm2847, %vm2848
    %v2850 = vsel %vm2849, %v2842, %v2846
    %v2851 = vand.u32 2147483647, %v2825
    %vm2852 = vcmp.eq.f32.partialorder %v2851, 8.507059e+37
    %v2853 = vand.u32 %v2825, 2147483648
    %v2854 = vor.u32 1.1754944e-38, %v2853
    %v2855 = vsel %vm2852, %v2854, %v2850
    %v2856 = vmul.f32 1.0, %v2855
    %v2857 = vrcp.pop %v2826
    %v2858 = vmul.f32 %v2826, %v2857
    %v2859 = vsub.f32 1.0, %v2858
    %v2860 = vmul.f32 %v2857, %v2859
    %v2861 = vadd.f32 %v2857, %v2860
    %vm2862 = vweird.f32 %v2826
    %vm2863 = vweird.f32 %v2857
    %vm2864 = vmor %vm2862, %vm2863
    %v2865 = vsel %vm2864, %v2857, %v2861
    %v2866 = vand.u32 2147483647, %v2826
    %vm2867 = vcmp.eq.f32.partialorder %v2866, 8.507059e+37
    %v2868 = vand.u32 %v2826, 2147483648
    %v2869 = vor.u32 1.1754944e-38, %v2868
    %v2870 = vsel %vm2867, %v2869, %v2865
    %v2871 = vmul.f32 1.0, %v2870
    %v2872 = vtanh.pop %v2814
    %v2874 = vrot.slane %v2486, 6
    %v2876 = vmul.f32 %v2856, %v2874
    %v2877 = vmul.f32 %v2841, %v2872
    %v2878 = vadd.f32 %v2876, %v2877
    %v2879 = vtanh.pop %v2878
    %v2880 = vmul.f32 %v2871, %v2879
    %v2882 = vrot.slane %v2718, 4
    %v2884 = vrot.slane %v2880, 4
    %v2885 = vrot.slane %v2882, 4
    %2888 = vmatpush.msra.mxu0 %v207
    %2889 = vmatpush.msra.mxu0 %v203
    %2890 = vmatpush.msra.mxu0 %v199
    %2891 = vmatpush.msra.mxu0 %v195
    %2892 = vmatpush.msra.mxu0 %v191
    %2893 = vmatpush.msra.mxu0 %v187
    %2894 = vmatpush.msra.mxu0 %v183
    %2895 = vmatpush.msra.mxu0 %v179
    %2896 = vmatpush.msra.mxu0 %v175
    %2897 = vmatpush.msra.mxu0 %v171
    %2898 = vmatpush.msra.mxu0 %v167
    %2899 = vmatpush.msra.mxu0 %v163
    %2900 = vmatpush.msra.mxu0 %v159
    %2901 = vmatpush.msra.mxu0 %v155
    %2902 = vmatpush.msra.mxu0 %v151
    %2903 = vmatpush.msra.mxu0 %v147
    %2904 = vmatmul.f32.gmra.mxu0 %v2884
    %v2905 = vpop.f32.mrf.mxu0
    %v2906 = vadd.f32 %v277, %v2905
    %2907 = vdwg.mxu0
    %2908 = vmatpush.msra.mxu0 %v271
    %2909 = vmatpush.msra.mxu0 %v267
    %2910 = vmatpush.msra.mxu0 %v263
    %2911 = vmatpush.msra.mxu0 %v259
    %2912 = vmatpush.msra.mxu0 %v255
    %2913 = vmatpush.msra.mxu0 %v251
    %2914 = vmatpush.msra.mxu0 %v247
    %2915 = vmatpush.msra.mxu0 %v243
    %2916 = vmatpush.msra.mxu0 %v239
    %2917 = vmatpush.msra.mxu0 %v235
    %2918 = vmatpush.msra.mxu0 %v231
    %2919 = vmatpush.msra.mxu0 %v227
    %2920 = vmatpush.msra.mxu0 %v223
    %2921 = vmatpush.msra.mxu0 %v219
    %2922 = vmatpush.msra.mxu0 %v215
    %2923 = vmatpush.msra.mxu0 %v211
    %2924 = vmatmul.f32.gmra.mxu0 %v2885
    %v2925 = vpop.f32.mrf.mxu0
    %v2926 = vadd.f32 %v2906, %v2925
    %2927 = vdwg.mxu0
    %2928 = vmatpush.msra.mxu0 %v208
    %2929 = vmatpush.msra.mxu0 %v204
    %2930 = vmatpush.msra.mxu0 %v200
    %2931 = vmatpush.msra.mxu0 %v196
    %2932 = vmatpush.msra.mxu0 %v192
    %2933 = vmatpush.msra.mxu0 %v188
    %2934 = vmatpush.msra.mxu0 %v184
    %2935 = vmatpush.msra.mxu0 %v180
    %2936 = vmatpush.msra.mxu0 %v176
    %2937 = vmatpush.msra.mxu0 %v172
    %2938 = vmatpush.msra.mxu0 %v168
    %2939 = vmatpush.msra.mxu0 %v164
    %2940 = vmatpush.msra.mxu0 %v160
    %2941 = vmatpush.msra.mxu0 %v156
    %2942 = vmatpush.msra.mxu0 %v152
    %2943 = vmatpush.msra.mxu0 %v148
    %2944 = vmatmul.f32.gmra.mxu0 %v2884
    %v2945 = vpop.f32.mrf.mxu0
    %v2946 = vadd.f32 %v278, %v2945
    %2947 = vdwg.mxu0
    %2948 = vmatpush.msra.mxu0 %v272
    %2949 = vmatpush.msra.mxu0 %v268
    %2950 = vmatpush.msra.mxu0 %v264
    %2951 = vmatpush.msra.mxu0 %v260
    %2952 = vmatpush.msra.mxu0 %v256
    %2953 = vmatpush.msra.mxu0 %v252
    %2954 = vmatpush.msra.mxu0 %v248
    %2955 = vmatpush.msra.mxu0 %v244
    %2956 = vmatpush.msra.mxu0 %v240
    %2957 = vmatpush.msra.mxu0 %v236
    %2958 = vmatpush.msra.mxu0 %v232
    %2959 = vmatpush.msra.mxu0 %v228
    %2960 = vmatpush.msra.mxu0 %v224
    %2961 = vmatpush.msra.mxu0 %v220
    %2962 = vmatpush.msra.mxu0 %v216
    %2963 = vmatpush.msra.mxu0 %v212
    %2964 = vmatmul.f32.gmra.mxu0 %v2885
    %v2965 = vpop.f32.mrf.mxu0
    %v2966 = vadd.f32 %v2946, %v2965
    %2967 = vdwg.mxu0
    %2968 = vmatpush.msra.mxu0 %v209
    %2969 = vmatpush.msra.mxu0 %v205
    %2970 = vmatpush.msra.mxu0 %v201
    %2971 = vmatpush.msra.mxu0 %v197
    %2972 = vmatpush.msra.mxu0 %v193
    %2973 = vmatpush.msra.mxu0 %v189
    %2974 = vmatpush.msra.mxu0 %v185
    %2975 = vmatpush.msra.mxu0 %v181
    %2976 = vmatpush.msra.mxu0 %v177
    %2977 = vmatpush.msra.mxu0 %v173
    %2978 = vmatpush.msra.mxu0 %v169
    %2979 = vmatpush.msra.mxu0 %v165
    %2980 = vmatpush.msra.mxu0 %v161
    %2981 = vmatpush.msra.mxu0 %v157
    %2982 = vmatpush.msra.mxu0 %v153
    %2983 = vmatpush.msra.mxu0 %v149
    %2984 = vmatmul.f32.gmra.mxu0 %v2884
    %v2985 = vpop.f32.mrf.mxu0
    %v2986 = vadd.f32 %v279, %v2985
    %2987 = vdwg.mxu0
    %2988 = vmatpush.msra.mxu0 %v273
    %2989 = vmatpush.msra.mxu0 %v269
    %2990 = vmatpush.msra.mxu0 %v265
    %2991 = vmatpush.msra.mxu0 %v261
    %2992 = vmatpush.msra.mxu0 %v257
    %2993 = vmatpush.msra.mxu0 %v253
    %2994 = vmatpush.msra.mxu0 %v249
    %2995 = vmatpush.msra.mxu0 %v245
    %2996 = vmatpush.msra.mxu0 %v241
    %2997 = vmatpush.msra.mxu0 %v237
    %2998 = vmatpush.msra.mxu0 %v233
    %2999 = vmatpush.msra.mxu0 %v229
    %3000 = vmatpush.msra.mxu0 %v225
    %3001 = vmatpush.msra.mxu0 %v221
    %3002 = vmatpush.msra.mxu0 %v217
    %3003 = vmatpush.msra.mxu0 %v213
    %3004 = vmatmul.f32.gmra.mxu0 %v2885
    %v3005 = vpop.f32.mrf.mxu0
    %v3006 = vadd.f32 %v2986, %v3005
    %3007 = vdwg.mxu0
    %3008 = vmatpush.msra.mxu0 %v210
    %3009 = vmatpush.msra.mxu0 %v206
    %3010 = vmatpush.msra.mxu0 %v202
    %3011 = vmatpush.msra.mxu0 %v198
    %3012 = vmatpush.msra.mxu0 %v194
    %3013 = vmatpush.msra.mxu0 %v190
    %3014 = vmatpush.msra.mxu0 %v186
    %3015 = vmatpush.msra.mxu0 %v182
    %3016 = vmatpush.msra.mxu0 %v178
    %3017 = vmatpush.msra.mxu0 %v174
    %3018 = vmatpush.msra.mxu0 %v170
    %3019 = vmatpush.msra.mxu0 %v166
    %3020 = vmatpush.msra.mxu0 %v162
    %3021 = vmatpush.msra.mxu0 %v158
    %3022 = vmatpush.msra.mxu0 %v154
    %3023 = vmatpush.msra.mxu0 %v150
    %3024 = vmatmul.f32.gmra.mxu0 %v2884
    %v3025 = vpop.f32.mrf.mxu0
    %v3026 = vadd.f32 %v280, %v3025
    %3027 = vdwg.mxu0
    %3028 = vmatpush.msra.mxu0 %v274
    %3029 = vmatpush.msra.mxu0 %v270
    %3030 = vmatpush.msra.mxu0 %v266
    %3031 = vmatpush.msra.mxu0 %v262
    %3032 = vmatpush.msra.mxu0 %v258
    %3033 = vmatpush.msra.mxu0 %v254
    %3034 = vmatpush.msra.mxu0 %v250
    %3035 = vmatpush.msra.mxu0 %v246
    %3036 = vmatpush.msra.mxu0 %v242
    %3037 = vmatpush.msra.mxu0 %v238
    %3038 = vmatpush.msra.mxu0 %v234
    %3039 = vmatpush.msra.mxu0 %v230
    %3040 = vmatpush.msra.mxu0 %v226
    %3041 = vmatpush.msra.mxu0 %v222
    %3042 = vmatpush.msra.mxu0 %v218
    %3043 = vmatpush.msra.mxu0 %v214
    %3044 = vmatmul.f32.gmra.mxu0 %v2885
    %v3045 = vpop.f32.mrf.mxu0
    %v3046 = vadd.f32 %v3026, %v3045
    %3047 = vdwg.mxu0
    %v3048 = vxor.u32 %v2926, 2147483648
    %v3049 = vxor.u32 %v2966, 2147483648
    %v3050 = vxor.u32 %v3006, 2147483648
    %v3051 = vmul.f32 %v3048, 1.442695
    %v3052 = vpow.pop %v3051
    %v3053 = vmul.f32 %v3049, 1.442695
    %v3054 = vpow.pop %v3053
    %v3055 = vmul.f32 %v3050, 1.442695
    %v3056 = vpow.pop %v3055
    %v3057 = vadd.f32 %v3052, 1.0
    %v3058 = vadd.f32 %v3054, 1.0
    %v3059 = vadd.f32 %v3056, 1.0
    %v3060 = vrcp.pop %v3057
    %v3061 = vmul.f32 %v3057, %v3060
    %v3062 = vsub.f32 1.0, %v3061
    %v3063 = vmul.f32 %v3060, %v3062
    %v3064 = vadd.f32 %v3060, %v3063
    %vm3065 = vweird.f32 %v3057
    %vm3066 = vweird.f32 %v3060
    %vm3067 = vmor %vm3065, %vm3066
    %v3068 = vsel %vm3067, %v3060, %v3064
    %v3069 = vand.u32 2147483647, %v3057
    %vm3070 = vcmp.eq.f32.partialorder %v3069, 8.507059e+37
    %v3071 = vand.u32 %v3057, 2147483648
    %v3072 = vor.u32 1.1754944e-38, %v3071
    %v3073 = vsel %vm3070, %v3072, %v3068
    %v3074 = vmul.f32 1.0, %v3073
    %v3075 = vrcp.pop %v3058
    %v3076 = vmul.f32 %v3058, %v3075
    %v3077 = vsub.f32 1.0, %v3076
    %v3078 = vmul.f32 %v3075, %v3077
    %v3079 = vadd.f32 %v3075, %v3078
    %vm3080 = vweird.f32 %v3058
    %vm3081 = vweird.f32 %v3075
    %vm3082 = vmor %vm3080, %vm3081
    %v3083 = vsel %vm3082, %v3075, %v3079
    %v3084 = vand.u32 2147483647, %v3058
    %vm3085 = vcmp.eq.f32.partialorder %v3084, 8.507059e+37
    %v3086 = vand.u32 %v3058, 2147483648
    %v3087 = vor.u32 1.1754944e-38, %v3086
    %v3088 = vsel %vm3085, %v3087, %v3083
    %v3089 = vmul.f32 1.0, %v3088
    %v3090 = vrcp.pop %v3059
    %v3091 = vmul.f32 %v3059, %v3090
    %v3092 = vsub.f32 1.0, %v3091
    %v3093 = vmul.f32 %v3090, %v3092
    %v3094 = vadd.f32 %v3090, %v3093
    %vm3095 = vweird.f32 %v3059
    %vm3096 = vweird.f32 %v3090
    %vm3097 = vmor %vm3095, %vm3096
    %v3098 = vsel %vm3097, %v3090, %v3094
    %v3099 = vand.u32 2147483647, %v3059
    %vm3100 = vcmp.eq.f32.partialorder %v3099, 8.507059e+37
    %v3101 = vand.u32 %v3059, 2147483648
    %v3102 = vor.u32 1.1754944e-38, %v3101
    %v3103 = vsel %vm3100, %v3102, %v3098
    %v3104 = vmul.f32 1.0, %v3103
    %v3105 = vtanh.pop %v3046
    %v3106 = vmul.f32 %v3089, %v2716
    %v3107 = vmul.f32 %v3074, %v3105
    %v3108 = vadd.f32 %v3106, %v3107
    %v3109 = vtanh.pop %v3108
    %v3110 = vmul.f32 %v3104, %v3109
    %3111 = vmatpush.msra.mxu0 %v142
    %3112 = vmatpush.msra.mxu0 %v138
    %3113 = vmatpush.msra.mxu0 %v134
    %3114 = vmatpush.msra.mxu0 %v130
    %3115 = vmatpush.msra.mxu0 %v126
    %3116 = vmatpush.msra.mxu0 %v122
    %3117 = vmatpush.msra.mxu0 %v118
    %3118 = vmatpush.msra.mxu0 %v114
    %3119 = vmatpush.msra.mxu0 %v110
    %3120 = vmatpush.msra.mxu0 %v106
    %3121 = vmatpush.msra.mxu0 %v102
    %3122 = vmatpush.msra.mxu0 %v98
    %3123 = vmatpush.msra.mxu0 %v94
    %3124 = vmatpush.msra.mxu0 %v90
    %3125 = vmatpush.msra.mxu0 %v86
    %3126 = vmatpush.msra.mxu0 %v82
    %3127 = vmatmul.f32.gmra.mxu0 %v2884
    %v3128 = vpop.f32.mrf.mxu0
    %v3129 = vadd.f32 0.0, %v3128
    %3130 = vdwg.mxu0
    %3131 = vmatpush.msra.mxu0 %v143
    %3132 = vmatpush.msra.mxu0 %v139
    %3133 = vmatpush.msra.mxu0 %v135
    %3134 = vmatpush.msra.mxu0 %v131
    %3135 = vmatpush.msra.mxu0 %v127
    %3136 = vmatpush.msra.mxu0 %v123
    %3137 = vmatpush.msra.mxu0 %v119
    %3138 = vmatpush.msra.mxu0 %v115
    %3139 = vmatpush.msra.mxu0 %v111
    %3140 = vmatpush.msra.mxu0 %v107
    %3141 = vmatpush.msra.mxu0 %v103
    %3142 = vmatpush.msra.mxu0 %v99
    %3143 = vmatpush.msra.mxu0 %v95
    %3144 = vmatpush.msra.mxu0 %v91
    %3145 = vmatpush.msra.mxu0 %v87
    %3146 = vmatpush.msra.mxu0 %v83
    %3147 = vmatmul.f32.gmra.mxu0 %v2884
    %v3148 = vpop.f32.mrf.mxu0
    %v3149 = vadd.f32 0.0, %v3148
    %3150 = vdwg.mxu0
    %3151 = vmatpush.msra.mxu0 %v144
    %3152 = vmatpush.msra.mxu0 %v140
    %3153 = vmatpush.msra.mxu0 %v136
    %3154 = vmatpush.msra.mxu0 %v132
    %3155 = vmatpush.msra.mxu0 %v128
    %3156 = vmatpush.msra.mxu0 %v124
    %3157 = vmatpush.msra.mxu0 %v120
    %3158 = vmatpush.msra.mxu0 %v116
    %3159 = vmatpush.msra.mxu0 %v112
    %3160 = vmatpush.msra.mxu0 %v108
    %3161 = vmatpush.msra.mxu0 %v104
    %3162 = vmatpush.msra.mxu0 %v100
    %3163 = vmatpush.msra.mxu0 %v96
    %3164 = vmatpush.msra.mxu0 %v92
    %3165 = vmatpush.msra.mxu0 %v88
    %3166 = vmatpush.msra.mxu0 %v84
    %3167 = vmatmul.f32.gmra.mxu0 %v2884
    %v3168 = vpop.f32.mrf.mxu0
    %v3169 = vadd.f32 0.0, %v3168
    %3170 = vdwg.mxu0
    %3171 = vmatpush.msra.mxu0 %v145
    %3172 = vmatpush.msra.mxu0 %v141
    %3173 = vmatpush.msra.mxu0 %v137
    %3174 = vmatpush.msra.mxu0 %v133
    %3175 = vmatpush.msra.mxu0 %v129
    %3176 = vmatpush.msra.mxu0 %v125
    %3177 = vmatpush.msra.mxu0 %v121
    %3178 = vmatpush.msra.mxu0 %v117
    %3179 = vmatpush.msra.mxu0 %v113
    %3180 = vmatpush.msra.mxu0 %v109
    %3181 = vmatpush.msra.mxu0 %v105
    %3182 = vmatpush.msra.mxu0 %v101
    %3183 = vmatpush.msra.mxu0 %v97
    %3184 = vmatpush.msra.mxu0 %v93
    %3185 = vmatpush.msra.mxu0 %v89
    %3186 = vmatpush.msra.mxu0 %v85
    %3187 = vmatmul.f32.gmra.mxu0 %v2884
    %v3188 = vpop.f32.mrf.mxu0
    %v3189 = vadd.f32 0.0, %v3188
    %3190 = vdwg.mxu0
    %v3195 = vrot.slane %v3129, 2
    %v3196 = vrot.slane %v3149, 2
    %v3197 = vrot.slane %v3169, 2
    %v3198 = vrot.slane %v3189, 2
    %v3203 = vadd.f32 %v337, %v3195
    %v3204 = vadd.f32 %v360, %v3196
    %v3205 = vadd.f32 %v383, %v3197
    %v3206 = vadd.f32 %v406, %v3198
    %v3207 = vxor.u32 %v3203, 2147483648
    %v3208 = vxor.u32 %v3204, 2147483648
    %v3209 = vxor.u32 %v3205, 2147483648
    %v3210 = vmul.f32 %v3207, 1.442695
    %v3211 = vpow.pop %v3210
    %v3212 = vmul.f32 %v3208, 1.442695
    %v3213 = vpow.pop %v3212
    %v3214 = vmul.f32 %v3209, 1.442695
    %v3215 = vpow.pop %v3214
    %v3216 = vadd.f32 %v3211, 1.0
    %v3217 = vadd.f32 %v3213, 1.0
    %v3218 = vadd.f32 %v3215, 1.0
    %v3219 = vrcp.pop %v3216
    %v3220 = vmul.f32 %v3216, %v3219
    %v3221 = vsub.f32 1.0, %v3220
    %v3222 = vmul.f32 %v3219, %v3221
    %v3223 = vadd.f32 %v3219, %v3222
    %vm3224 = vweird.f32 %v3216
    %vm3225 = vweird.f32 %v3219
    %vm3226 = vmor %vm3224, %vm3225
    %v3227 = vsel %vm3226, %v3219, %v3223
    %v3228 = vand.u32 2147483647, %v3216
    %vm3229 = vcmp.eq.f32.partialorder %v3228, 8.507059e+37
    %v3230 = vand.u32 %v3216, 2147483648
    %v3231 = vor.u32 1.1754944e-38, %v3230
    %v3232 = vsel %vm3229, %v3231, %v3227
    %v3233 = vmul.f32 1.0, %v3232
    %v3234 = vrcp.pop %v3217
    %v3235 = vmul.f32 %v3217, %v3234
    %v3236 = vsub.f32 1.0, %v3235
    %v3237 = vmul.f32 %v3234, %v3236
    %v3238 = vadd.f32 %v3234, %v3237
    %vm3239 = vweird.f32 %v3217
    %vm3240 = vweird.f32 %v3234
    %vm3241 = vmor %vm3239, %vm3240
    %v3242 = vsel %vm3241, %v3234, %v3238
    %v3243 = vand.u32 2147483647, %v3217
    %vm3244 = vcmp.eq.f32.partialorder %v3243, 8.507059e+37
    %v3245 = vand.u32 %v3217, 2147483648
    %v3246 = vor.u32 1.1754944e-38, %v3245
    %v3247 = vsel %vm3244, %v3246, %v3242
    %v3248 = vmul.f32 1.0, %v3247
    %v3249 = vrcp.pop %v3218
    %v3250 = vmul.f32 %v3218, %v3249
    %v3251 = vsub.f32 1.0, %v3250
    %v3252 = vmul.f32 %v3249, %v3251
    %v3253 = vadd.f32 %v3249, %v3252
    %vm3254 = vweird.f32 %v3218
    %vm3255 = vweird.f32 %v3249
    %vm3256 = vmor %vm3254, %vm3255
    %v3257 = vsel %vm3256, %v3249, %v3253
    %v3258 = vand.u32 2147483647, %v3218
    %vm3259 = vcmp.eq.f32.partialorder %v3258, 8.507059e+37
    %v3260 = vand.u32 %v3218, 2147483648
    %v3261 = vor.u32 1.1754944e-38, %v3260
    %v3262 = vsel %vm3259, %v3261, %v3257
    %v3263 = vmul.f32 1.0, %v3262
    %v3264 = vtanh.pop %v3206
    %v3266 = vrot.slane %v2878, 6
    %v3268 = vmul.f32 %v3248, %v3266
    %v3269 = vmul.f32 %v3233, %v3264
    %v3270 = vadd.f32 %v3268, %v3269
    %v3271 = vtanh.pop %v3270
    %v3272 = vmul.f32 %v3263, %v3271
    %v3274 = vrot.slane %v3110, 2
    %v3276 = vrot.slane %v3272, 6
    %v3277 = vrot.slane %v3274, 6
    %3280 = vmatpush.msra.mxu0 %v207
    %3281 = vmatpush.msra.mxu0 %v203
    %3282 = vmatpush.msra.mxu0 %v199
    %3283 = vmatpush.msra.mxu0 %v195
    %3284 = vmatpush.msra.mxu0 %v191
    %3285 = vmatpush.msra.mxu0 %v187
    %3286 = vmatpush.msra.mxu0 %v183
    %3287 = vmatpush.msra.mxu0 %v179
    %3288 = vmatpush.msra.mxu0 %v175
    %3289 = vmatpush.msra.mxu0 %v171
    %3290 = vmatpush.msra.mxu0 %v167
    %3291 = vmatpush.msra.mxu0 %v163
    %3292 = vmatpush.msra.mxu0 %v159
    %3293 = vmatpush.msra.mxu0 %v155
    %3294 = vmatpush.msra.mxu0 %v151
    %3295 = vmatpush.msra.mxu0 %v147
    %3296 = vmatmul.f32.gmra.mxu0 %v3276
    %v3297 = vpop.f32.mrf.mxu0
    %v3298 = vadd.f32 %v277, %v3297
    %3299 = vdwg.mxu0
    %3300 = vmatpush.msra.mxu0 %v271
    %3301 = vmatpush.msra.mxu0 %v267
    %3302 = vmatpush.msra.mxu0 %v263
    %3303 = vmatpush.msra.mxu0 %v259
    %3304 = vmatpush.msra.mxu0 %v255
    %3305 = vmatpush.msra.mxu0 %v251
    %3306 = vmatpush.msra.mxu0 %v247
    %3307 = vmatpush.msra.mxu0 %v243
    %3308 = vmatpush.msra.mxu0 %v239
    %3309 = vmatpush.msra.mxu0 %v235
    %3310 = vmatpush.msra.mxu0 %v231
    %3311 = vmatpush.msra.mxu0 %v227
    %3312 = vmatpush.msra.mxu0 %v223
    %3313 = vmatpush.msra.mxu0 %v219
    %3314 = vmatpush.msra.mxu0 %v215
    %3315 = vmatpush.msra.mxu0 %v211
    %3316 = vmatmul.f32.gmra.mxu0 %v3277
    %v3317 = vpop.f32.mrf.mxu0
    %v3318 = vadd.f32 %v3298, %v3317
    %3319 = vdwg.mxu0
    %3320 = vmatpush.msra.mxu0 %v208
    %3321 = vmatpush.msra.mxu0 %v204
    %3322 = vmatpush.msra.mxu0 %v200
    %3323 = vmatpush.msra.mxu0 %v196
    %3324 = vmatpush.msra.mxu0 %v192
    %3325 = vmatpush.msra.mxu0 %v188
    %3326 = vmatpush.msra.mxu0 %v184
    %3327 = vmatpush.msra.mxu0 %v180
    %3328 = vmatpush.msra.mxu0 %v176
    %3329 = vmatpush.msra.mxu0 %v172
    %3330 = vmatpush.msra.mxu0 %v168
    %3331 = vmatpush.msra.mxu0 %v164
    %3332 = vmatpush.msra.mxu0 %v160
    %3333 = vmatpush.msra.mxu0 %v156
    %3334 = vmatpush.msra.mxu0 %v152
    %3335 = vmatpush.msra.mxu0 %v148
    %3336 = vmatmul.f32.gmra.mxu0 %v3276
    %v3337 = vpop.f32.mrf.mxu0
    %v3338 = vadd.f32 %v278, %v3337
    %3339 = vdwg.mxu0
    %3340 = vmatpush.msra.mxu0 %v272
    %3341 = vmatpush.msra.mxu0 %v268
    %3342 = vmatpush.msra.mxu0 %v264
    %3343 = vmatpush.msra.mxu0 %v260
    %3344 = vmatpush.msra.mxu0 %v256
    %3345 = vmatpush.msra.mxu0 %v252
    %3346 = vmatpush.msra.mxu0 %v248
    %3347 = vmatpush.msra.mxu0 %v244
    %3348 = vmatpush.msra.mxu0 %v240
    %3349 = vmatpush.msra.mxu0 %v236
    %3350 = vmatpush.msra.mxu0 %v232
    %3351 = vmatpush.msra.mxu0 %v228
    %3352 = vmatpush.msra.mxu0 %v224
    %3353 = vmatpush.msra.mxu0 %v220
    %3354 = vmatpush.msra.mxu0 %v216
    %3355 = vmatpush.msra.mxu0 %v212
    %3356 = vmatmul.f32.gmra.mxu0 %v3277
    %v3357 = vpop.f32.mrf.mxu0
    %v3358 = vadd.f32 %v3338, %v3357
    %3359 = vdwg.mxu0
    %3360 = vmatpush.msra.mxu0 %v209
    %3361 = vmatpush.msra.mxu0 %v205
    %3362 = vmatpush.msra.mxu0 %v201
    %3363 = vmatpush.msra.mxu0 %v197
    %3364 = vmatpush.msra.mxu0 %v193
    %3365 = vmatpush.msra.mxu0 %v189
    %3366 = vmatpush.msra.mxu0 %v185
    %3367 = vmatpush.msra.mxu0 %v181
    %3368 = vmatpush.msra.mxu0 %v177
    %3369 = vmatpush.msra.mxu0 %v173
    %3370 = vmatpush.msra.mxu0 %v169
    %3371 = vmatpush.msra.mxu0 %v165
    %3372 = vmatpush.msra.mxu0 %v161
    %3373 = vmatpush.msra.mxu0 %v157
    %3374 = vmatpush.msra.mxu0 %v153
    %3375 = vmatpush.msra.mxu0 %v149
    %3376 = vmatmul.f32.gmra.mxu0 %v3276
    %v3377 = vpop.f32.mrf.mxu0
    %v3378 = vadd.f32 %v279, %v3377
    %3379 = vdwg.mxu0
    %3380 = vmatpush.msra.mxu0 %v273
    %3381 = vmatpush.msra.mxu0 %v269
    %3382 = vmatpush.msra.mxu0 %v265
    %3383 = vmatpush.msra.mxu0 %v261
    %3384 = vmatpush.msra.mxu0 %v257
    %3385 = vmatpush.msra.mxu0 %v253
    %3386 = vmatpush.msra.mxu0 %v249
    %3387 = vmatpush.msra.mxu0 %v245
    %3388 = vmatpush.msra.mxu0 %v241
    %3389 = vmatpush.msra.mxu0 %v237
    %3390 = vmatpush.msra.mxu0 %v233
    %3391 = vmatpush.msra.mxu0 %v229
    %3392 = vmatpush.msra.mxu0 %v225
    %3393 = vmatpush.msra.mxu0 %v221
    %3394 = vmatpush.msra.mxu0 %v217
    %3395 = vmatpush.msra.mxu0 %v213
    %3396 = vmatmul.f32.gmra.mxu0 %v3277
    %v3397 = vpop.f32.mrf.mxu0
    %v3398 = vadd.f32 %v3378, %v3397
    %3399 = vdwg.mxu0
    %3400 = vmatpush.msra.mxu0 %v210
    %3401 = vmatpush.msra.mxu0 %v206
    %3402 = vmatpush.msra.mxu0 %v202
    %3403 = vmatpush.msra.mxu0 %v198
    %3404 = vmatpush.msra.mxu0 %v194
    %3405 = vmatpush.msra.mxu0 %v190
    %3406 = vmatpush.msra.mxu0 %v186
    %3407 = vmatpush.msra.mxu0 %v182
    %3408 = vmatpush.msra.mxu0 %v178
    %3409 = vmatpush.msra.mxu0 %v174
    %3410 = vmatpush.msra.mxu0 %v170
    %3411 = vmatpush.msra.mxu0 %v166
    %3412 = vmatpush.msra.mxu0 %v162
    %3413 = vmatpush.msra.mxu0 %v158
    %3414 = vmatpush.msra.mxu0 %v154
    %3415 = vmatpush.msra.mxu0 %v150
    %3416 = vmatmul.f32.gmra.mxu0 %v3276
    %v3417 = vpop.f32.mrf.mxu0
    %v3418 = vadd.f32 %v280, %v3417
    %3419 = vdwg.mxu0
    %3420 = vmatpush.msra.mxu0 %v274
    %3421 = vmatpush.msra.mxu0 %v270
    %3422 = vmatpush.msra.mxu0 %v266
    %3423 = vmatpush.msra.mxu0 %v262
    %3424 = vmatpush.msra.mxu0 %v258
    %3425 = vmatpush.msra.mxu0 %v254
    %3426 = vmatpush.msra.mxu0 %v250
    %3427 = vmatpush.msra.mxu0 %v246
    %3428 = vmatpush.msra.mxu0 %v242
    %3429 = vmatpush.msra.mxu0 %v238
    %3430 = vmatpush.msra.mxu0 %v234
    %3431 = vmatpush.msra.mxu0 %v230
    %3432 = vmatpush.msra.mxu0 %v226
    %3433 = vmatpush.msra.mxu0 %v222
    %3434 = vmatpush.msra.mxu0 %v218
    %3435 = vmatpush.msra.mxu0 %v214
    %3436 = vmatmul.f32.gmra.mxu0 %v3277
    %v3437 = vpop.f32.mrf.mxu0
    %v3438 = vadd.f32 %v3418, %v3437
    %3439 = vdwg.mxu0
    %v3440 = vxor.u32 %v3318, 2147483648
    %v3441 = vxor.u32 %v3358, 2147483648
    %v3442 = vxor.u32 %v3398, 2147483648
    %v3443 = vmul.f32 %v3440, 1.442695
    %v3444 = vpow.pop %v3443
    %v3445 = vmul.f32 %v3441, 1.442695
    %v3446 = vpow.pop %v3445
    %v3447 = vmul.f32 %v3442, 1.442695
    %v3448 = vpow.pop %v3447
    %v3449 = vadd.f32 %v3444, 1.0
    %v3450 = vadd.f32 %v3446, 1.0
    %v3451 = vadd.f32 %v3448, 1.0
    %v3452 = vrcp.pop %v3449
    %v3453 = vmul.f32 %v3449, %v3452
    %v3454 = vsub.f32 1.0, %v3453
    %v3455 = vmul.f32 %v3452, %v3454
    %v3456 = vadd.f32 %v3452, %v3455
    %vm3457 = vweird.f32 %v3449
    %vm3458 = vweird.f32 %v3452
    %vm3459 = vmor %vm3457, %vm3458
    %v3460 = vsel %vm3459, %v3452, %v3456
    %v3461 = vand.u32 2147483647, %v3449
    %vm3462 = vcmp.eq.f32.partialorder %v3461, 8.507059e+37
    %v3463 = vand.u32 %v3449, 2147483648
    %v3464 = vor.u32 1.1754944e-38, %v3463
    %v3465 = vsel %vm3462, %v3464, %v3460
    %v3466 = vmul.f32 1.0, %v3465
    %v3467 = vrcp.pop %v3450
    %v3468 = vmul.f32 %v3450, %v3467
    %v3469 = vsub.f32 1.0, %v3468
    %v3470 = vmul.f32 %v3467, %v3469
    %v3471 = vadd.f32 %v3467, %v3470
    %vm3472 = vweird.f32 %v3450
    %vm3473 = vweird.f32 %v3467
    %vm3474 = vmor %vm3472, %vm3473
    %v3475 = vsel %vm3474, %v3467, %v3471
    %v3476 = vand.u32 2147483647, %v3450
    %vm3477 = vcmp.eq.f32.partialorder %v3476, 8.507059e+37
    %v3478 = vand.u32 %v3450, 2147483648
    %v3479 = vor.u32 1.1754944e-38, %v3478
    %v3480 = vsel %vm3477, %v3479, %v3475
    %v3481 = vmul.f32 1.0, %v3480
    %v3482 = vrcp.pop %v3451
    %v3483 = vmul.f32 %v3451, %v3482
    %v3484 = vsub.f32 1.0, %v3483
    %v3485 = vmul.f32 %v3482, %v3484
    %v3486 = vadd.f32 %v3482, %v3485
    %vm3487 = vweird.f32 %v3451
    %vm3488 = vweird.f32 %v3482
    %vm3489 = vmor %vm3487, %vm3488
    %v3490 = vsel %vm3489, %v3482, %v3486
    %v3491 = vand.u32 2147483647, %v3451
    %vm3492 = vcmp.eq.f32.partialorder %v3491, 8.507059e+37
    %v3493 = vand.u32 %v3451, 2147483648
    %v3494 = vor.u32 1.1754944e-38, %v3493
    %v3495 = vsel %vm3492, %v3494, %v3490
    %v3496 = vmul.f32 1.0, %v3495
    %v3497 = vtanh.pop %v3438
    %v3498 = vmul.f32 %v3481, %v3108
    %v3499 = vmul.f32 %v3466, %v3497
    %v3500 = vadd.f32 %v3498, %v3499
    %v3501 = vtanh.pop %v3500
    %v3502 = vmul.f32 %v3496, %v3501
    %vm3503 = vcmask 39942
    %3504 = vst.msk [vmem:[#allocation8 - $0x6] sm:$0xc0] %vm3503, %v3272
    %3505 = vst.msk [vmem:[#allocation9 - $0x6] sm:$0xc0] %vm3503, %v3270
    %s3506 = scalar_lea.vmem [#allocation8], 2
    %vm3507 = vcmask 33792
    %3508 = vst.msk [vmem:[%s3506] sm:$0x3] %vm3507, %v3502
    %s3509 = scalar_lea.vmem [#allocation9], 2
    %3510 = vst.msk [vmem:[%s3509] sm:$0x3] %vm3507, %v3500
    // Predicated region
    $region38: #{_encoder_forward.1} parent=1 // pred_check
      _
    $region39: #{_encoder_forward.1} parent=1 // pred_check_branch
      %3512 = sbr.rel (0) target = $region41
    $region40: #{_encoder_forward.1} parent=1 // pred_region
      %3514 = vsyncadd [#allocation4], 0
      %s3515 = sshll.u32 [#allocation8], 4
      %s3516 = int_to_ptr.vmem [resolvable:$true] %s3515
      %s3517 = sshll.u32 %s6, 4
      %s3518 = int_to_ptr.hbm [resolvable:$true] %s3517
      %3523 = dma.vmem_to_hbm [thread:$0]  %s3516, 64, %s3518, [#allocation4], 32, 32, 2
    $region41: #{_encoder_forward.1} parent=1 // pred_fallthru
      _
    // Predicated region
    $region42: #{_encoder_forward.1} parent=1 // pred_check
      _
    $region43: #{_encoder_forward.1} parent=1 // pred_check_branch
      %3525 = sbr.rel (0) target = $region45
    $region44: #{_encoder_forward.1} parent=1 // pred_region
      %3527 = vsyncadd [#allocation10], 0
      %s3528 = sshll.u32 [#allocation9], 4
      %s3529 = int_to_ptr.vmem [resolvable:$true] %s3528
      %s3530 = sshll.u32 %s7, 4
      %s3531 = int_to_ptr.hbm [resolvable:$true] %s3530
      %3536 = dma.vmem_to_hbm [thread:$0]  %s3529, 64, %s3531, [#allocation10], 32, 32, 2
    $region45: #{_encoder_forward.1} parent=1 // pred_fallthru
      _
    // Predicated region
    $region46: #{_encoder_forward.1} parent=1 // pred_check
      _
    $region47: #{_encoder_forward.1} parent=1 // pred_check_branch
      %3538 = sbr.rel (0) target = $region49
    $region48: #{_encoder_forward.1} parent=1 // pred_region
      %3540 = dma.done [#allocation4], 64
    $region49: #{_encoder_forward.1} parent=1 // pred_fallthru
      _
    // Predicated region
    $region50: #{_encoder_forward.1} parent=1 // pred_check
      _
    $region51: #{_encoder_forward.1} parent=1 // pred_check_branch
      %3542 = sbr.rel (0) target = $region53
    $region52: #{_encoder_forward.1} parent=1 // pred_region
      %3544 = dma.done [#allocation10], 64
    $region53: #{_encoder_forward.1} parent=1 // pred_fallthru
      _
    %3545 = vsyncpa [#allocation3], 1
    %3546 = vsyncpa [#allocation6], 1
    %3547 = vsyncpa [#allocation4], 1
    %3548 = vsyncpa [#allocation10], 1

</llo_original>
